<compile_context>
chip_gen: v7x
topology: tpu7x:2x2x1
jax: 0.10.0
libtpu: 0.0.40
codegen_flags: <defaults>
</compile_context>

<pallas_src>
import jax
import jax.numpy as jnp
from jax.experimental import pallas as pl
from jax.experimental.pallas import tpu as pltpu

IN_FEATURES = 32 * 32 * 3     # 3072
N_CLASSES = 10
N_CLASSES_PADDED = 128        # lane-dense output tile
TILE_M = 128                  # MXU-aligned batch tile


def mlp_logits_kernel(x_ref, w1_ref, b1_ref, w2_ref, b2_ref, w3_ref, b3_ref, o_ref):
    """One batch tile: logits = relu(relu(x@W1+b1)@W2+b2)@W3+b3 (classes padded to 128)."""
    x = x_ref[...]                                                       # (TM, 3072) bf16

    # fc1 + ReLU  (bf16 MXU inputs, f32 accumulation)
    h1 = jnp.dot(x, w1_ref[...], preferred_element_type=jnp.float32) + b1_ref[...]
    h1 = jnp.maximum(h1, 0.0).astype(jnp.bfloat16)
    # drop1: nn.Dropout is the identity in eval/inference mode
    # TODO(synk): training-mode dropout (pltpu.prng_* Bernoulli mask + 1/keep_rate) not implemented

    # fc2 + ReLU (module has n_hidden_layers == 2)
    h2 = jnp.dot(h1, w2_ref[...], preferred_element_type=jnp.float32) + b2_ref[...]
    h2 = jnp.maximum(h2, 0.0).astype(jnp.bfloat16)
    # drop2: identity in eval mode

    # output layer (class dim zero-padded to 128 lanes -> unmasked stores)
    logits = jnp.dot(h2, w3_ref[...], preferred_element_type=jnp.float32) + b3_ref[...]
    o_ref[...] = logits                                                  # (TM, 128) f32


def log_softmax_dim0_kernel(logits_ref, o_ref):
    """log_softmax over dim=0 (the batch axis), exactly as F.log_softmax(..., dim=0)."""
    logits = logits_ref[...]                                             # (B, 10) f32
    m = jnp.max(logits, axis=0, keepdims=True)
    shifted = logits - m
    lse = jnp.log(jnp.sum(jnp.exp(shifted), axis=0, keepdims=True))
    o_ref[...] = (shifted - lse).astype(o_ref.dtype)


def prepare_params(params):
    """Cast weights to bf16 and zero-pad the output layer's class dim to 128."""
    w1, b1, w2, b2, w3, b3 = params
    node = w1.shape[1]
    w3p = jnp.zeros((node, N_CLASSES_PADDED), jnp.bfloat16).at[:, :N_CLASSES].set(
        w3.astype(jnp.bfloat16))
    b3p = jnp.zeros((1, N_CLASSES_PADDED), jnp.float32).at[:, :N_CLASSES].set(
        b3.astype(jnp.float32))
    return (w1.astype(jnp.bfloat16), b1.astype(jnp.float32),
            w2.astype(jnp.bfloat16), b2.astype(jnp.float32),
            w3p, b3p)


def mlp_forward(x_nchw, prepared_params, tile_m=TILE_M):
    """x_nchw: (B, 3, 32, 32) float32. Returns (B, 10) log-probs (softmax over batch)."""
    w1, b1, w2, b2, w3p, b3p = prepared_params
    node = w1.shape[1]

    B = x_nchw.shape[0]
    x2d = x_nchw.reshape(B, IN_FEATURES).astype(jnp.bfloat16)
    n_tiles = pl.cdiv(B, tile_m)
    b_pad = n_tiles * tile_m
    if b_pad != B:
        x2d = jnp.pad(x2d, ((0, b_pad - B), (0, 0)))

    # Whole-array blocks with a constant index_map: DMA'd once, VMEM-resident
    # across all batch tiles.
    def resident(shape):
        return pl.BlockSpec(shape, lambda i: (0, 0))

    cost = pl.CostEstimate(
        flops=2 * b_pad * (IN_FEATURES * node + node * node + node * N_CLASSES_PADDED),
        transcendentals=0,
        bytes_accessed=(x2d.size * 2
                        + (IN_FEATURES * node + node * node + node * N_CLASSES_PADDED) * 2
                        + (2 * node + N_CLASSES_PADDED) * 4
                        + b_pad * N_CLASSES_PADDED * 4),
    )

    logits_padded = pl.pallas_call(
        mlp_logits_kernel,
        out_shape=jax.ShapeDtypeStruct((b_pad, N_CLASSES_PADDED), jnp.float32),
        grid_spec=pltpu.PrefetchScalarGridSpec(
            num_scalar_prefetch=0,
            grid=(n_tiles,),
            in_specs=[
                pl.BlockSpec((tile_m, IN_FEATURES), lambda i: (i, 0)),   # x: batch-tiled
                resident((IN_FEATURES, node)),                           # w1 (bf16)
                resident((1, node)),                                     # b1 (f32)
                resident((node, node)),                                  # w2 (bf16)
                resident((1, node)),                                     # b2 (f32)
                resident((node, N_CLASSES_PADDED)),                      # w3 padded (bf16)
                resident((1, N_CLASSES_PADDED)),                         # b3 padded (f32)
            ],
            out_specs=pl.BlockSpec((tile_m, N_CLASSES_PADDED), lambda i: (i, 0)),
        ),
        compiler_params=pltpu.CompilerParams(
            dimension_semantics=("parallel",)),
        cost_estimate=cost,
    )(x2d, w1, b1, w2, b2, w3p, b3p)
    # TODO(synk): for very large `node` (VMEM-limited, hit first on v7x's 64 MiB), add a
    # K-tiled grid over the 3072 input features for fc1 with a VMEM accumulator.

    # Drop batch/class padding, then log_softmax over the BATCH axis (dim=0, as in the
    # original module) across the full logical batch in a second tiny Pallas pass.
    logits = logits_padded[:B, :N_CLASSES]
    return pl.pallas_call(
        log_softmax_dim0_kernel,
        out_shape=jax.ShapeDtypeStruct((B, N_CLASSES), jnp.float32),
        in_specs=[pl.BlockSpec(memory_space=pltpu.MemorySpace.VMEM)],
        out_specs=pl.BlockSpec(memory_space=pltpu.MemorySpace.VMEM),
    )(logits)


def init_params(key, node):
    """Deterministic init mimicking torch.nn.Linear's U(-1/sqrt(fan_in), 1/sqrt(fan_in))."""
    ks = jax.random.split(key, 6)

    def linear(kw, kb, fan_in, fan_out):
        bound = 1.0 / float(fan_in) ** 0.5
        w = jax.random.uniform(kw, (fan_in, fan_out), jnp.float32, -bound, bound)
        b = jax.random.uniform(kb, (1, fan_out), jnp.float32, -bound, bound)
        return w, b

    w1, b1 = linear(ks[0], ks[1], IN_FEATURES, node)   # fc1: 3072 -> node
    w2, b2 = linear(ks[2], ks[3], node, node)          # fc2: node -> node
    w3, b3 = linear(ks[4], ks[5], node, N_CLASSES)     # out: node -> 10
    return (w1, b1, w2, b2, w3, b3)


def mlp_reference(x_nchw, prepared_params):
    """Pure-JAX f32 reference using the same bf16-rounded weights / input."""
    w1, b1, w2, b2, w3p, b3p = prepared_params
    x = x_nchw.reshape(x_nchw.shape[0], IN_FEATURES).astype(jnp.bfloat16).astype(jnp.float32)
    w1f = w1.astype(jnp.float32)
    w2f = w2.astype(jnp.float32)
    w3f = w3p[:, :N_CLASSES].astype(jnp.float32)
    b3f = b3p[:, :N_CLASSES]
    h1 = jnp.maximum(x @ w1f + b1, 0.0)
    h2 = jnp.maximum(h1 @ w2f + b2, 0.0)
    logits = h2 @ w3f + b3f
    return jax.nn.log_softmax(logits, axis=0)


if __name__ == "__main__":
    key = jax.random.PRNGKey(0)
    kx, kp = jax.random.split(key)

    B = 8          # small batch (padded to one 128-row MXU tile internally)
    NODE = 128     # hidden width (the module's `node` hyperparameter)

    x = jax.random.normal(kx, (B, 3, 32, 32), dtype=jnp.float32)
    params = init_params(kp, NODE)
    prepared = prepare_params(params)

    out = mlp_forward(x, prepared)
    out = jax.block_until_ready(out)

    ref = mlp_reference(x, prepared)
    assert out.shape == (B, N_CLASSES)
    assert jnp.allclose(out, ref, atol=5e-2, rtol=5e-2), "mismatch vs pure-JAX reference"

    print("KERNEL_OK")
</pallas_src>

<mosaic_0001>
module attributes {stable_mosaic.version = 11 : i64} {
  func.func @mlp_logits_kernel(%arg0: i32, %arg1: memref<128x3072xbf16, #tpu.memory_space<vmem>>, %arg2: memref<3072x128xbf16, #tpu.memory_space<vmem>>, %arg3: memref<1x128xf32, #tpu.memory_space<vmem>>, %arg4: memref<128x128xbf16, #tpu.memory_space<vmem>>, %arg5: memref<1x128xf32, #tpu.memory_space<vmem>>, %arg6: memref<128x128xbf16, #tpu.memory_space<vmem>>, %arg7: memref<1x128xf32, #tpu.memory_space<vmem>>, %arg8: memref<128x128xf32, #tpu.memory_space<vmem>>) attributes {dimension_semantics = [#tpu.dimension_semantics<parallel>], iteration_bounds = array<i64: 1>, scalar_prefetch = 0 : i64, scratch_operands = 0 : i64, tpu.core_type = #tpu.core_type<tc>, window_params = [{transform_indices = @transform_0, window_bounds = array<i64: 128, 3072>}, {pipeline_mode = #tpu.pipeline_mode<synchronous>, transform_indices = @transform_1, window_bounds = array<i64: 3072, 128>}, {pipeline_mode = #tpu.pipeline_mode<synchronous>, transform_indices = @transform_2, window_bounds = array<i64: 1, 128>}, {pipeline_mode = #tpu.pipeline_mode<synchronous>, transform_indices = @transform_3, window_bounds = array<i64: 128, 128>}, {pipeline_mode = #tpu.pipeline_mode<synchronous>, transform_indices = @transform_4, window_bounds = array<i64: 1, 128>}, {pipeline_mode = #tpu.pipeline_mode<synchronous>, transform_indices = @transform_5, window_bounds = array<i64: 128, 128>}, {pipeline_mode = #tpu.pipeline_mode<synchronous>, transform_indices = @transform_6, window_bounds = array<i64: 1, 128>}, {transform_indices = @transform_7, window_bounds = array<i64: 128, 128>}]} {
    %c0 = arith.constant 0 : index
    %c0_0 = arith.constant 0 : index
    %0 = vector.load %arg1[%c0, %c0_0] : memref<128x3072xbf16, #tpu.memory_space<vmem>>, vector<128x3072xbf16>
    %c0_1 = arith.constant 0 : index
    %c0_2 = arith.constant 0 : index
    %1 = vector.load %arg2[%c0_1, %c0_2] : memref<3072x128xbf16, #tpu.memory_space<vmem>>, vector<3072x128xbf16>
    %cst = arith.constant dense<0.000000e+00> : vector<128x128xf32>
    %2 = tpu.matmul %0, %1, %cst {dimension_numbers = #tpu.dot_dimension_numbers<[1], [0], [0], [1], [0, 0, 1, 1], [], []>} : vector<128x3072xbf16>, vector<3072x128xbf16>, vector<128x128xf32> -> vector<128x128xf32>
    %c0_3 = arith.constant 0 : index
    %c0_4 = arith.constant 0 : index
    %3 = vector.load %arg3[%c0_3, %c0_4] : memref<1x128xf32, #tpu.memory_space<vmem>>, vector<1x128xf32>
    %4 = vector.broadcast %3 : vector<1x128xf32> to vector<128x128xf32>
    %5 = arith.addf %2, %4 : vector<128x128xf32>
    %cst_5 = arith.constant 0.000000e+00 : f32
    %6 = vector.broadcast %cst_5 : f32 to vector<128x128xf32>
    %7 = arith.maximumf %5, %6 : vector<128x128xf32>
    %8 = arith.truncf %7 : vector<128x128xf32> to vector<128x128xbf16>
    %c0_6 = arith.constant 0 : index
    %c0_7 = arith.constant 0 : index
    %9 = vector.load %arg4[%c0_6, %c0_7] : memref<128x128xbf16, #tpu.memory_space<vmem>>, vector<128x128xbf16>
    %cst_8 = arith.constant dense<0.000000e+00> : vector<128x128xf32>
    %10 = tpu.matmul %8, %9, %cst_8 {dimension_numbers = #tpu.dot_dimension_numbers<[1], [0], [0], [1], [0, 0, 1, 1], [], []>} : vector<128x128xbf16>, vector<128x128xbf16>, vector<128x128xf32> -> vector<128x128xf32>
    %c0_9 = arith.constant 0 : index
    %c0_10 = arith.constant 0 : index
    %11 = vector.load %arg5[%c0_9, %c0_10] : memref<1x128xf32, #tpu.memory_space<vmem>>, vector<1x128xf32>
    %12 = vector.broadcast %11 : vector<1x128xf32> to vector<128x128xf32>
    %13 = arith.addf %10, %12 : vector<128x128xf32>
    %cst_11 = arith.constant 0.000000e+00 : f32
    %14 = vector.broadcast %cst_11 : f32 to vector<128x128xf32>
    %15 = arith.maximumf %13, %14 : vector<128x128xf32>
    %16 = arith.truncf %15 : vector<128x128xf32> to vector<128x128xbf16>
    %c0_12 = arith.constant 0 : index
    %c0_13 = arith.constant 0 : index
    %17 = vector.load %arg6[%c0_12, %c0_13] : memref<128x128xbf16, #tpu.memory_space<vmem>>, vector<128x128xbf16>
    %cst_14 = arith.constant dense<0.000000e+00> : vector<128x128xf32>
    %18 = tpu.matmul %16, %17, %cst_14 {dimension_numbers = #tpu.dot_dimension_numbers<[1], [0], [0], [1], [0, 0, 1, 1], [], []>} : vector<128x128xbf16>, vector<128x128xbf16>, vector<128x128xf32> -> vector<128x128xf32>
    %c0_15 = arith.constant 0 : index
    %c0_16 = arith.constant 0 : index
    %19 = vector.load %arg7[%c0_15, %c0_16] : memref<1x128xf32, #tpu.memory_space<vmem>>, vector<1x128xf32>
    %20 = vector.broadcast %19 : vector<1x128xf32> to vector<128x128xf32>
    %21 = arith.addf %18, %20 : vector<128x128xf32>
    %c0_17 = arith.constant 0 : index
    %c0_18 = arith.constant 0 : index
    %22 = vector.load %arg8[%c0_17, %c0_18] : memref<128x128xf32, #tpu.memory_space<vmem>>, vector<128x128xf32>
    tpu.vector_store %arg8[%c0_17, %c0_18], %21 {strides = array<i32>} : memref<128x128xf32, #tpu.memory_space<vmem>>, vector<128x128xf32>,
    return
  }
  func.func @transform_0(%arg0: i32) -> (i32, i32) {
    %c0_i32 = arith.constant 0 : i32
    %c0_i32_0 = arith.constant 0 : i32
    return %arg0, %c0_i32 : i32, i32
  }
  func.func @transform_1(%arg0: i32) -> (i32, i32) {
    %c0_i32 = arith.constant 0 : i32
    %c0_i32_0 = arith.constant 0 : i32
    %c0_i32_1 = arith.constant 0 : i32
    return %c0_i32, %c0_i32_0 : i32, i32
  }
  func.func @transform_2(%arg0: i32) -> (i32, i32) {
    %c0_i32 = arith.constant 0 : i32
    %c0_i32_0 = arith.constant 0 : i32
    %c0_i32_1 = arith.constant 0 : i32
    return %c0_i32, %c0_i32_0 : i32, i32
  }
  func.func @transform_3(%arg0: i32) -> (i32, i32) {
    %c0_i32 = arith.constant 0 : i32
    %c0_i32_0 = arith.constant 0 : i32
    %c0_i32_1 = arith.constant 0 : i32
    return %c0_i32, %c0_i32_0 : i32, i32
  }
  func.func @transform_4(%arg0: i32) -> (i32, i32) {
    %c0_i32 = arith.constant 0 : i32
    %c0_i32_0 = arith.constant 0 : i32
    %c0_i32_1 = arith.constant 0 : i32
    return %c0_i32, %c0_i32_0 : i32, i32
  }
  func.func @transform_5(%arg0: i32) -> (i32, i32) {
    %c0_i32 = arith.constant 0 : i32
    %c0_i32_0 = arith.constant 0 : i32
    %c0_i32_1 = arith.constant 0 : i32
    return %c0_i32, %c0_i32_0 : i32, i32
  }
  func.func @transform_6(%arg0: i32) -> (i32, i32) {
    %c0_i32 = arith.constant 0 : i32
    %c0_i32_0 = arith.constant 0 : i32
    %c0_i32_1 = arith.constant 0 : i32
    return %c0_i32, %c0_i32_0 : i32, i32
  }
  func.func @transform_7(%arg0: i32) -> (i32, i32) {
    %c0_i32 = arith.constant 0 : i32
    %c0_i32_0 = arith.constant 0 : i32
    return %arg0, %c0_i32 : i32, i32
  }
}

</mosaic_0001>

<llo_original>
// kernel: tpu_custom_call.1
$region0: #{tpu_custom_call.1}
  #allocation0 [shape = 'u32[]', space=smem, size = 0x4, offset = 0x4, fixed_abs, tag = 'smem constant byte address 0x4 - core index']
  #allocation1 [shape = 'u32[144,128]{1,0:T(1,128)}', space=vmem, size = 0x12000, scoped, tag = 'internal scratch']
  %s0 = inlined_call_operand.hbm [shape: bf16[128,3072], index: 0, kind: input, shape index: {}]
  %s1 = inlined_call_operand.hbm [shape: bf16[3072,128], index: 1, kind: input, shape index: {}]
  %s2 = inlined_call_operand.vmem [shape: f32[1,128], index: 2, kind: input, shape index: {}]
  %s3 = inlined_call_operand.hbm [shape: bf16[128,128], index: 3, kind: input, shape index: {}]
  %s4 = inlined_call_operand.vmem [shape: f32[1,128], index: 4, kind: input, shape index: {}]
  %s5 = inlined_call_operand.hbm [shape: bf16[128,128], index: 5, kind: input, shape index: {}]
  %s6 = inlined_call_operand.vmem [shape: f32[1,128], index: 6, kind: input, shape index: {}]
  %s7 = inlined_call_operand.hbm [shape: f32[128,128], index: 7, kind: output, shape index: {}]
  %s8 = sld [smem:[#allocation0]]
  $region54: #{tpu_custom_call.1} parent=0
    _
  %s10 = ssub.s32 1, %s8
  %s11 = scalar_select 0, %s10, %s8
  $region1: #{tpu_custom_call.1} parent=0
    #allocation2 [shape = 'u8[786432]{0}', space=vmem, size = 0xc0000, scoped, tag = 'input window, operand 0, single buffered']
    #allocation3 [shape = 's32[1]{0}', space=sflag, size = 0x4, scoped, tag = 'scoped memory for tpu_custom_call.1']
    #allocation4 [shape = 's32[1]{0}', space=sflag, size = 0x4, scoped, tag = 'scoped memory for tpu_custom_call.1']
    #allocation5 [shape = 'u8[786432]{0}', space=vmem, size = 0xc0000, scoped, tag = 'input window, operand 1, single buffered']
    #allocation6 [shape = 's32[1]{0}', space=sflag, size = 0x4, scoped, tag = 'scoped memory for tpu_custom_call.1']
    #allocation7 [shape = 'u8[32768]{0}', space=vmem, size = 0x8000, scoped, tag = 'input window, operand 3, single buffered']
    #allocation8 [shape = 'u8[32768]{0}', space=vmem, size = 0x8000, scoped, tag = 'input window, operand 5, single buffered']
    #allocation9 [shape = 's32[1]{0}', space=sflag, size = 0x4, scoped, tag = 'scoped memory for tpu_custom_call.1']
    #allocation10 [shape = 'u8[65536]{0}', space=vmem, size = 0x10000, scoped, tag = 'output window, operand 0, single buffered']
    %12 = vsyncpa [#allocation3], 0
    %13 = vsyncpa [#allocation6], 0
    %14 = vsyncpa [#allocation9], 0
    %15 = vsyncpa [#allocation4], 0
    // Predicated region
    $region2: #{tpu_custom_call.1} parent=1 // pred_check
      _
    $region3: #{tpu_custom_call.1} parent=1 // pred_check_branch
      %17 = sbr.rel (0) target = $region5
    $region4: #{tpu_custom_call.1} parent=1 // pred_region
      %s19 = ssub.s32 24576, 24576
      %20 = vsyncadd [#allocation3], %s19
      %s21 = sshll.u32 [#allocation2], 4
      %s22 = int_to_ptr.vmem [resolvable:$true] %s21
      %27 = dma.hbm_to_vmem [thread:$0]  %s0, 24576, %s22, [#allocation3], 1536, 1536, 96
    $region5: #{tpu_custom_call.1} parent=1 // pred_fallthru
      _
    // Predicated region
    $region6: #{tpu_custom_call.1} parent=1 // pred_check
      _
    $region7: #{tpu_custom_call.1} parent=1 // pred_check_branch
      %29 = sbr.rel (0) target = $region9
    $region8: #{tpu_custom_call.1} parent=1 // pred_region
      %s31 = ssub.s32 24576, 24576
      %32 = vsyncadd [#allocation6], %s31
      %s33 = sshll.u32 [#allocation5], 4
      %s34 = int_to_ptr.vmem [resolvable:$true] %s33
      %39 = dma.hbm_to_vmem [thread:$0]  %s1, 24576, %s34, [#allocation6], 64, 64, 4
    $region9: #{tpu_custom_call.1} parent=1 // pred_fallthru
      _
    // Predicated region
    $region10: #{tpu_custom_call.1} parent=1 // pred_check
      _
    $region11: #{tpu_custom_call.1} parent=1 // pred_check_branch
      %41 = sbr.rel (0) target = $region13
    $region12: #{tpu_custom_call.1} parent=1 // pred_region
      _
    $region13: #{tpu_custom_call.1} parent=1 // pred_fallthru
      _
    // Predicated region
    $region14: #{tpu_custom_call.1} parent=1 // pred_check
      _
    $region15: #{tpu_custom_call.1} parent=1 // pred_check_branch
      %43 = sbr.rel (0) target = $region17
    $region16: #{tpu_custom_call.1} parent=1 // pred_region
      %s45 = ssub.s32 1024, 1024
      %46 = vsyncadd [#allocation6], %s45
      %s47 = sshll.u32 [#allocation7], 4
      %s48 = int_to_ptr.vmem [resolvable:$true] %s47
      %53 = dma.hbm_to_vmem [thread:$0]  %s3, 1024, %s48, [#allocation6], 64, 64, 4
    $region17: #{tpu_custom_call.1} parent=1 // pred_fallthru
      _
    // Predicated region
    $region18: #{tpu_custom_call.1} parent=1 // pred_check
      _
    $region19: #{tpu_custom_call.1} parent=1 // pred_check_branch
      %55 = sbr.rel (0) target = $region21
    $region20: #{tpu_custom_call.1} parent=1 // pred_region
      _
    $region21: #{tpu_custom_call.1} parent=1 // pred_fallthru
      _
    // Predicated region
    $region22: #{tpu_custom_call.1} parent=1 // pred_check
      _
    $region23: #{tpu_custom_call.1} parent=1 // pred_check_branch
      %57 = sbr.rel (0) target = $region25
    $region24: #{tpu_custom_call.1} parent=1 // pred_region
      %s59 = ssub.s32 1024, 1024
      %60 = vsyncadd [#allocation9], %s59
      %s61 = sshll.u32 [#allocation8], 4
      %s62 = int_to_ptr.vmem [resolvable:$true] %s61
      %67 = dma.hbm_to_vmem [thread:$0]  %s5, 1024, %s62, [#allocation9], 64, 64, 4
    $region25: #{tpu_custom_call.1} parent=1 // pred_fallthru
      _
    // Predicated region
    $region26: #{tpu_custom_call.1} parent=1 // pred_check
      _
    $region27: #{tpu_custom_call.1} parent=1 // pred_check_branch
      %69 = sbr.rel (0) target = $region29
    $region28: #{tpu_custom_call.1} parent=1 // pred_region
      _
    $region29: #{tpu_custom_call.1} parent=1 // pred_fallthru
      _
    // Predicated region
    $region30: #{tpu_custom_call.1} parent=1 // pred_check
      _
    $region31: #{tpu_custom_call.1} parent=1 // pred_check_branch
      %71 = sbr.rel (0) target = $region33
    $region32: #{tpu_custom_call.1} parent=1 // pred_region
      %72 = dma.done [#allocation3], 24576
    $region33: #{tpu_custom_call.1} parent=1 // pred_fallthru
      _
    // Predicated region
    $region34: #{tpu_custom_call.1} parent=1 // pred_check
      _
    $region35: #{tpu_custom_call.1} parent=1 // pred_check_branch
      %74 = sbr.rel (0) target = $region37
    $region36: #{tpu_custom_call.1} parent=1 // pred_region
      %75 = dma.done [#allocation6], 24576
    $region37: #{tpu_custom_call.1} parent=1 // pred_fallthru
      _
    // Predicated region
    $region38: #{tpu_custom_call.1} parent=1 // pred_check
      _
    $region39: #{tpu_custom_call.1} parent=1 // pred_check_branch
      %77 = sbr.rel (0) target = $region41
    $region40: #{tpu_custom_call.1} parent=1 // pred_region
      %78 = dma.done [#allocation6], 1024
    $region41: #{tpu_custom_call.1} parent=1 // pred_fallthru
      _
    // Predicated region
    $region42: #{tpu_custom_call.1} parent=1 // pred_check
      _
    $region43: #{tpu_custom_call.1} parent=1 // pred_check_branch
      %80 = sbr.rel (0) target = $region45
    $region44: #{tpu_custom_call.1} parent=1 // pred_region
      %81 = dma.done [#allocation9], 1024
    $region45: #{tpu_custom_call.1} parent=1 // pred_fallthru
      _
    %v83 = vld [vmem:[#allocation2] sm:$0xff]
    %v84 = vld [vmem:[#allocation2 + $0x8] sm:$0xff]
    %v85 = vld [vmem:[#allocation2 + $0x10] sm:$0xff]
    %v86 = vld [vmem:[#allocation2 + $0x18] sm:$0xff]
    %v87 = vld [vmem:[#allocation2 + $0x20] sm:$0xff]
    %v88 = vld [vmem:[#allocation2 + $0x28] sm:$0xff]
    %v89 = vld [vmem:[#allocation2 + $0x30] sm:$0xff]
    %v90 = vld [vmem:[#allocation2 + $0x38] sm:$0xff]
    %v91 = vld [vmem:[#allocation2 + $0x40] sm:$0xff]
    %v92 = vld [vmem:[#allocation2 + $0x48] sm:$0xff]
    %v93 = vld [vmem:[#allocation2 + $0x50] sm:$0xff]
    %v94 = vld [vmem:[#allocation2 + $0x58] sm:$0xff]
    %v95 = vld [vmem:[#allocation2 + $0x60] sm:$0xff]
    %v96 = vld [vmem:[#allocation2 + $0x68] sm:$0xff]
    %v97 = vld [vmem:[#allocation2 + $0x70] sm:$0xff]
    %v98 = vld [vmem:[#allocation2 + $0x78] sm:$0xff]
    %v99 = vld [vmem:[#allocation2 + $0x80] sm:$0xff]
    %v100 = vld [vmem:[#allocation2 + $0x88] sm:$0xff]
    %v101 = vld [vmem:[#allocation2 + $0x90] sm:$0xff]
    %v102 = vld [vmem:[#allocation2 + $0x98] sm:$0xff]
    %v103 = vld [vmem:[#allocation2 + $0xa0] sm:$0xff]
    %v104 = vld [vmem:[#allocation2 + $0xa8] sm:$0xff]
    %v105 = vld [vmem:[#allocation2 + $0xb0] sm:$0xff]
    %v106 = vld [vmem:[#allocation2 + $0xb8] sm:$0xff]
    %v107 = vld [vmem:[#allocation2 + $0xc0] sm:$0xff]
    %v108 = vld [vmem:[#allocation2 + $0xc8] sm:$0xff]
    %v109 = vld [vmem:[#allocation2 + $0xd0] sm:$0xff]
    %v110 = vld [vmem:[#allocation2 + $0xd8] sm:$0xff]
    %v111 = vld [vmem:[#allocation2 + $0xe0] sm:$0xff]
    %v112 = vld [vmem:[#allocation2 + $0xe8] sm:$0xff]
    %v113 = vld [vmem:[#allocation2 + $0xf0] sm:$0xff]
    %v114 = vld [vmem:[#allocation2 + $0xf8] sm:$0xff]
    %v115 = vld [vmem:[#allocation2 + $0x100] sm:$0xff]
    %v116 = vld [vmem:[#allocation2 + $0x108] sm:$0xff]
    %v117 = vld [vmem:[#allocation2 + $0x110] sm:$0xff]
    %v118 = vld [vmem:[#allocation2 + $0x118] sm:$0xff]
    %v119 = vld [vmem:[#allocation2 + $0x120] sm:$0xff]
    %v120 = vld [vmem:[#allocation2 + $0x128] sm:$0xff]
    %v121 = vld [vmem:[#allocation2 + $0x130] sm:$0xff]
    %v122 = vld [vmem:[#allocation2 + $0x138] sm:$0xff]
    %v123 = vld [vmem:[#allocation2 + $0x140] sm:$0xff]
    %v124 = vld [vmem:[#allocation2 + $0x148] sm:$0xff]
    %v125 = vld [vmem:[#allocation2 + $0x150] sm:$0xff]
    %v126 = vld [vmem:[#allocation2 + $0x158] sm:$0xff]
    %v127 = vld [vmem:[#allocation2 + $0x160] sm:$0xff]
    %v128 = vld [vmem:[#allocation2 + $0x168] sm:$0xff]
    %v129 = vld [vmem:[#allocation2 + $0x170] sm:$0xff]
    %v130 = vld [vmem:[#allocation2 + $0x178] sm:$0xff]
    %v131 = vld [vmem:[#allocation2 + $0x180] sm:$0xff]
    %v132 = vld [vmem:[#allocation2 + $0x188] sm:$0xff]
    %v133 = vld [vmem:[#allocation2 + $0x190] sm:$0xff]
    %v134 = vld [vmem:[#allocation2 + $0x198] sm:$0xff]
    %v135 = vld [vmem:[#allocation2 + $0x1a0] sm:$0xff]
    %v136 = vld [vmem:[#allocation2 + $0x1a8] sm:$0xff]
    %v137 = vld [vmem:[#allocation2 + $0x1b0] sm:$0xff]
    %v138 = vld [vmem:[#allocation2 + $0x1b8] sm:$0xff]
    %v139 = vld [vmem:[#allocation2 + $0x1c0] sm:$0xff]
    %v140 = vld [vmem:[#allocation2 + $0x1c8] sm:$0xff]
    %v141 = vld [vmem:[#allocation2 + $0x1d0] sm:$0xff]
    %v142 = vld [vmem:[#allocation2 + $0x1d8] sm:$0xff]
    %v143 = vld [vmem:[#allocation2 + $0x1e0] sm:$0xff]
    %v144 = vld [vmem:[#allocation2 + $0x1e8] sm:$0xff]
    %v145 = vld [vmem:[#allocation2 + $0x1f0] sm:$0xff]
    %v146 = vld [vmem:[#allocation2 + $0x1f8] sm:$0xff]
    %v147 = vld [vmem:[#allocation2 + $0x200] sm:$0xff]
    %v148 = vld [vmem:[#allocation2 + $0x208] sm:$0xff]
    %v149 = vld [vmem:[#allocation2 + $0x210] sm:$0xff]
    %v150 = vld [vmem:[#allocation2 + $0x218] sm:$0xff]
    %v151 = vld [vmem:[#allocation2 + $0x220] sm:$0xff]
    %v152 = vld [vmem:[#allocation2 + $0x228] sm:$0xff]
    %v153 = vld [vmem:[#allocation2 + $0x230] sm:$0xff]
    %v154 = vld [vmem:[#allocation2 + $0x238] sm:$0xff]
    %v155 = vld [vmem:[#allocation2 + $0x240] sm:$0xff]
    %v156 = vld [vmem:[#allocation2 + $0x248] sm:$0xff]
    %v157 = vld [vmem:[#allocation2 + $0x250] sm:$0xff]
    %v158 = vld [vmem:[#allocation2 + $0x258] sm:$0xff]
    %v159 = vld [vmem:[#allocation2 + $0x260] sm:$0xff]
    %v160 = vld [vmem:[#allocation2 + $0x268] sm:$0xff]
    %v161 = vld [vmem:[#allocation2 + $0x270] sm:$0xff]
    %v162 = vld [vmem:[#allocation2 + $0x278] sm:$0xff]
    %v163 = vld [vmem:[#allocation2 + $0x280] sm:$0xff]
    %v164 = vld [vmem:[#allocation2 + $0x288] sm:$0xff]
    %v165 = vld [vmem:[#allocation2 + $0x290] sm:$0xff]
    %v166 = vld [vmem:[#allocation2 + $0x298] sm:$0xff]
    %v167 = vld [vmem:[#allocation2 + $0x2a0] sm:$0xff]
    %v168 = vld [vmem:[#allocation2 + $0x2a8] sm:$0xff]
    %v169 = vld [vmem:[#allocation2 + $0x2b0] sm:$0xff]
    %v170 = vld [vmem:[#allocation2 + $0x2b8] sm:$0xff]
    %v171 = vld [vmem:[#allocation2 + $0x2c0] sm:$0xff]
    %v172 = vld [vmem:[#allocation2 + $0x2c8] sm:$0xff]
    %v173 = vld [vmem:[#allocation2 + $0x2d0] sm:$0xff]
    %v174 = vld [vmem:[#allocation2 + $0x2d8] sm:$0xff]
    %v175 = vld [vmem:[#allocation2 + $0x2e0] sm:$0xff]
    %v176 = vld [vmem:[#allocation2 + $0x2e8] sm:$0xff]
    %v177 = vld [vmem:[#allocation2 + $0x2f0] sm:$0xff]
    %v178 = vld [vmem:[#allocation2 + $0x2f8] sm:$0xff]
    %v179 = vld [vmem:[#allocation2 + $0x300] sm:$0xff]
    %v180 = vld [vmem:[#allocation2 + $0x308] sm:$0xff]
    %v181 = vld [vmem:[#allocation2 + $0x310] sm:$0xff]
    %v182 = vld [vmem:[#allocation2 + $0x318] sm:$0xff]
    %v183 = vld [vmem:[#allocation2 + $0x320] sm:$0xff]
    %v184 = vld [vmem:[#allocation2 + $0x328] sm:$0xff]
    %v185 = vld [vmem:[#allocation2 + $0x330] sm:$0xff]
    %v186 = vld [vmem:[#allocation2 + $0x338] sm:$0xff]
    %v187 = vld [vmem:[#allocation2 + $0x340] sm:$0xff]
    %v188 = vld [vmem:[#allocation2 + $0x348] sm:$0xff]
    %v189 = vld [vmem:[#allocation2 + $0x350] sm:$0xff]
    %v190 = vld [vmem:[#allocation2 + $0x358] sm:$0xff]
    %v191 = vld [vmem:[#allocation2 + $0x360] sm:$0xff]
    %v192 = vld [vmem:[#allocation2 + $0x368] sm:$0xff]
    %v193 = vld [vmem:[#allocation2 + $0x370] sm:$0xff]
    %v194 = vld [vmem:[#allocation2 + $0x378] sm:$0xff]
    %v195 = vld [vmem:[#allocation2 + $0x380] sm:$0xff]
    %v196 = vld [vmem:[#allocation2 + $0x388] sm:$0xff]
    %v197 = vld [vmem:[#allocation2 + $0x390] sm:$0xff]
    %v198 = vld [vmem:[#allocation2 + $0x398] sm:$0xff]
    %v199 = vld [vmem:[#allocation2 + $0x3a0] sm:$0xff]
    %v200 = vld [vmem:[#allocation2 + $0x3a8] sm:$0xff]
    %v201 = vld [vmem:[#allocation2 + $0x3b0] sm:$0xff]
    %v202 = vld [vmem:[#allocation2 + $0x3b8] sm:$0xff]
    %v203 = vld [vmem:[#allocation2 + $0x3c0] sm:$0xff]
    %v204 = vld [vmem:[#allocation2 + $0x3c8] sm:$0xff]
    %v205 = vld [vmem:[#allocation2 + $0x3d0] sm:$0xff]
    %v206 = vld [vmem:[#allocation2 + $0x3d8] sm:$0xff]
    %v207 = vld [vmem:[#allocation2 + $0x3e0] sm:$0xff]
    %v208 = vld [vmem:[#allocation2 + $0x3e8] sm:$0xff]
    %v209 = vld [vmem:[#allocation2 + $0x3f0] sm:$0xff]
    %v210 = vld [vmem:[#allocation2 + $0x3f8] sm:$0xff]
    %v211 = vld [vmem:[#allocation2 + $0x400] sm:$0xff]
    %v212 = vld [vmem:[#allocation2 + $0x408] sm:$0xff]
    %v213 = vld [vmem:[#allocation2 + $0x410] sm:$0xff]
    %v214 = vld [vmem:[#allocation2 + $0x418] sm:$0xff]
    %v215 = vld [vmem:[#allocation2 + $0x420] sm:$0xff]
    %v216 = vld [vmem:[#allocation2 + $0x428] sm:$0xff]
    %v217 = vld [vmem:[#allocation2 + $0x430] sm:$0xff]
    %v218 = vld [vmem:[#allocation2 + $0x438] sm:$0xff]
    %v219 = vld [vmem:[#allocation2 + $0x440] sm:$0xff]
    %v220 = vld [vmem:[#allocation2 + $0x448] sm:$0xff]
    %v221 = vld [vmem:[#allocation2 + $0x450] sm:$0xff]
    %v222 = vld [vmem:[#allocation2 + $0x458] sm:$0xff]
    %v223 = vld [vmem:[#allocation2 + $0x460] sm:$0xff]
    %v224 = vld [vmem:[#allocation2 + $0x468] sm:$0xff]
    %v225 = vld [vmem:[#allocation2 + $0x470] sm:$0xff]
    %v226 = vld [vmem:[#allocation2 + $0x478] sm:$0xff]
    %v227 = vld [vmem:[#allocation2 + $0x480] sm:$0xff]
    %v228 = vld [vmem:[#allocation2 + $0x488] sm:$0xff]
    %v229 = vld [vmem:[#allocation2 + $0x490] sm:$0xff]
    %v230 = vld [vmem:[#allocation2 + $0x498] sm:$0xff]
    %v231 = vld [vmem:[#allocation2 + $0x4a0] sm:$0xff]
    %v232 = vld [vmem:[#allocation2 + $0x4a8] sm:$0xff]
    %v233 = vld [vmem:[#allocation2 + $0x4b0] sm:$0xff]
    %v234 = vld [vmem:[#allocation2 + $0x4b8] sm:$0xff]
    %v235 = vld [vmem:[#allocation2 + $0x4c0] sm:$0xff]
    %v236 = vld [vmem:[#allocation2 + $0x4c8] sm:$0xff]
    %v237 = vld [vmem:[#allocation2 + $0x4d0] sm:$0xff]
    %v238 = vld [vmem:[#allocation2 + $0x4d8] sm:$0xff]
    %v239 = vld [vmem:[#allocation2 + $0x4e0] sm:$0xff]
    %v240 = vld [vmem:[#allocation2 + $0x4e8] sm:$0xff]
    %v241 = vld [vmem:[#allocation2 + $0x4f0] sm:$0xff]
    %v242 = vld [vmem:[#allocation2 + $0x4f8] sm:$0xff]
    %v243 = vld [vmem:[#allocation2 + $0x500] sm:$0xff]
    %v244 = vld [vmem:[#allocation2 + $0x508] sm:$0xff]
    %v245 = vld [vmem:[#allocation2 + $0x510] sm:$0xff]
    %v246 = vld [vmem:[#allocation2 + $0x518] sm:$0xff]
    %v247 = vld [vmem:[#allocation2 + $0x520] sm:$0xff]
    %v248 = vld [vmem:[#allocation2 + $0x528] sm:$0xff]
    %v249 = vld [vmem:[#allocation2 + $0x530] sm:$0xff]
    %v250 = vld [vmem:[#allocation2 + $0x538] sm:$0xff]
    %v251 = vld [vmem:[#allocation2 + $0x540] sm:$0xff]
    %v252 = vld [vmem:[#allocation2 + $0x548] sm:$0xff]
    %v253 = vld [vmem:[#allocation2 + $0x550] sm:$0xff]
    %v254 = vld [vmem:[#allocation2 + $0x558] sm:$0xff]
    %v255 = vld [vmem:[#allocation2 + $0x560] sm:$0xff]
    %v256 = vld [vmem:[#allocation2 + $0x568] sm:$0xff]
    %v257 = vld [vmem:[#allocation2 + $0x570] sm:$0xff]
    %v258 = vld [vmem:[#allocation2 + $0x578] sm:$0xff]
    %v259 = vld [vmem:[#allocation2 + $0x580] sm:$0xff]
    %v260 = vld [vmem:[#allocation2 + $0x588] sm:$0xff]
    %v261 = vld [vmem:[#allocation2 + $0x590] sm:$0xff]
    %v262 = vld [vmem:[#allocation2 + $0x598] sm:$0xff]
    %v263 = vld [vmem:[#allocation2 + $0x5a0] sm:$0xff]
    %v264 = vld [vmem:[#allocation2 + $0x5a8] sm:$0xff]
    %v265 = vld [vmem:[#allocation2 + $0x5b0] sm:$0xff]
    %v266 = vld [vmem:[#allocation2 + $0x5b8] sm:$0xff]
    %v267 = vld [vmem:[#allocation2 + $0x5c0] sm:$0xff]
    %v268 = vld [vmem:[#allocation2 + $0x5c8] sm:$0xff]
    %v269 = vld [vmem:[#allocation2 + $0x5d0] sm:$0xff]
    %v270 = vld [vmem:[#allocation2 + $0x5d8] sm:$0xff]
    %v271 = vld [vmem:[#allocation2 + $0x5e0] sm:$0xff]
    %v272 = vld [vmem:[#allocation2 + $0x5e8] sm:$0xff]
    %v273 = vld [vmem:[#allocation2 + $0x5f0] sm:$0xff]
    %v274 = vld [vmem:[#allocation2 + $0x5f8] sm:$0xff]
    %v275 = vld [vmem:[#allocation5] sm:$0xf]
    %v276 = vld [vmem:[#allocation5 + $0x4] sm:$0xf]
    %v277 = vld [vmem:[#allocation5 + $0x8] sm:$0xf]
    %v278 = vld [vmem:[#allocation5 + $0xc] sm:$0xf]
    %v279 = vld [vmem:[#allocation5 + $0x10] sm:$0xf]
    %v280 = vld [vmem:[#allocation5 + $0x14] sm:$0xf]
    %v281 = vld [vmem:[#allocation5 + $0x18] sm:$0xf]
    %v282 = vld [vmem:[#allocation5 + $0x1c] sm:$0xf]
    %v283 = vld [vmem:[#allocation5 + $0x20] sm:$0xf]
    %v284 = vld [vmem:[#allocation5 + $0x24] sm:$0xf]
    %v285 = vld [vmem:[#allocation5 + $0x28] sm:$0xf]
    %v286 = vld [vmem:[#allocation5 + $0x2c] sm:$0xf]
    %v287 = vld [vmem:[#allocation5 + $0x30] sm:$0xf]
    %v288 = vld [vmem:[#allocation5 + $0x34] sm:$0xf]
    %v289 = vld [vmem:[#allocation5 + $0x38] sm:$0xf]
    %v290 = vld [vmem:[#allocation5 + $0x3c] sm:$0xf]
    %v291 = vld [vmem:[#allocation5 + $0x40] sm:$0xf]
    %v292 = vld [vmem:[#allocation5 + $0x44] sm:$0xf]
    %v293 = vld [vmem:[#allocation5 + $0x48] sm:$0xf]
    %v294 = vld [vmem:[#allocation5 + $0x4c] sm:$0xf]
    %v295 = vld [vmem:[#allocation5 + $0x50] sm:$0xf]
    %v296 = vld [vmem:[#allocation5 + $0x54] sm:$0xf]
    %v297 = vld [vmem:[#allocation5 + $0x58] sm:$0xf]
    %v298 = vld [vmem:[#allocation5 + $0x5c] sm:$0xf]
    %v299 = vld [vmem:[#allocation5 + $0x60] sm:$0xf]
    %v300 = vld [vmem:[#allocation5 + $0x64] sm:$0xf]
    %v301 = vld [vmem:[#allocation5 + $0x68] sm:$0xf]
    %v302 = vld [vmem:[#allocation5 + $0x6c] sm:$0xf]
    %v303 = vld [vmem:[#allocation5 + $0x70] sm:$0xf]
    %v304 = vld [vmem:[#allocation5 + $0x74] sm:$0xf]
    %v305 = vld [vmem:[#allocation5 + $0x78] sm:$0xf]
    %v306 = vld [vmem:[#allocation5 + $0x7c] sm:$0xf]
    %v307 = vld [vmem:[#allocation5 + $0x80] sm:$0xf]
    %v308 = vld [vmem:[#allocation5 + $0x84] sm:$0xf]
    %v309 = vld [vmem:[#allocation5 + $0x88] sm:$0xf]
    %v310 = vld [vmem:[#allocation5 + $0x8c] sm:$0xf]
    %v311 = vld [vmem:[#allocation5 + $0x90] sm:$0xf]
    %v312 = vld [vmem:[#allocation5 + $0x94] sm:$0xf]
    %v313 = vld [vmem:[#allocation5 + $0x98] sm:$0xf]
    %v314 = vld [vmem:[#allocation5 + $0x9c] sm:$0xf]
    %v315 = vld [vmem:[#allocation5 + $0xa0] sm:$0xf]
    %v316 = vld [vmem:[#allocation5 + $0xa4] sm:$0xf]
    %v317 = vld [vmem:[#allocation5 + $0xa8] sm:$0xf]
    %v318 = vld [vmem:[#allocation5 + $0xac] sm:$0xf]
    %v319 = vld [vmem:[#allocation5 + $0xb0] sm:$0xf]
    %v320 = vld [vmem:[#allocation5 + $0xb4] sm:$0xf]
    %v321 = vld [vmem:[#allocation5 + $0xb8] sm:$0xf]
    %v322 = vld [vmem:[#allocation5 + $0xbc] sm:$0xf]
    %v323 = vld [vmem:[#allocation5 + $0xc0] sm:$0xf]
    %v324 = vld [vmem:[#allocation5 + $0xc4] sm:$0xf]
    %v325 = vld [vmem:[#allocation5 + $0xc8] sm:$0xf]
    %v326 = vld [vmem:[#allocation5 + $0xcc] sm:$0xf]
    %v327 = vld [vmem:[#allocation5 + $0xd0] sm:$0xf]
    %v328 = vld [vmem:[#allocation5 + $0xd4] sm:$0xf]
    %v329 = vld [vmem:[#allocation5 + $0xd8] sm:$0xf]
    %v330 = vld [vmem:[#allocation5 + $0xdc] sm:$0xf]
    %v331 = vld [vmem:[#allocation5 + $0xe0] sm:$0xf]
    %v332 = vld [vmem:[#allocation5 + $0xe4] sm:$0xf]
    %v333 = vld [vmem:[#allocation5 + $0xe8] sm:$0xf]
    %v334 = vld [vmem:[#allocation5 + $0xec] sm:$0xf]
    %v335 = vld [vmem:[#allocation5 + $0xf0] sm:$0xf]
    %v336 = vld [vmem:[#allocation5 + $0xf4] sm:$0xf]
    %v337 = vld [vmem:[#allocation5 + $0xf8] sm:$0xf]
    %v338 = vld [vmem:[#allocation5 + $0xfc] sm:$0xf]
    %v339 = vld [vmem:[#allocation5 + $0x100] sm:$0xf]
    %v340 = vld [vmem:[#allocation5 + $0x104] sm:$0xf]
    %v341 = vld [vmem:[#allocation5 + $0x108] sm:$0xf]
    %v342 = vld [vmem:[#allocation5 + $0x10c] sm:$0xf]
    %v343 = vld [vmem:[#allocation5 + $0x110] sm:$0xf]
    %v344 = vld [vmem:[#allocation5 + $0x114] sm:$0xf]
    %v345 = vld [vmem:[#allocation5 + $0x118] sm:$0xf]
    %v346 = vld [vmem:[#allocation5 + $0x11c] sm:$0xf]
    %v347 = vld [vmem:[#allocation5 + $0x120] sm:$0xf]
    %v348 = vld [vmem:[#allocation5 + $0x124] sm:$0xf]
    %v349 = vld [vmem:[#allocation5 + $0x128] sm:$0xf]
    %v350 = vld [vmem:[#allocation5 + $0x12c] sm:$0xf]
    %v351 = vld [vmem:[#allocation5 + $0x130] sm:$0xf]
    %v352 = vld [vmem:[#allocation5 + $0x134] sm:$0xf]
    %v353 = vld [vmem:[#allocation5 + $0x138] sm:$0xf]
    %v354 = vld [vmem:[#allocation5 + $0x13c] sm:$0xf]
    %v355 = vld [vmem:[#allocation5 + $0x140] sm:$0xf]
    %v356 = vld [vmem:[#allocation5 + $0x144] sm:$0xf]
    %v357 = vld [vmem:[#allocation5 + $0x148] sm:$0xf]
    %v358 = vld [vmem:[#allocation5 + $0x14c] sm:$0xf]
    %v359 = vld [vmem:[#allocation5 + $0x150] sm:$0xf]
    %v360 = vld [vmem:[#allocation5 + $0x154] sm:$0xf]
    %v361 = vld [vmem:[#allocation5 + $0x158] sm:$0xf]
    %v362 = vld [vmem:[#allocation5 + $0x15c] sm:$0xf]
    %v363 = vld [vmem:[#allocation5 + $0x160] sm:$0xf]
    %v364 = vld [vmem:[#allocation5 + $0x164] sm:$0xf]
    %v365 = vld [vmem:[#allocation5 + $0x168] sm:$0xf]
    %v366 = vld [vmem:[#allocation5 + $0x16c] sm:$0xf]
    %v367 = vld [vmem:[#allocation5 + $0x170] sm:$0xf]
    %v368 = vld [vmem:[#allocation5 + $0x174] sm:$0xf]
    %v369 = vld [vmem:[#allocation5 + $0x178] sm:$0xf]
    %v370 = vld [vmem:[#allocation5 + $0x17c] sm:$0xf]
    %v371 = vld [vmem:[#allocation5 + $0x180] sm:$0xf]
    %v372 = vld [vmem:[#allocation5 + $0x184] sm:$0xf]
    %v373 = vld [vmem:[#allocation5 + $0x188] sm:$0xf]
    %v374 = vld [vmem:[#allocation5 + $0x18c] sm:$0xf]
    %v375 = vld [vmem:[#allocation5 + $0x190] sm:$0xf]
    %v376 = vld [vmem:[#allocation5 + $0x194] sm:$0xf]
    %v377 = vld [vmem:[#allocation5 + $0x198] sm:$0xf]
    %v378 = vld [vmem:[#allocation5 + $0x19c] sm:$0xf]
    %v379 = vld [vmem:[#allocation5 + $0x1a0] sm:$0xf]
    %v380 = vld [vmem:[#allocation5 + $0x1a4] sm:$0xf]
    %v381 = vld [vmem:[#allocation5 + $0x1a8] sm:$0xf]
    %v382 = vld [vmem:[#allocation5 + $0x1ac] sm:$0xf]
    %v383 = vld [vmem:[#allocation5 + $0x1b0] sm:$0xf]
    %v384 = vld [vmem:[#allocation5 + $0x1b4] sm:$0xf]
    %v385 = vld [vmem:[#allocation5 + $0x1b8] sm:$0xf]
    %v386 = vld [vmem:[#allocation5 + $0x1bc] sm:$0xf]
    %v387 = vld [vmem:[#allocation5 + $0x1c0] sm:$0xf]
    %v388 = vld [vmem:[#allocation5 + $0x1c4] sm:$0xf]
    %v389 = vld [vmem:[#allocation5 + $0x1c8] sm:$0xf]
    %v390 = vld [vmem:[#allocation5 + $0x1cc] sm:$0xf]
    %v391 = vld [vmem:[#allocation5 + $0x1d0] sm:$0xf]
    %v392 = vld [vmem:[#allocation5 + $0x1d4] sm:$0xf]
    %v393 = vld [vmem:[#allocation5 + $0x1d8] sm:$0xf]
    %v394 = vld [vmem:[#allocation5 + $0x1dc] sm:$0xf]
    %v395 = vld [vmem:[#allocation5 + $0x1e0] sm:$0xf]
    %v396 = vld [vmem:[#allocation5 + $0x1e4] sm:$0xf]
    %v397 = vld [vmem:[#allocation5 + $0x1e8] sm:$0xf]
    %v398 = vld [vmem:[#allocation5 + $0x1ec] sm:$0xf]
    %v399 = vld [vmem:[#allocation5 + $0x1f0] sm:$0xf]
    %v400 = vld [vmem:[#allocation5 + $0x1f4] sm:$0xf]
    %v401 = vld [vmem:[#allocation5 + $0x1f8] sm:$0xf]
    %v402 = vld [vmem:[#allocation5 + $0x1fc] sm:$0xf]
    %v403 = vld [vmem:[#allocation5 + $0x200] sm:$0xf]
    %v404 = vld [vmem:[#allocation5 + $0x204] sm:$0xf]
    %v405 = vld [vmem:[#allocation5 + $0x208] sm:$0xf]
    %v406 = vld [vmem:[#allocation5 + $0x20c] sm:$0xf]
    %v407 = vld [vmem:[#allocation5 + $0x210] sm:$0xf]
    %v408 = vld [vmem:[#allocation5 + $0x214] sm:$0xf]
    %v409 = vld [vmem:[#allocation5 + $0x218] sm:$0xf]
    %v410 = vld [vmem:[#allocation5 + $0x21c] sm:$0xf]
    %v411 = vld [vmem:[#allocation5 + $0x220] sm:$0xf]
    %v412 = vld [vmem:[#allocation5 + $0x224] sm:$0xf]
    %v413 = vld [vmem:[#allocation5 + $0x228] sm:$0xf]
    %v414 = vld [vmem:[#allocation5 + $0x22c] sm:$0xf]
    %v415 = vld [vmem:[#allocation5 + $0x230] sm:$0xf]
    %v416 = vld [vmem:[#allocation5 + $0x234] sm:$0xf]
    %v417 = vld [vmem:[#allocation5 + $0x238] sm:$0xf]
    %v418 = vld [vmem:[#allocation5 + $0x23c] sm:$0xf]
    %v419 = vld [vmem:[#allocation5 + $0x240] sm:$0xf]
    %v420 = vld [vmem:[#allocation5 + $0x244] sm:$0xf]
    %v421 = vld [vmem:[#allocation5 + $0x248] sm:$0xf]
    %v422 = vld [vmem:[#allocation5 + $0x24c] sm:$0xf]
    %v423 = vld [vmem:[#allocation5 + $0x250] sm:$0xf]
    %v424 = vld [vmem:[#allocation5 + $0x254] sm:$0xf]
    %v425 = vld [vmem:[#allocation5 + $0x258] sm:$0xf]
    %v426 = vld [vmem:[#allocation5 + $0x25c] sm:$0xf]
    %v427 = vld [vmem:[#allocation5 + $0x260] sm:$0xf]
    %v428 = vld [vmem:[#allocation5 + $0x264] sm:$0xf]
    %v429 = vld [vmem:[#allocation5 + $0x268] sm:$0xf]
    %v430 = vld [vmem:[#allocation5 + $0x26c] sm:$0xf]
    %v431 = vld [vmem:[#allocation5 + $0x270] sm:$0xf]
    %v432 = vld [vmem:[#allocation5 + $0x274] sm:$0xf]
    %v433 = vld [vmem:[#allocation5 + $0x278] sm:$0xf]
    %v434 = vld [vmem:[#allocation5 + $0x27c] sm:$0xf]
    %v435 = vld [vmem:[#allocation5 + $0x280] sm:$0xf]
    %v436 = vld [vmem:[#allocation5 + $0x284] sm:$0xf]
    %v437 = vld [vmem:[#allocation5 + $0x288] sm:$0xf]
    %v438 = vld [vmem:[#allocation5 + $0x28c] sm:$0xf]
    %v439 = vld [vmem:[#allocation5 + $0x290] sm:$0xf]
    %v440 = vld [vmem:[#allocation5 + $0x294] sm:$0xf]
    %v441 = vld [vmem:[#allocation5 + $0x298] sm:$0xf]
    %v442 = vld [vmem:[#allocation5 + $0x29c] sm:$0xf]
    %v443 = vld [vmem:[#allocation5 + $0x2a0] sm:$0xf]
    %v444 = vld [vmem:[#allocation5 + $0x2a4] sm:$0xf]
    %v445 = vld [vmem:[#allocation5 + $0x2a8] sm:$0xf]
    %v446 = vld [vmem:[#allocation5 + $0x2ac] sm:$0xf]
    %v447 = vld [vmem:[#allocation5 + $0x2b0] sm:$0xf]
    %v448 = vld [vmem:[#allocation5 + $0x2b4] sm:$0xf]
    %v449 = vld [vmem:[#allocation5 + $0x2b8] sm:$0xf]
    %v450 = vld [vmem:[#allocation5 + $0x2bc] sm:$0xf]
    %v451 = vld [vmem:[#allocation5 + $0x2c0] sm:$0xf]
    %v452 = vld [vmem:[#allocation5 + $0x2c4] sm:$0xf]
    %v453 = vld [vmem:[#allocation5 + $0x2c8] sm:$0xf]
    %v454 = vld [vmem:[#allocation5 + $0x2cc] sm:$0xf]
    %v455 = vld [vmem:[#allocation5 + $0x2d0] sm:$0xf]
    %v456 = vld [vmem:[#allocation5 + $0x2d4] sm:$0xf]
    %v457 = vld [vmem:[#allocation5 + $0x2d8] sm:$0xf]
    %v458 = vld [vmem:[#allocation5 + $0x2dc] sm:$0xf]
    %v459 = vld [vmem:[#allocation5 + $0x2e0] sm:$0xf]
    %v460 = vld [vmem:[#allocation5 + $0x2e4] sm:$0xf]
    %v461 = vld [vmem:[#allocation5 + $0x2e8] sm:$0xf]
    %v462 = vld [vmem:[#allocation5 + $0x2ec] sm:$0xf]
    %v463 = vld [vmem:[#allocation5 + $0x2f0] sm:$0xf]
    %v464 = vld [vmem:[#allocation5 + $0x2f4] sm:$0xf]
    %v465 = vld [vmem:[#allocation5 + $0x2f8] sm:$0xf]
    %v466 = vld [vmem:[#allocation5 + $0x2fc] sm:$0xf]
    %v467 = vld [vmem:[#allocation5 + $0x300] sm:$0xf]
    %v468 = vld [vmem:[#allocation5 + $0x304] sm:$0xf]
    %v469 = vld [vmem:[#allocation5 + $0x308] sm:$0xf]
    %v470 = vld [vmem:[#allocation5 + $0x30c] sm:$0xf]
    %v471 = vld [vmem:[#allocation5 + $0x310] sm:$0xf]
    %v472 = vld [vmem:[#allocation5 + $0x314] sm:$0xf]
    %v473 = vld [vmem:[#allocation5 + $0x318] sm:$0xf]
    %v474 = vld [vmem:[#allocation5 + $0x31c] sm:$0xf]
    %v475 = vld [vmem:[#allocation5 + $0x320] sm:$0xf]
    %v476 = vld [vmem:[#allocation5 + $0x324] sm:$0xf]
    %v477 = vld [vmem:[#allocation5 + $0x328] sm:$0xf]
    %v478 = vld [vmem:[#allocation5 + $0x32c] sm:$0xf]
    %v479 = vld [vmem:[#allocation5 + $0x330] sm:$0xf]
    %v480 = vld [vmem:[#allocation5 + $0x334] sm:$0xf]
    %v481 = vld [vmem:[#allocation5 + $0x338] sm:$0xf]
    %v482 = vld [vmem:[#allocation5 + $0x33c] sm:$0xf]
    %v483 = vld [vmem:[#allocation5 + $0x340] sm:$0xf]
    %v484 = vld [vmem:[#allocation5 + $0x344] sm:$0xf]
    %v485 = vld [vmem:[#allocation5 + $0x348] sm:$0xf]
    %v486 = vld [vmem:[#allocation5 + $0x34c] sm:$0xf]
    %v487 = vld [vmem:[#allocation5 + $0x350] sm:$0xf]
    %v488 = vld [vmem:[#allocation5 + $0x354] sm:$0xf]
    %v489 = vld [vmem:[#allocation5 + $0x358] sm:$0xf]
    %v490 = vld [vmem:[#allocation5 + $0x35c] sm:$0xf]
    %v491 = vld [vmem:[#allocation5 + $0x360] sm:$0xf]
    %v492 = vld [vmem:[#allocation5 + $0x364] sm:$0xf]
    %v493 = vld [vmem:[#allocation5 + $0x368] sm:$0xf]
    %v494 = vld [vmem:[#allocation5 + $0x36c] sm:$0xf]
    %v495 = vld [vmem:[#allocation5 + $0x370] sm:$0xf]
    %v496 = vld [vmem:[#allocation5 + $0x374] sm:$0xf]
    %v497 = vld [vmem:[#allocation5 + $0x378] sm:$0xf]
    %v498 = vld [vmem:[#allocation5 + $0x37c] sm:$0xf]
    %v499 = vld [vmem:[#allocation5 + $0x380] sm:$0xf]
    %v500 = vld [vmem:[#allocation5 + $0x384] sm:$0xf]
    %v501 = vld [vmem:[#allocation5 + $0x388] sm:$0xf]
    %v502 = vld [vmem:[#allocation5 + $0x38c] sm:$0xf]
    %v503 = vld [vmem:[#allocation5 + $0x390] sm:$0xf]
    %v504 = vld [vmem:[#allocation5 + $0x394] sm:$0xf]
    %v505 = vld [vmem:[#allocation5 + $0x398] sm:$0xf]
    %v506 = vld [vmem:[#allocation5 + $0x39c] sm:$0xf]
    %v507 = vld [vmem:[#allocation5 + $0x3a0] sm:$0xf]
    %v508 = vld [vmem:[#allocation5 + $0x3a4] sm:$0xf]
    %v509 = vld [vmem:[#allocation5 + $0x3a8] sm:$0xf]
    %v510 = vld [vmem:[#allocation5 + $0x3ac] sm:$0xf]
    %v511 = vld [vmem:[#allocation5 + $0x3b0] sm:$0xf]
    %v512 = vld [vmem:[#allocation5 + $0x3b4] sm:$0xf]
    %v513 = vld [vmem:[#allocation5 + $0x3b8] sm:$0xf]
    %v514 = vld [vmem:[#allocation5 + $0x3bc] sm:$0xf]
    %v515 = vld [vmem:[#allocation5 + $0x3c0] sm:$0xf]
    %v516 = vld [vmem:[#allocation5 + $0x3c4] sm:$0xf]
    %v517 = vld [vmem:[#allocation5 + $0x3c8] sm:$0xf]
    %v518 = vld [vmem:[#allocation5 + $0x3cc] sm:$0xf]
    %v519 = vld [vmem:[#allocation5 + $0x3d0] sm:$0xf]
    %v520 = vld [vmem:[#allocation5 + $0x3d4] sm:$0xf]
    %v521 = vld [vmem:[#allocation5 + $0x3d8] sm:$0xf]
    %v522 = vld [vmem:[#allocation5 + $0x3dc] sm:$0xf]
    %v523 = vld [vmem:[#allocation5 + $0x3e0] sm:$0xf]
    %v524 = vld [vmem:[#allocation5 + $0x3e4] sm:$0xf]
    %v525 = vld [vmem:[#allocation5 + $0x3e8] sm:$0xf]
    %v526 = vld [vmem:[#allocation5 + $0x3ec] sm:$0xf]
    %v527 = vld [vmem:[#allocation5 + $0x3f0] sm:$0xf]
    %v528 = vld [vmem:[#allocation5 + $0x3f4] sm:$0xf]
    %v529 = vld [vmem:[#allocation5 + $0x3f8] sm:$0xf]
    %v530 = vld [vmem:[#allocation5 + $0x3fc] sm:$0xf]
    %v531 = vld [vmem:[#allocation5 + $0x400] sm:$0xf]
    %v532 = vld [vmem:[#allocation5 + $0x404] sm:$0xf]
    %v533 = vld [vmem:[#allocation5 + $0x408] sm:$0xf]
    %v534 = vld [vmem:[#allocation5 + $0x40c] sm:$0xf]
    %v535 = vld [vmem:[#allocation5 + $0x410] sm:$0xf]
    %v536 = vld [vmem:[#allocation5 + $0x414] sm:$0xf]
    %v537 = vld [vmem:[#allocation5 + $0x418] sm:$0xf]
    %v538 = vld [vmem:[#allocation5 + $0x41c] sm:$0xf]
    %v539 = vld [vmem:[#allocation5 + $0x420] sm:$0xf]
    %v540 = vld [vmem:[#allocation5 + $0x424] sm:$0xf]
    %v541 = vld [vmem:[#allocation5 + $0x428] sm:$0xf]
    %v542 = vld [vmem:[#allocation5 + $0x42c] sm:$0xf]
    %v543 = vld [vmem:[#allocation5 + $0x430] sm:$0xf]
    %v544 = vld [vmem:[#allocation5 + $0x434] sm:$0xf]
    %v545 = vld [vmem:[#allocation5 + $0x438] sm:$0xf]
    %v546 = vld [vmem:[#allocation5 + $0x43c] sm:$0xf]
    %v547 = vld [vmem:[#allocation5 + $0x440] sm:$0xf]
    %v548 = vld [vmem:[#allocation5 + $0x444] sm:$0xf]
    %v549 = vld [vmem:[#allocation5 + $0x448] sm:$0xf]
    %v550 = vld [vmem:[#allocation5 + $0x44c] sm:$0xf]
    %v551 = vld [vmem:[#allocation5 + $0x450] sm:$0xf]
    %v552 = vld [vmem:[#allocation5 + $0x454] sm:$0xf]
    %v553 = vld [vmem:[#allocation5 + $0x458] sm:$0xf]
    %v554 = vld [vmem:[#allocation5 + $0x45c] sm:$0xf]
    %v555 = vld [vmem:[#allocation5 + $0x460] sm:$0xf]
    %v556 = vld [vmem:[#allocation5 + $0x464] sm:$0xf]
    %v557 = vld [vmem:[#allocation5 + $0x468] sm:$0xf]
    %v558 = vld [vmem:[#allocation5 + $0x46c] sm:$0xf]
    %v559 = vld [vmem:[#allocation5 + $0x470] sm:$0xf]
    %v560 = vld [vmem:[#allocation5 + $0x474] sm:$0xf]
    %v561 = vld [vmem:[#allocation5 + $0x478] sm:$0xf]
    %v562 = vld [vmem:[#allocation5 + $0x47c] sm:$0xf]
    %v563 = vld [vmem:[#allocation5 + $0x480] sm:$0xf]
    %v564 = vld [vmem:[#allocation5 + $0x484] sm:$0xf]
    %v565 = vld [vmem:[#allocation5 + $0x488] sm:$0xf]
    %v566 = vld [vmem:[#allocation5 + $0x48c] sm:$0xf]
    %v567 = vld [vmem:[#allocation5 + $0x490] sm:$0xf]
    %v568 = vld [vmem:[#allocation5 + $0x494] sm:$0xf]
    %v569 = vld [vmem:[#allocation5 + $0x498] sm:$0xf]
    %v570 = vld [vmem:[#allocation5 + $0x49c] sm:$0xf]
    %v571 = vld [vmem:[#allocation5 + $0x4a0] sm:$0xf]
    %v572 = vld [vmem:[#allocation5 + $0x4a4] sm:$0xf]
    %v573 = vld [vmem:[#allocation5 + $0x4a8] sm:$0xf]
    %v574 = vld [vmem:[#allocation5 + $0x4ac] sm:$0xf]
    %v575 = vld [vmem:[#allocation5 + $0x4b0] sm:$0xf]
    %v576 = vld [vmem:[#allocation5 + $0x4b4] sm:$0xf]
    %v577 = vld [vmem:[#allocation5 + $0x4b8] sm:$0xf]
    %v578 = vld [vmem:[#allocation5 + $0x4bc] sm:$0xf]
    %v579 = vld [vmem:[#allocation5 + $0x4c0] sm:$0xf]
    %v580 = vld [vmem:[#allocation5 + $0x4c4] sm:$0xf]
    %v581 = vld [vmem:[#allocation5 + $0x4c8] sm:$0xf]
    %v582 = vld [vmem:[#allocation5 + $0x4cc] sm:$0xf]
    %v583 = vld [vmem:[#allocation5 + $0x4d0] sm:$0xf]
    %v584 = vld [vmem:[#allocation5 + $0x4d4] sm:$0xf]
    %v585 = vld [vmem:[#allocation5 + $0x4d8] sm:$0xf]
    %v586 = vld [vmem:[#allocation5 + $0x4dc] sm:$0xf]
    %v587 = vld [vmem:[#allocation5 + $0x4e0] sm:$0xf]
    %v588 = vld [vmem:[#allocation5 + $0x4e4] sm:$0xf]
    %v589 = vld [vmem:[#allocation5 + $0x4e8] sm:$0xf]
    %v590 = vld [vmem:[#allocation5 + $0x4ec] sm:$0xf]
    %v591 = vld [vmem:[#allocation5 + $0x4f0] sm:$0xf]
    %v592 = vld [vmem:[#allocation5 + $0x4f4] sm:$0xf]
    %v593 = vld [vmem:[#allocation5 + $0x4f8] sm:$0xf]
    %v594 = vld [vmem:[#allocation5 + $0x4fc] sm:$0xf]
    %v595 = vld [vmem:[#allocation5 + $0x500] sm:$0xf]
    %v596 = vld [vmem:[#allocation5 + $0x504] sm:$0xf]
    %v597 = vld [vmem:[#allocation5 + $0x508] sm:$0xf]
    %v598 = vld [vmem:[#allocation5 + $0x50c] sm:$0xf]
    %v599 = vld [vmem:[#allocation5 + $0x510] sm:$0xf]
    %v600 = vld [vmem:[#allocation5 + $0x514] sm:$0xf]
    %v601 = vld [vmem:[#allocation5 + $0x518] sm:$0xf]
    %v602 = vld [vmem:[#allocation5 + $0x51c] sm:$0xf]
    %v603 = vld [vmem:[#allocation5 + $0x520] sm:$0xf]
    %v604 = vld [vmem:[#allocation5 + $0x524] sm:$0xf]
    %v605 = vld [vmem:[#allocation5 + $0x528] sm:$0xf]
    %v606 = vld [vmem:[#allocation5 + $0x52c] sm:$0xf]
    %v607 = vld [vmem:[#allocation5 + $0x530] sm:$0xf]
    %v608 = vld [vmem:[#allocation5 + $0x534] sm:$0xf]
    %v609 = vld [vmem:[#allocation5 + $0x538] sm:$0xf]
    %v610 = vld [vmem:[#allocation5 + $0x53c] sm:$0xf]
    %v611 = vld [vmem:[#allocation5 + $0x540] sm:$0xf]
    %v612 = vld [vmem:[#allocation5 + $0x544] sm:$0xf]
    %v613 = vld [vmem:[#allocation5 + $0x548] sm:$0xf]
    %v614 = vld [vmem:[#allocation5 + $0x54c] sm:$0xf]
    %v615 = vld [vmem:[#allocation5 + $0x550] sm:$0xf]
    %v616 = vld [vmem:[#allocation5 + $0x554] sm:$0xf]
    %v617 = vld [vmem:[#allocation5 + $0x558] sm:$0xf]
    %v618 = vld [vmem:[#allocation5 + $0x55c] sm:$0xf]
    %v619 = vld [vmem:[#allocation5 + $0x560] sm:$0xf]
    %v620 = vld [vmem:[#allocation5 + $0x564] sm:$0xf]
    %v621 = vld [vmem:[#allocation5 + $0x568] sm:$0xf]
    %v622 = vld [vmem:[#allocation5 + $0x56c] sm:$0xf]
    %v623 = vld [vmem:[#allocation5 + $0x570] sm:$0xf]
    %v624 = vld [vmem:[#allocation5 + $0x574] sm:$0xf]
    %v625 = vld [vmem:[#allocation5 + $0x578] sm:$0xf]
    %v626 = vld [vmem:[#allocation5 + $0x57c] sm:$0xf]
    %v627 = vld [vmem:[#allocation5 + $0x580] sm:$0xf]
    %v628 = vld [vmem:[#allocation5 + $0x584] sm:$0xf]
    %v629 = vld [vmem:[#allocation5 + $0x588] sm:$0xf]
    %v630 = vld [vmem:[#allocation5 + $0x58c] sm:$0xf]
    %v631 = vld [vmem:[#allocation5 + $0x590] sm:$0xf]
    %v632 = vld [vmem:[#allocation5 + $0x594] sm:$0xf]
    %v633 = vld [vmem:[#allocation5 + $0x598] sm:$0xf]
    %v634 = vld [vmem:[#allocation5 + $0x59c] sm:$0xf]
    %v635 = vld [vmem:[#allocation5 + $0x5a0] sm:$0xf]
    %v636 = vld [vmem:[#allocation5 + $0x5a4] sm:$0xf]
    %v637 = vld [vmem:[#allocation5 + $0x5a8] sm:$0xf]
    %v638 = vld [vmem:[#allocation5 + $0x5ac] sm:$0xf]
    %v639 = vld [vmem:[#allocation5 + $0x5b0] sm:$0xf]
    %v640 = vld [vmem:[#allocation5 + $0x5b4] sm:$0xf]
    %v641 = vld [vmem:[#allocation5 + $0x5b8] sm:$0xf]
    %v642 = vld [vmem:[#allocation5 + $0x5bc] sm:$0xf]
    %v643 = vld [vmem:[#allocation5 + $0x5c0] sm:$0xf]
    %v644 = vld [vmem:[#allocation5 + $0x5c4] sm:$0xf]
    %v645 = vld [vmem:[#allocation5 + $0x5c8] sm:$0xf]
    %v646 = vld [vmem:[#allocation5 + $0x5cc] sm:$0xf]
    %v647 = vld [vmem:[#allocation5 + $0x5d0] sm:$0xf]
    %v648 = vld [vmem:[#allocation5 + $0x5d4] sm:$0xf]
    %v649 = vld [vmem:[#allocation5 + $0x5d8] sm:$0xf]
    %v650 = vld [vmem:[#allocation5 + $0x5dc] sm:$0xf]
    %v651 = vld [vmem:[#allocation5 + $0x5e0] sm:$0xf]
    %v652 = vld [vmem:[#allocation5 + $0x5e4] sm:$0xf]
    %v653 = vld [vmem:[#allocation5 + $0x5e8] sm:$0xf]
    %v654 = vld [vmem:[#allocation5 + $0x5ec] sm:$0xf]
    %v655 = vld [vmem:[#allocation5 + $0x5f0] sm:$0xf]
    %v656 = vld [vmem:[#allocation5 + $0x5f4] sm:$0xf]
    %v657 = vld [vmem:[#allocation5 + $0x5f8] sm:$0xf]
    %v658 = vld [vmem:[#allocation5 + $0x5fc] sm:$0xf]
    %v659 = vld [vmem:[%s2] sm:$0x1]
    %v661 = vlaneseq
    %v662 = vshrl.u32 %v661, 7
    %v663 = vsub.s32 0, %v662
    %v664 = vrot.slane %v659, %v663
    %v858 = vunpack.c.l.b16 %v83
    %v859 = vunpack.c.h.b16 %v83
    %v860 = vunpack.c.l.b16 %v84
    %v861 = vunpack.c.h.b16 %v84
    %v862 = vunpack.c.l.b16 %v85
    %v863 = vunpack.c.h.b16 %v85
    %v864 = vunpack.c.l.b16 %v86
    %v865 = vunpack.c.h.b16 %v86
    %v866 = vunpack.c.l.b16 %v87
    %v867 = vunpack.c.h.b16 %v87
    %v868 = vunpack.c.l.b16 %v88
    %v869 = vunpack.c.h.b16 %v88
    %v870 = vunpack.c.l.b16 %v89
    %v871 = vunpack.c.h.b16 %v89
    %v872 = vunpack.c.l.b16 %v90
    %v873 = vunpack.c.h.b16 %v90
    %v874 = vunpack.c.l.b16 %v91
    %v875 = vunpack.c.h.b16 %v91
    %v876 = vunpack.c.l.b16 %v92
    %v877 = vunpack.c.h.b16 %v92
    %v878 = vunpack.c.l.b16 %v93
    %v879 = vunpack.c.h.b16 %v93
    %v880 = vunpack.c.l.b16 %v94
    %v881 = vunpack.c.h.b16 %v94
    %v882 = vunpack.c.l.b16 %v95
    %v883 = vunpack.c.h.b16 %v95
    %v884 = vunpack.c.l.b16 %v96
    %v885 = vunpack.c.h.b16 %v96
    %v886 = vunpack.c.l.b16 %v97
    %v887 = vunpack.c.h.b16 %v97
    %v888 = vunpack.c.l.b16 %v98
    %v889 = vunpack.c.h.b16 %v98
    %v890 = vunpack.c.l.b16 %v99
    %v891 = vunpack.c.h.b16 %v99
    %v892 = vunpack.c.l.b16 %v100
    %v893 = vunpack.c.h.b16 %v100
    %v894 = vunpack.c.l.b16 %v101
    %v895 = vunpack.c.h.b16 %v101
    %v896 = vunpack.c.l.b16 %v102
    %v897 = vunpack.c.h.b16 %v102
    %v898 = vunpack.c.l.b16 %v103
    %v899 = vunpack.c.h.b16 %v103
    %v900 = vunpack.c.l.b16 %v104
    %v901 = vunpack.c.h.b16 %v104
    %v902 = vunpack.c.l.b16 %v105
    %v903 = vunpack.c.h.b16 %v105
    %v904 = vunpack.c.l.b16 %v106
    %v905 = vunpack.c.h.b16 %v106
    %v906 = vunpack.c.l.b16 %v107
    %v907 = vunpack.c.h.b16 %v107
    %v908 = vunpack.c.l.b16 %v108
    %v909 = vunpack.c.h.b16 %v108
    %v910 = vunpack.c.l.b16 %v109
    %v911 = vunpack.c.h.b16 %v109
    %v912 = vunpack.c.l.b16 %v110
    %v913 = vunpack.c.h.b16 %v110
    %v914 = vunpack.c.l.b16 %v111
    %v915 = vunpack.c.h.b16 %v111
    %v916 = vunpack.c.l.b16 %v112
    %v917 = vunpack.c.h.b16 %v112
    %v918 = vunpack.c.l.b16 %v113
    %v919 = vunpack.c.h.b16 %v113
    %v920 = vunpack.c.l.b16 %v114
    %v921 = vunpack.c.h.b16 %v114
    %v922 = vunpack.c.l.b16 %v115
    %v923 = vunpack.c.h.b16 %v115
    %v924 = vunpack.c.l.b16 %v116
    %v925 = vunpack.c.h.b16 %v116
    %v926 = vunpack.c.l.b16 %v117
    %v927 = vunpack.c.h.b16 %v117
    %v928 = vunpack.c.l.b16 %v118
    %v929 = vunpack.c.h.b16 %v118
    %v930 = vunpack.c.l.b16 %v119
    %v931 = vunpack.c.h.b16 %v119
    %v932 = vunpack.c.l.b16 %v120
    %v933 = vunpack.c.h.b16 %v120
    %v934 = vunpack.c.l.b16 %v121
    %v935 = vunpack.c.h.b16 %v121
    %v936 = vunpack.c.l.b16 %v122
    %v937 = vunpack.c.h.b16 %v122
    %v938 = vunpack.c.l.b16 %v123
    %v939 = vunpack.c.h.b16 %v123
    %v940 = vunpack.c.l.b16 %v124
    %v941 = vunpack.c.h.b16 %v124
    %v942 = vunpack.c.l.b16 %v125
    %v943 = vunpack.c.h.b16 %v125
    %v944 = vunpack.c.l.b16 %v126
    %v945 = vunpack.c.h.b16 %v126
    %v946 = vunpack.c.l.b16 %v127
    %v947 = vunpack.c.h.b16 %v127
    %v948 = vunpack.c.l.b16 %v128
    %v949 = vunpack.c.h.b16 %v128
    %v950 = vunpack.c.l.b16 %v129
    %v951 = vunpack.c.h.b16 %v129
    %v952 = vunpack.c.l.b16 %v130
    %v953 = vunpack.c.h.b16 %v130
    %v954 = vunpack.c.l.b16 %v131
    %v955 = vunpack.c.h.b16 %v131
    %v956 = vunpack.c.l.b16 %v132
    %v957 = vunpack.c.h.b16 %v132
    %v958 = vunpack.c.l.b16 %v133
    %v959 = vunpack.c.h.b16 %v133
    %v960 = vunpack.c.l.b16 %v134
    %v961 = vunpack.c.h.b16 %v134
    %v962 = vunpack.c.l.b16 %v135
    %v963 = vunpack.c.h.b16 %v135
    %v964 = vunpack.c.l.b16 %v136
    %v965 = vunpack.c.h.b16 %v136
    %v966 = vunpack.c.l.b16 %v137
    %v967 = vunpack.c.h.b16 %v137
    %v968 = vunpack.c.l.b16 %v138
    %v969 = vunpack.c.h.b16 %v138
    %v970 = vunpack.c.l.b16 %v139
    %v971 = vunpack.c.h.b16 %v139
    %v972 = vunpack.c.l.b16 %v140
    %v973 = vunpack.c.h.b16 %v140
    %v974 = vunpack.c.l.b16 %v141
    %v975 = vunpack.c.h.b16 %v141
    %v976 = vunpack.c.l.b16 %v142
    %v977 = vunpack.c.h.b16 %v142
    %v978 = vunpack.c.l.b16 %v143
    %v979 = vunpack.c.h.b16 %v143
    %v980 = vunpack.c.l.b16 %v144
    %v981 = vunpack.c.h.b16 %v144
    %v982 = vunpack.c.l.b16 %v145
    %v983 = vunpack.c.h.b16 %v145
    %v984 = vunpack.c.l.b16 %v146
    %v985 = vunpack.c.h.b16 %v146
    %v986 = vunpack.c.l.b16 %v147
    %v987 = vunpack.c.h.b16 %v147
    %v988 = vunpack.c.l.b16 %v148
    %v989 = vunpack.c.h.b16 %v148
    %v990 = vunpack.c.l.b16 %v149
    %v991 = vunpack.c.h.b16 %v149
    %v992 = vunpack.c.l.b16 %v150
    %v993 = vunpack.c.h.b16 %v150
    %v994 = vunpack.c.l.b16 %v151
    %v995 = vunpack.c.h.b16 %v151
    %v996 = vunpack.c.l.b16 %v152
    %v997 = vunpack.c.h.b16 %v152
    %v998 = vunpack.c.l.b16 %v153
    %v999 = vunpack.c.h.b16 %v153
    %v1000 = vunpack.c.l.b16 %v154
    %v1001 = vunpack.c.h.b16 %v154
    %v1002 = vunpack.c.l.b16 %v155
    %v1003 = vunpack.c.h.b16 %v155
    %v1004 = vunpack.c.l.b16 %v156
    %v1005 = vunpack.c.h.b16 %v156
    %v1006 = vunpack.c.l.b16 %v157
    %v1007 = vunpack.c.h.b16 %v157
    %v1008 = vunpack.c.l.b16 %v158
    %v1009 = vunpack.c.h.b16 %v158
    %v1010 = vunpack.c.l.b16 %v159
    %v1011 = vunpack.c.h.b16 %v159
    %v1012 = vunpack.c.l.b16 %v160
    %v1013 = vunpack.c.h.b16 %v160
    %v1014 = vunpack.c.l.b16 %v161
    %v1015 = vunpack.c.h.b16 %v161
    %v1016 = vunpack.c.l.b16 %v162
    %v1017 = vunpack.c.h.b16 %v162
    %v1018 = vunpack.c.l.b16 %v163
    %v1019 = vunpack.c.h.b16 %v163
    %v1020 = vunpack.c.l.b16 %v164
    %v1021 = vunpack.c.h.b16 %v164
    %v1022 = vunpack.c.l.b16 %v165
    %v1023 = vunpack.c.h.b16 %v165
    %v1024 = vunpack.c.l.b16 %v166
    %v1025 = vunpack.c.h.b16 %v166
    %v1026 = vunpack.c.l.b16 %v167
    %v1027 = vunpack.c.h.b16 %v167
    %v1028 = vunpack.c.l.b16 %v168
    %v1029 = vunpack.c.h.b16 %v168
    %v1030 = vunpack.c.l.b16 %v169
    %v1031 = vunpack.c.h.b16 %v169
    %v1032 = vunpack.c.l.b16 %v170
    %v1033 = vunpack.c.h.b16 %v170
    %v1034 = vunpack.c.l.b16 %v171
    %v1035 = vunpack.c.h.b16 %v171
    %v1036 = vunpack.c.l.b16 %v172
    %v1037 = vunpack.c.h.b16 %v172
    %v1038 = vunpack.c.l.b16 %v173
    %v1039 = vunpack.c.h.b16 %v173
    %v1040 = vunpack.c.l.b16 %v174
    %v1041 = vunpack.c.h.b16 %v174
    %v1042 = vunpack.c.l.b16 %v175
    %v1043 = vunpack.c.h.b16 %v175
    %v1044 = vunpack.c.l.b16 %v176
    %v1045 = vunpack.c.h.b16 %v176
    %v1046 = vunpack.c.l.b16 %v177
    %v1047 = vunpack.c.h.b16 %v177
    %v1048 = vunpack.c.l.b16 %v178
    %v1049 = vunpack.c.h.b16 %v178
    %v1050 = vunpack.c.l.b16 %v179
    %v1051 = vunpack.c.h.b16 %v179
    %v1052 = vunpack.c.l.b16 %v180
    %v1053 = vunpack.c.h.b16 %v180
    %v1054 = vunpack.c.l.b16 %v181
    %v1055 = vunpack.c.h.b16 %v181
    %v1056 = vunpack.c.l.b16 %v182
    %v1057 = vunpack.c.h.b16 %v182
    %v1058 = vunpack.c.l.b16 %v183
    %v1059 = vunpack.c.h.b16 %v183
    %v1060 = vunpack.c.l.b16 %v184
    %v1061 = vunpack.c.h.b16 %v184
    %v1062 = vunpack.c.l.b16 %v185
    %v1063 = vunpack.c.h.b16 %v185
    %v1064 = vunpack.c.l.b16 %v186
    %v1065 = vunpack.c.h.b16 %v186
    %v1066 = vunpack.c.l.b16 %v187
    %v1067 = vunpack.c.h.b16 %v187
    %v1068 = vunpack.c.l.b16 %v188
    %v1069 = vunpack.c.h.b16 %v188
    %v1070 = vunpack.c.l.b16 %v189
    %v1071 = vunpack.c.h.b16 %v189
    %v1072 = vunpack.c.l.b16 %v190
    %v1073 = vunpack.c.h.b16 %v190
    %v1074 = vunpack.c.l.b16 %v191
    %v1075 = vunpack.c.h.b16 %v191
    %v1076 = vunpack.c.l.b16 %v192
    %v1077 = vunpack.c.h.b16 %v192
    %v1078 = vunpack.c.l.b16 %v193
    %v1079 = vunpack.c.h.b16 %v193
    %v1080 = vunpack.c.l.b16 %v194
    %v1081 = vunpack.c.h.b16 %v194
    %v1082 = vunpack.c.l.b16 %v195
    %v1083 = vunpack.c.h.b16 %v195
    %v1084 = vunpack.c.l.b16 %v196
    %v1085 = vunpack.c.h.b16 %v196
    %v1086 = vunpack.c.l.b16 %v197
    %v1087 = vunpack.c.h.b16 %v197
    %v1088 = vunpack.c.l.b16 %v198
    %v1089 = vunpack.c.h.b16 %v198
    %v1090 = vunpack.c.l.b16 %v199
    %v1091 = vunpack.c.h.b16 %v199
    %v1092 = vunpack.c.l.b16 %v200
    %v1093 = vunpack.c.h.b16 %v200
    %v1094 = vunpack.c.l.b16 %v201
    %v1095 = vunpack.c.h.b16 %v201
    %v1096 = vunpack.c.l.b16 %v202
    %v1097 = vunpack.c.h.b16 %v202
    %v1098 = vunpack.c.l.b16 %v203
    %v1099 = vunpack.c.h.b16 %v203
    %v1100 = vunpack.c.l.b16 %v204
    %v1101 = vunpack.c.h.b16 %v204
    %v1102 = vunpack.c.l.b16 %v205
    %v1103 = vunpack.c.h.b16 %v205
    %v1104 = vunpack.c.l.b16 %v206
    %v1105 = vunpack.c.h.b16 %v206
    %v1106 = vunpack.c.l.b16 %v207
    %v1107 = vunpack.c.h.b16 %v207
    %v1108 = vunpack.c.l.b16 %v208
    %v1109 = vunpack.c.h.b16 %v208
    %v1110 = vunpack.c.l.b16 %v209
    %v1111 = vunpack.c.h.b16 %v209
    %v1112 = vunpack.c.l.b16 %v210
    %v1113 = vunpack.c.h.b16 %v210
    %v1114 = vunpack.c.l.b16 %v211
    %v1115 = vunpack.c.h.b16 %v211
    %v1116 = vunpack.c.l.b16 %v212
    %v1117 = vunpack.c.h.b16 %v212
    %v1118 = vunpack.c.l.b16 %v213
    %v1119 = vunpack.c.h.b16 %v213
    %v1120 = vunpack.c.l.b16 %v214
    %v1121 = vunpack.c.h.b16 %v214
    %v1122 = vunpack.c.l.b16 %v215
    %v1123 = vunpack.c.h.b16 %v215
    %v1124 = vunpack.c.l.b16 %v216
    %v1125 = vunpack.c.h.b16 %v216
    %v1126 = vunpack.c.l.b16 %v217
    %v1127 = vunpack.c.h.b16 %v217
    %v1128 = vunpack.c.l.b16 %v218
    %v1129 = vunpack.c.h.b16 %v218
    %v1130 = vunpack.c.l.b16 %v219
    %v1131 = vunpack.c.h.b16 %v219
    %v1132 = vunpack.c.l.b16 %v220
    %v1133 = vunpack.c.h.b16 %v220
    %v1134 = vunpack.c.l.b16 %v221
    %v1135 = vunpack.c.h.b16 %v221
    %v1136 = vunpack.c.l.b16 %v222
    %v1137 = vunpack.c.h.b16 %v222
    %v1138 = vunpack.c.l.b16 %v223
    %v1139 = vunpack.c.h.b16 %v223
    %v1140 = vunpack.c.l.b16 %v224
    %v1141 = vunpack.c.h.b16 %v224
    %v1142 = vunpack.c.l.b16 %v225
    %v1143 = vunpack.c.h.b16 %v225
    %v1144 = vunpack.c.l.b16 %v226
    %v1145 = vunpack.c.h.b16 %v226
    %v1146 = vunpack.c.l.b16 %v227
    %v1147 = vunpack.c.h.b16 %v227
    %v1148 = vunpack.c.l.b16 %v228
    %v1149 = vunpack.c.h.b16 %v228
    %v1150 = vunpack.c.l.b16 %v229
    %v1151 = vunpack.c.h.b16 %v229
    %v1152 = vunpack.c.l.b16 %v230
    %v1153 = vunpack.c.h.b16 %v230
    %v1154 = vunpack.c.l.b16 %v231
    %v1155 = vunpack.c.h.b16 %v231
    %v1156 = vunpack.c.l.b16 %v232
    %v1157 = vunpack.c.h.b16 %v232
    %v1158 = vunpack.c.l.b16 %v233
    %v1159 = vunpack.c.h.b16 %v233
    %v1160 = vunpack.c.l.b16 %v234
    %v1161 = vunpack.c.h.b16 %v234
    %v1162 = vunpack.c.l.b16 %v235
    %v1163 = vunpack.c.h.b16 %v235
    %v1164 = vunpack.c.l.b16 %v236
    %v1165 = vunpack.c.h.b16 %v236
    %v1166 = vunpack.c.l.b16 %v237
    %v1167 = vunpack.c.h.b16 %v237
    %v1168 = vunpack.c.l.b16 %v238
    %v1169 = vunpack.c.h.b16 %v238
    %v1170 = vunpack.c.l.b16 %v239
    %v1171 = vunpack.c.h.b16 %v239
    %v1172 = vunpack.c.l.b16 %v240
    %v1173 = vunpack.c.h.b16 %v240
    %v1174 = vunpack.c.l.b16 %v241
    %v1175 = vunpack.c.h.b16 %v241
    %v1176 = vunpack.c.l.b16 %v242
    %v1177 = vunpack.c.h.b16 %v242
    %v1178 = vunpack.c.l.b16 %v243
    %v1179 = vunpack.c.h.b16 %v243
    %v1180 = vunpack.c.l.b16 %v244
    %v1181 = vunpack.c.h.b16 %v244
    %v1182 = vunpack.c.l.b16 %v245
    %v1183 = vunpack.c.h.b16 %v245
    %v1184 = vunpack.c.l.b16 %v246
    %v1185 = vunpack.c.h.b16 %v246
    %v1186 = vunpack.c.l.b16 %v247
    %v1187 = vunpack.c.h.b16 %v247
    %v1188 = vunpack.c.l.b16 %v248
    %v1189 = vunpack.c.h.b16 %v248
    %v1190 = vunpack.c.l.b16 %v249
    %v1191 = vunpack.c.h.b16 %v249
    %v1192 = vunpack.c.l.b16 %v250
    %v1193 = vunpack.c.h.b16 %v250
    %v1194 = vunpack.c.l.b16 %v251
    %v1195 = vunpack.c.h.b16 %v251
    %v1196 = vunpack.c.l.b16 %v252
    %v1197 = vunpack.c.h.b16 %v252
    %v1198 = vunpack.c.l.b16 %v253
    %v1199 = vunpack.c.h.b16 %v253
    %v1200 = vunpack.c.l.b16 %v254
    %v1201 = vunpack.c.h.b16 %v254
    %v1202 = vunpack.c.l.b16 %v255
    %v1203 = vunpack.c.h.b16 %v255
    %v1204 = vunpack.c.l.b16 %v256
    %v1205 = vunpack.c.h.b16 %v256
    %v1206 = vunpack.c.l.b16 %v257
    %v1207 = vunpack.c.h.b16 %v257
    %v1208 = vunpack.c.l.b16 %v258
    %v1209 = vunpack.c.h.b16 %v258
    %v1210 = vunpack.c.l.b16 %v259
    %v1211 = vunpack.c.h.b16 %v259
    %v1212 = vunpack.c.l.b16 %v260
    %v1213 = vunpack.c.h.b16 %v260
    %v1214 = vunpack.c.l.b16 %v261
    %v1215 = vunpack.c.h.b16 %v261
    %v1216 = vunpack.c.l.b16 %v262
    %v1217 = vunpack.c.h.b16 %v262
    %v1218 = vunpack.c.l.b16 %v263
    %v1219 = vunpack.c.h.b16 %v263
    %v1220 = vunpack.c.l.b16 %v264
    %v1221 = vunpack.c.h.b16 %v264
    %v1222 = vunpack.c.l.b16 %v265
    %v1223 = vunpack.c.h.b16 %v265
    %v1224 = vunpack.c.l.b16 %v266
    %v1225 = vunpack.c.h.b16 %v266
    %v1226 = vunpack.c.l.b16 %v267
    %v1227 = vunpack.c.h.b16 %v267
    %v1228 = vunpack.c.l.b16 %v268
    %v1229 = vunpack.c.h.b16 %v268
    %v1230 = vunpack.c.l.b16 %v269
    %v1231 = vunpack.c.h.b16 %v269
    %v1232 = vunpack.c.l.b16 %v270
    %v1233 = vunpack.c.h.b16 %v270
    %v1234 = vunpack.c.l.b16 %v271
    %v1235 = vunpack.c.h.b16 %v271
    %v1236 = vunpack.c.l.b16 %v272
    %v1237 = vunpack.c.h.b16 %v272
    %v1238 = vunpack.c.l.b16 %v273
    %v1239 = vunpack.c.h.b16 %v273
    %v1240 = vunpack.c.l.b16 %v274
    %v1241 = vunpack.c.h.b16 %v274
    %v1242 = vpack.c.b16 %v882, %v858
    %v1243 = vpack.c.b16 %v883, %v859
    %v1244 = vpack.c.b16 %v884, %v860
    %v1245 = vpack.c.b16 %v885, %v861
    %v1246 = vpack.c.b16 %v886, %v862
    %v1247 = vpack.c.b16 %v887, %v863
    %v1248 = vpack.c.b16 %v888, %v864
    %v1249 = vpack.c.b16 %v889, %v865
    %v1250 = vpack.c.b16 %v890, %v866
    %v1251 = vpack.c.b16 %v891, %v867
    %v1252 = vpack.c.b16 %v892, %v868
    %v1253 = vpack.c.b16 %v893, %v869
    %v1254 = vpack.c.b16 %v894, %v870
    %v1255 = vpack.c.b16 %v895, %v871
    %v1256 = vpack.c.b16 %v896, %v872
    %v1257 = vpack.c.b16 %v897, %v873
    %v1258 = vpack.c.b16 %v898, %v874
    %v1259 = vpack.c.b16 %v899, %v875
    %v1260 = vpack.c.b16 %v900, %v876
    %v1261 = vpack.c.b16 %v901, %v877
    %v1262 = vpack.c.b16 %v902, %v878
    %v1263 = vpack.c.b16 %v903, %v879
    %v1264 = vpack.c.b16 %v904, %v880
    %v1265 = vpack.c.b16 %v905, %v881
    %v1266 = vpack.c.b16 %v930, %v906
    %v1267 = vpack.c.b16 %v931, %v907
    %v1268 = vpack.c.b16 %v932, %v908
    %v1269 = vpack.c.b16 %v933, %v909
    %v1270 = vpack.c.b16 %v934, %v910
    %v1271 = vpack.c.b16 %v935, %v911
    %v1272 = vpack.c.b16 %v936, %v912
    %v1273 = vpack.c.b16 %v937, %v913
    %v1274 = vpack.c.b16 %v938, %v914
    %v1275 = vpack.c.b16 %v939, %v915
    %v1276 = vpack.c.b16 %v940, %v916
    %v1277 = vpack.c.b16 %v941, %v917
    %v1278 = vpack.c.b16 %v942, %v918
    %v1279 = vpack.c.b16 %v943, %v919
    %v1280 = vpack.c.b16 %v944, %v920
    %v1281 = vpack.c.b16 %v945, %v921
    %v1282 = vpack.c.b16 %v946, %v922
    %v1283 = vpack.c.b16 %v947, %v923
    %v1284 = vpack.c.b16 %v948, %v924
    %v1285 = vpack.c.b16 %v949, %v925
    %v1286 = vpack.c.b16 %v950, %v926
    %v1287 = vpack.c.b16 %v951, %v927
    %v1288 = vpack.c.b16 %v952, %v928
    %v1289 = vpack.c.b16 %v953, %v929
    %v1290 = vpack.c.b16 %v978, %v954
    %v1291 = vpack.c.b16 %v979, %v955
    %v1292 = vpack.c.b16 %v980, %v956
    %v1293 = vpack.c.b16 %v981, %v957
    %v1294 = vpack.c.b16 %v982, %v958
    %v1295 = vpack.c.b16 %v983, %v959
    %v1296 = vpack.c.b16 %v984, %v960
    %v1297 = vpack.c.b16 %v985, %v961
    %v1298 = vpack.c.b16 %v986, %v962
    %v1299 = vpack.c.b16 %v987, %v963
    %v1300 = vpack.c.b16 %v988, %v964
    %v1301 = vpack.c.b16 %v989, %v965
    %v1302 = vpack.c.b16 %v990, %v966
    %v1303 = vpack.c.b16 %v991, %v967
    %v1304 = vpack.c.b16 %v992, %v968
    %v1305 = vpack.c.b16 %v993, %v969
    %v1306 = vpack.c.b16 %v994, %v970
    %v1307 = vpack.c.b16 %v995, %v971
    %v1308 = vpack.c.b16 %v996, %v972
    %v1309 = vpack.c.b16 %v997, %v973
    %v1310 = vpack.c.b16 %v998, %v974
    %v1311 = vpack.c.b16 %v999, %v975
    %v1312 = vpack.c.b16 %v1000, %v976
    %v1313 = vpack.c.b16 %v1001, %v977
    %v1314 = vpack.c.b16 %v1026, %v1002
    %v1315 = vpack.c.b16 %v1027, %v1003
    %v1316 = vpack.c.b16 %v1028, %v1004
    %v1317 = vpack.c.b16 %v1029, %v1005
    %v1318 = vpack.c.b16 %v1030, %v1006
    %v1319 = vpack.c.b16 %v1031, %v1007
    %v1320 = vpack.c.b16 %v1032, %v1008
    %v1321 = vpack.c.b16 %v1033, %v1009
    %v1322 = vpack.c.b16 %v1034, %v1010
    %v1323 = vpack.c.b16 %v1035, %v1011
    %v1324 = vpack.c.b16 %v1036, %v1012
    %v1325 = vpack.c.b16 %v1037, %v1013
    %v1326 = vpack.c.b16 %v1038, %v1014
    %v1327 = vpack.c.b16 %v1039, %v1015
    %v1328 = vpack.c.b16 %v1040, %v1016
    %v1329 = vpack.c.b16 %v1041, %v1017
    %v1330 = vpack.c.b16 %v1042, %v1018
    %v1331 = vpack.c.b16 %v1043, %v1019
    %v1332 = vpack.c.b16 %v1044, %v1020
    %v1333 = vpack.c.b16 %v1045, %v1021
    %v1334 = vpack.c.b16 %v1046, %v1022
    %v1335 = vpack.c.b16 %v1047, %v1023
    %v1336 = vpack.c.b16 %v1048, %v1024
    %v1337 = vpack.c.b16 %v1049, %v1025
    %v1338 = vpack.c.b16 %v1074, %v1050
    %v1339 = vpack.c.b16 %v1075, %v1051
    %v1340 = vpack.c.b16 %v1076, %v1052
    %v1341 = vpack.c.b16 %v1077, %v1053
    %v1342 = vpack.c.b16 %v1078, %v1054
    %v1343 = vpack.c.b16 %v1079, %v1055
    %v1344 = vpack.c.b16 %v1080, %v1056
    %v1345 = vpack.c.b16 %v1081, %v1057
    %v1346 = vpack.c.b16 %v1082, %v1058
    %v1347 = vpack.c.b16 %v1083, %v1059
    %v1348 = vpack.c.b16 %v1084, %v1060
    %v1349 = vpack.c.b16 %v1085, %v1061
    %v1350 = vpack.c.b16 %v1086, %v1062
    %v1351 = vpack.c.b16 %v1087, %v1063
    %v1352 = vpack.c.b16 %v1088, %v1064
    %v1353 = vpack.c.b16 %v1089, %v1065
    %v1354 = vpack.c.b16 %v1090, %v1066
    %v1355 = vpack.c.b16 %v1091, %v1067
    %v1356 = vpack.c.b16 %v1092, %v1068
    %v1357 = vpack.c.b16 %v1093, %v1069
    %v1358 = vpack.c.b16 %v1094, %v1070
    %v1359 = vpack.c.b16 %v1095, %v1071
    %v1360 = vpack.c.b16 %v1096, %v1072
    %v1361 = vpack.c.b16 %v1097, %v1073
    %v1362 = vpack.c.b16 %v1122, %v1098
    %v1363 = vpack.c.b16 %v1123, %v1099
    %v1364 = vpack.c.b16 %v1124, %v1100
    %v1365 = vpack.c.b16 %v1125, %v1101
    %v1366 = vpack.c.b16 %v1126, %v1102
    %v1367 = vpack.c.b16 %v1127, %v1103
    %v1368 = vpack.c.b16 %v1128, %v1104
    %v1369 = vpack.c.b16 %v1129, %v1105
    %v1370 = vpack.c.b16 %v1130, %v1106
    %v1371 = vpack.c.b16 %v1131, %v1107
    %v1372 = vpack.c.b16 %v1132, %v1108
    %v1373 = vpack.c.b16 %v1133, %v1109
    %v1374 = vpack.c.b16 %v1134, %v1110
    %v1375 = vpack.c.b16 %v1135, %v1111
    %v1376 = vpack.c.b16 %v1136, %v1112
    %v1377 = vpack.c.b16 %v1137, %v1113
    %v1378 = vpack.c.b16 %v1138, %v1114
    %v1379 = vpack.c.b16 %v1139, %v1115
    %v1380 = vpack.c.b16 %v1140, %v1116
    %v1381 = vpack.c.b16 %v1141, %v1117
    %v1382 = vpack.c.b16 %v1142, %v1118
    %v1383 = vpack.c.b16 %v1143, %v1119
    %v1384 = vpack.c.b16 %v1144, %v1120
    %v1385 = vpack.c.b16 %v1145, %v1121
    %v1386 = vpack.c.b16 %v1170, %v1146
    %v1387 = vpack.c.b16 %v1171, %v1147
    %v1388 = vpack.c.b16 %v1172, %v1148
    %v1389 = vpack.c.b16 %v1173, %v1149
    %v1390 = vpack.c.b16 %v1174, %v1150
    %v1391 = vpack.c.b16 %v1175, %v1151
    %v1392 = vpack.c.b16 %v1176, %v1152
    %v1393 = vpack.c.b16 %v1177, %v1153
    %v1394 = vpack.c.b16 %v1178, %v1154
    %v1395 = vpack.c.b16 %v1179, %v1155
    %v1396 = vpack.c.b16 %v1180, %v1156
    %v1397 = vpack.c.b16 %v1181, %v1157
    %v1398 = vpack.c.b16 %v1182, %v1158
    %v1399 = vpack.c.b16 %v1183, %v1159
    %v1400 = vpack.c.b16 %v1184, %v1160
    %v1401 = vpack.c.b16 %v1185, %v1161
    %v1402 = vpack.c.b16 %v1186, %v1162
    %v1403 = vpack.c.b16 %v1187, %v1163
    %v1404 = vpack.c.b16 %v1188, %v1164
    %v1405 = vpack.c.b16 %v1189, %v1165
    %v1406 = vpack.c.b16 %v1190, %v1166
    %v1407 = vpack.c.b16 %v1191, %v1167
    %v1408 = vpack.c.b16 %v1192, %v1168
    %v1409 = vpack.c.b16 %v1193, %v1169
    %v1410 = vpack.c.b16 %v1218, %v1194
    %v1411 = vpack.c.b16 %v1219, %v1195
    %v1412 = vpack.c.b16 %v1220, %v1196
    %v1413 = vpack.c.b16 %v1221, %v1197
    %v1414 = vpack.c.b16 %v1222, %v1198
    %v1415 = vpack.c.b16 %v1223, %v1199
    %v1416 = vpack.c.b16 %v1224, %v1200
    %v1417 = vpack.c.b16 %v1225, %v1201
    %v1418 = vpack.c.b16 %v1226, %v1202
    %v1419 = vpack.c.b16 %v1227, %v1203
    %v1420 = vpack.c.b16 %v1228, %v1204
    %v1421 = vpack.c.b16 %v1229, %v1205
    %v1422 = vpack.c.b16 %v1230, %v1206
    %v1423 = vpack.c.b16 %v1231, %v1207
    %v1424 = vpack.c.b16 %v1232, %v1208
    %v1425 = vpack.c.b16 %v1233, %v1209
    %v1426 = vpack.c.b16 %v1234, %v1210
    %v1427 = vpack.c.b16 %v1235, %v1211
    %v1428 = vpack.c.b16 %v1236, %v1212
    %v1429 = vpack.c.b16 %v1237, %v1213
    %v1430 = vpack.c.b16 %v1238, %v1214
    %v1431 = vpack.c.b16 %v1239, %v1215
    %v1432 = vpack.c.b16 %v1240, %v1216
    %v1433 = vpack.c.b16 %v1241, %v1217
    %v2010 = vunpack.c.l.b16 %v275
    %v2011 = vunpack.c.l.b16 %v276
    %v2012 = vunpack.c.l.b16 %v277
    %v2013 = vunpack.c.l.b16 %v278
    %v2014 = vunpack.c.l.b16 %v279
    %v2015 = vunpack.c.l.b16 %v280
    %v2016 = vunpack.c.l.b16 %v281
    %v2017 = vunpack.c.l.b16 %v282
    %v2018 = vunpack.c.l.b16 %v283
    %v2019 = vunpack.c.l.b16 %v284
    %v2020 = vunpack.c.l.b16 %v285
    %v2021 = vunpack.c.l.b16 %v286
    %v2022 = vunpack.c.l.b16 %v287
    %v2023 = vunpack.c.l.b16 %v288
    %v2024 = vunpack.c.l.b16 %v289
    %v2025 = vunpack.c.l.b16 %v290
    %v2026 = vunpack.c.l.b16 %v291
    %v2027 = vunpack.c.l.b16 %v292
    %v2028 = vunpack.c.l.b16 %v293
    %v2029 = vunpack.c.l.b16 %v294
    %v2030 = vunpack.c.l.b16 %v295
    %v2031 = vunpack.c.l.b16 %v296
    %v2032 = vunpack.c.l.b16 %v297
    %v2033 = vunpack.c.l.b16 %v298
    %v2034 = vunpack.c.l.b16 %v299
    %v2035 = vunpack.c.l.b16 %v300
    %v2036 = vunpack.c.l.b16 %v301
    %v2037 = vunpack.c.l.b16 %v302
    %v2038 = vunpack.c.l.b16 %v303
    %v2039 = vunpack.c.l.b16 %v304
    %v2040 = vunpack.c.l.b16 %v305
    %v2041 = vunpack.c.l.b16 %v306
    %v2042 = vunpack.c.l.b16 %v307
    %v2043 = vunpack.c.l.b16 %v308
    %v2044 = vunpack.c.l.b16 %v309
    %v2045 = vunpack.c.l.b16 %v310
    %v2046 = vunpack.c.l.b16 %v311
    %v2047 = vunpack.c.l.b16 %v312
    %v2048 = vunpack.c.l.b16 %v313
    %v2049 = vunpack.c.l.b16 %v314
    %v2050 = vunpack.c.l.b16 %v315
    %v2051 = vunpack.c.l.b16 %v316
    %v2052 = vunpack.c.l.b16 %v317
    %v2053 = vunpack.c.l.b16 %v318
    %v2054 = vunpack.c.l.b16 %v319
    %v2055 = vunpack.c.l.b16 %v320
    %v2056 = vunpack.c.l.b16 %v321
    %v2057 = vunpack.c.l.b16 %v322
    %v2058 = vunpack.c.l.b16 %v323
    %v2059 = vunpack.c.l.b16 %v324
    %v2060 = vunpack.c.l.b16 %v325
    %v2061 = vunpack.c.l.b16 %v326
    %v2062 = vunpack.c.l.b16 %v327
    %v2063 = vunpack.c.l.b16 %v328
    %v2064 = vunpack.c.l.b16 %v329
    %v2065 = vunpack.c.l.b16 %v330
    %v2066 = vunpack.c.l.b16 %v331
    %v2067 = vunpack.c.l.b16 %v332
    %v2068 = vunpack.c.l.b16 %v333
    %v2069 = vunpack.c.l.b16 %v334
    %v2070 = vunpack.c.l.b16 %v335
    %v2071 = vunpack.c.l.b16 %v336
    %v2072 = vunpack.c.l.b16 %v337
    %v2073 = vunpack.c.l.b16 %v338
    %v2074 = vunpack.c.l.b16 %v339
    %v2075 = vunpack.c.l.b16 %v340
    %v2076 = vunpack.c.l.b16 %v341
    %v2077 = vunpack.c.l.b16 %v342
    %v2078 = vunpack.c.l.b16 %v343
    %v2079 = vunpack.c.l.b16 %v344
    %v2080 = vunpack.c.l.b16 %v345
    %v2081 = vunpack.c.l.b16 %v346
    %v2082 = vunpack.c.l.b16 %v347
    %v2083 = vunpack.c.l.b16 %v348
    %v2084 = vunpack.c.l.b16 %v349
    %v2085 = vunpack.c.l.b16 %v350
    %v2086 = vunpack.c.l.b16 %v351
    %v2087 = vunpack.c.l.b16 %v352
    %v2088 = vunpack.c.l.b16 %v353
    %v2089 = vunpack.c.l.b16 %v354
    %v2090 = vunpack.c.l.b16 %v355
    %v2091 = vunpack.c.l.b16 %v356
    %v2092 = vunpack.c.l.b16 %v357
    %v2093 = vunpack.c.l.b16 %v358
    %v2094 = vunpack.c.l.b16 %v359
    %v2095 = vunpack.c.l.b16 %v360
    %v2096 = vunpack.c.l.b16 %v361
    %v2097 = vunpack.c.l.b16 %v362
    %v2098 = vunpack.c.l.b16 %v363
    %v2099 = vunpack.c.l.b16 %v364
    %v2100 = vunpack.c.l.b16 %v365
    %v2101 = vunpack.c.l.b16 %v366
    %v2102 = vunpack.c.l.b16 %v367
    %v2103 = vunpack.c.l.b16 %v368
    %v2104 = vunpack.c.l.b16 %v369
    %v2105 = vunpack.c.l.b16 %v370
    %v2106 = vunpack.c.l.b16 %v371
    %v2107 = vunpack.c.l.b16 %v372
    %v2108 = vunpack.c.l.b16 %v373
    %v2109 = vunpack.c.l.b16 %v374
    %v2110 = vunpack.c.l.b16 %v375
    %v2111 = vunpack.c.l.b16 %v376
    %v2112 = vunpack.c.l.b16 %v377
    %v2113 = vunpack.c.l.b16 %v378
    %v2114 = vunpack.c.l.b16 %v379
    %v2115 = vunpack.c.l.b16 %v380
    %v2116 = vunpack.c.l.b16 %v381
    %v2117 = vunpack.c.l.b16 %v382
    %v2118 = vunpack.c.l.b16 %v383
    %v2119 = vunpack.c.l.b16 %v384
    %v2120 = vunpack.c.l.b16 %v385
    %v2121 = vunpack.c.l.b16 %v386
    %v2122 = vunpack.c.l.b16 %v387
    %v2123 = vunpack.c.l.b16 %v388
    %v2124 = vunpack.c.l.b16 %v389
    %v2125 = vunpack.c.l.b16 %v390
    %v2126 = vunpack.c.l.b16 %v391
    %v2127 = vunpack.c.l.b16 %v392
    %v2128 = vunpack.c.l.b16 %v393
    %v2129 = vunpack.c.l.b16 %v394
    %v2130 = vunpack.c.l.b16 %v395
    %v2131 = vunpack.c.l.b16 %v396
    %v2132 = vunpack.c.l.b16 %v397
    %v2133 = vunpack.c.l.b16 %v398
    %v2134 = vunpack.c.l.b16 %v399
    %v2135 = vunpack.c.l.b16 %v400
    %v2136 = vunpack.c.l.b16 %v401
    %v2137 = vunpack.c.l.b16 %v402
    %v2138 = vunpack.c.l.b16 %v403
    %v2139 = vunpack.c.l.b16 %v404
    %v2140 = vunpack.c.l.b16 %v405
    %v2141 = vunpack.c.l.b16 %v406
    %v2142 = vunpack.c.l.b16 %v407
    %v2143 = vunpack.c.l.b16 %v408
    %v2144 = vunpack.c.l.b16 %v409
    %v2145 = vunpack.c.l.b16 %v410
    %v2146 = vunpack.c.l.b16 %v411
    %v2147 = vunpack.c.l.b16 %v412
    %v2148 = vunpack.c.l.b16 %v413
    %v2149 = vunpack.c.l.b16 %v414
    %v2150 = vunpack.c.l.b16 %v415
    %v2151 = vunpack.c.l.b16 %v416
    %v2152 = vunpack.c.l.b16 %v417
    %v2153 = vunpack.c.l.b16 %v418
    %v2154 = vunpack.c.l.b16 %v419
    %v2155 = vunpack.c.l.b16 %v420
    %v2156 = vunpack.c.l.b16 %v421
    %v2157 = vunpack.c.l.b16 %v422
    %v2158 = vunpack.c.l.b16 %v423
    %v2159 = vunpack.c.l.b16 %v424
    %v2160 = vunpack.c.l.b16 %v425
    %v2161 = vunpack.c.l.b16 %v426
    %v2162 = vunpack.c.l.b16 %v427
    %v2163 = vunpack.c.l.b16 %v428
    %v2164 = vunpack.c.l.b16 %v429
    %v2165 = vunpack.c.l.b16 %v430
    %v2166 = vunpack.c.l.b16 %v431
    %v2167 = vunpack.c.l.b16 %v432
    %v2168 = vunpack.c.l.b16 %v433
    %v2169 = vunpack.c.l.b16 %v434
    %v2170 = vunpack.c.l.b16 %v435
    %v2171 = vunpack.c.l.b16 %v436
    %v2172 = vunpack.c.l.b16 %v437
    %v2173 = vunpack.c.l.b16 %v438
    %v2174 = vunpack.c.l.b16 %v439
    %v2175 = vunpack.c.l.b16 %v440
    %v2176 = vunpack.c.l.b16 %v441
    %v2177 = vunpack.c.l.b16 %v442
    %v2178 = vunpack.c.l.b16 %v443
    %v2179 = vunpack.c.l.b16 %v444
    %v2180 = vunpack.c.l.b16 %v445
    %v2181 = vunpack.c.l.b16 %v446
    %v2182 = vunpack.c.l.b16 %v447
    %v2183 = vunpack.c.l.b16 %v448
    %v2184 = vunpack.c.l.b16 %v449
    %v2185 = vunpack.c.l.b16 %v450
    %v2186 = vunpack.c.l.b16 %v451
    %v2187 = vunpack.c.l.b16 %v452
    %v2188 = vunpack.c.l.b16 %v453
    %v2189 = vunpack.c.l.b16 %v454
    %v2190 = vunpack.c.l.b16 %v455
    %v2191 = vunpack.c.l.b16 %v456
    %v2192 = vunpack.c.l.b16 %v457
    %v2193 = vunpack.c.l.b16 %v458
    %v2194 = vunpack.c.l.b16 %v459
    %v2195 = vunpack.c.l.b16 %v460
    %v2196 = vunpack.c.l.b16 %v461
    %v2197 = vunpack.c.l.b16 %v462
    %v2198 = vunpack.c.l.b16 %v463
    %v2199 = vunpack.c.l.b16 %v464
    %v2200 = vunpack.c.l.b16 %v465
    %v2201 = vunpack.c.l.b16 %v466
    %v2202 = vunpack.c.l.b16 %v467
    %v2203 = vunpack.c.l.b16 %v468
    %v2204 = vunpack.c.l.b16 %v469
    %v2205 = vunpack.c.l.b16 %v470
    %v2206 = vunpack.c.l.b16 %v471
    %v2207 = vunpack.c.l.b16 %v472
    %v2208 = vunpack.c.l.b16 %v473
    %v2209 = vunpack.c.l.b16 %v474
    %v2210 = vunpack.c.l.b16 %v475
    %v2211 = vunpack.c.l.b16 %v476
    %v2212 = vunpack.c.l.b16 %v477
    %v2213 = vunpack.c.l.b16 %v478
    %v2214 = vunpack.c.l.b16 %v479
    %v2215 = vunpack.c.l.b16 %v480
    %v2216 = vunpack.c.l.b16 %v481
    %v2217 = vunpack.c.l.b16 %v482
    %v2218 = vunpack.c.l.b16 %v483
    %v2219 = vunpack.c.l.b16 %v484
    %v2220 = vunpack.c.l.b16 %v485
    %v2221 = vunpack.c.l.b16 %v486
    %v2222 = vunpack.c.l.b16 %v487
    %v2223 = vunpack.c.l.b16 %v488
    %v2224 = vunpack.c.l.b16 %v489
    %v2225 = vunpack.c.l.b16 %v490
    %v2226 = vunpack.c.l.b16 %v491
    %v2227 = vunpack.c.l.b16 %v492
    %v2228 = vunpack.c.l.b16 %v493
    %v2229 = vunpack.c.l.b16 %v494
    %v2230 = vunpack.c.l.b16 %v495
    %v2231 = vunpack.c.l.b16 %v496
    %v2232 = vunpack.c.l.b16 %v497
    %v2233 = vunpack.c.l.b16 %v498
    %v2234 = vunpack.c.l.b16 %v499
    %v2235 = vunpack.c.l.b16 %v500
    %v2236 = vunpack.c.l.b16 %v501
    %v2237 = vunpack.c.l.b16 %v502
    %v2238 = vunpack.c.l.b16 %v503
    %v2239 = vunpack.c.l.b16 %v504
    %v2240 = vunpack.c.l.b16 %v505
    %v2241 = vunpack.c.l.b16 %v506
    %v2242 = vunpack.c.l.b16 %v507
    %v2243 = vunpack.c.l.b16 %v508
    %v2244 = vunpack.c.l.b16 %v509
    %v2245 = vunpack.c.l.b16 %v510
    %v2246 = vunpack.c.l.b16 %v511
    %v2247 = vunpack.c.l.b16 %v512
    %v2248 = vunpack.c.l.b16 %v513
    %v2249 = vunpack.c.l.b16 %v514
    %v2250 = vunpack.c.l.b16 %v515
    %v2251 = vunpack.c.l.b16 %v516
    %v2252 = vunpack.c.l.b16 %v517
    %v2253 = vunpack.c.l.b16 %v518
    %v2254 = vunpack.c.l.b16 %v519
    %v2255 = vunpack.c.l.b16 %v520
    %v2256 = vunpack.c.l.b16 %v521
    %v2257 = vunpack.c.l.b16 %v522
    %v2258 = vunpack.c.l.b16 %v523
    %v2259 = vunpack.c.l.b16 %v524
    %v2260 = vunpack.c.l.b16 %v525
    %v2261 = vunpack.c.l.b16 %v526
    %v2262 = vunpack.c.l.b16 %v527
    %v2263 = vunpack.c.l.b16 %v528
    %v2264 = vunpack.c.l.b16 %v529
    %v2265 = vunpack.c.l.b16 %v530
    %v2266 = vunpack.c.l.b16 %v531
    %v2267 = vunpack.c.l.b16 %v532
    %v2268 = vunpack.c.l.b16 %v533
    %v2269 = vunpack.c.l.b16 %v534
    %v2270 = vunpack.c.l.b16 %v535
    %v2271 = vunpack.c.l.b16 %v536
    %v2272 = vunpack.c.l.b16 %v537
    %v2273 = vunpack.c.l.b16 %v538
    %v2274 = vunpack.c.l.b16 %v539
    %v2275 = vunpack.c.l.b16 %v540
    %v2276 = vunpack.c.l.b16 %v541
    %v2277 = vunpack.c.l.b16 %v542
    %v2278 = vunpack.c.l.b16 %v543
    %v2279 = vunpack.c.l.b16 %v544
    %v2280 = vunpack.c.l.b16 %v545
    %v2281 = vunpack.c.l.b16 %v546
    %v2282 = vunpack.c.l.b16 %v547
    %v2283 = vunpack.c.l.b16 %v548
    %v2284 = vunpack.c.l.b16 %v549
    %v2285 = vunpack.c.l.b16 %v550
    %v2286 = vunpack.c.l.b16 %v551
    %v2287 = vunpack.c.l.b16 %v552
    %v2288 = vunpack.c.l.b16 %v553
    %v2289 = vunpack.c.l.b16 %v554
    %v2290 = vunpack.c.l.b16 %v555
    %v2291 = vunpack.c.l.b16 %v556
    %v2292 = vunpack.c.l.b16 %v557
    %v2293 = vunpack.c.l.b16 %v558
    %v2294 = vunpack.c.l.b16 %v559
    %v2295 = vunpack.c.l.b16 %v560
    %v2296 = vunpack.c.l.b16 %v561
    %v2297 = vunpack.c.l.b16 %v562
    %v2298 = vunpack.c.l.b16 %v563
    %v2299 = vunpack.c.l.b16 %v564
    %v2300 = vunpack.c.l.b16 %v565
    %v2301 = vunpack.c.l.b16 %v566
    %v2302 = vunpack.c.l.b16 %v567
    %v2303 = vunpack.c.l.b16 %v568
    %v2304 = vunpack.c.l.b16 %v569
    %v2305 = vunpack.c.l.b16 %v570
    %v2306 = vunpack.c.l.b16 %v571
    %v2307 = vunpack.c.l.b16 %v572
    %v2308 = vunpack.c.l.b16 %v573
    %v2309 = vunpack.c.l.b16 %v574
    %v2310 = vunpack.c.l.b16 %v575
    %v2311 = vunpack.c.l.b16 %v576
    %v2312 = vunpack.c.l.b16 %v577
    %v2313 = vunpack.c.l.b16 %v578
    %v2314 = vunpack.c.l.b16 %v579
    %v2315 = vunpack.c.l.b16 %v580
    %v2316 = vunpack.c.l.b16 %v581
    %v2317 = vunpack.c.l.b16 %v582
    %v2318 = vunpack.c.l.b16 %v583
    %v2319 = vunpack.c.l.b16 %v584
    %v2320 = vunpack.c.l.b16 %v585
    %v2321 = vunpack.c.l.b16 %v586
    %v2322 = vunpack.c.l.b16 %v587
    %v2323 = vunpack.c.l.b16 %v588
    %v2324 = vunpack.c.l.b16 %v589
    %v2325 = vunpack.c.l.b16 %v590
    %v2326 = vunpack.c.l.b16 %v591
    %v2327 = vunpack.c.l.b16 %v592
    %v2328 = vunpack.c.l.b16 %v593
    %v2329 = vunpack.c.l.b16 %v594
    %v2330 = vunpack.c.l.b16 %v595
    %v2331 = vunpack.c.l.b16 %v596
    %v2332 = vunpack.c.l.b16 %v597
    %v2333 = vunpack.c.l.b16 %v598
    %v2334 = vunpack.c.l.b16 %v599
    %v2335 = vunpack.c.l.b16 %v600
    %v2336 = vunpack.c.l.b16 %v601
    %v2337 = vunpack.c.l.b16 %v602
    %v2338 = vunpack.c.l.b16 %v603
    %v2339 = vunpack.c.l.b16 %v604
    %v2340 = vunpack.c.l.b16 %v605
    %v2341 = vunpack.c.l.b16 %v606
    %v2342 = vunpack.c.l.b16 %v607
    %v2343 = vunpack.c.l.b16 %v608
    %v2344 = vunpack.c.l.b16 %v609
    %v2345 = vunpack.c.l.b16 %v610
    %v2346 = vunpack.c.l.b16 %v611
    %v2347 = vunpack.c.l.b16 %v612
    %v2348 = vunpack.c.l.b16 %v613
    %v2349 = vunpack.c.l.b16 %v614
    %v2350 = vunpack.c.l.b16 %v615
    %v2351 = vunpack.c.l.b16 %v616
    %v2352 = vunpack.c.l.b16 %v617
    %v2353 = vunpack.c.l.b16 %v618
    %v2354 = vunpack.c.l.b16 %v619
    %v2355 = vunpack.c.l.b16 %v620
    %v2356 = vunpack.c.l.b16 %v621
    %v2357 = vunpack.c.l.b16 %v622
    %v2358 = vunpack.c.l.b16 %v623
    %v2359 = vunpack.c.l.b16 %v624
    %v2360 = vunpack.c.l.b16 %v625
    %v2361 = vunpack.c.l.b16 %v626
    %v2362 = vunpack.c.l.b16 %v627
    %v2363 = vunpack.c.l.b16 %v628
    %v2364 = vunpack.c.l.b16 %v629
    %v2365 = vunpack.c.l.b16 %v630
    %v2366 = vunpack.c.l.b16 %v631
    %v2367 = vunpack.c.l.b16 %v632
    %v2368 = vunpack.c.l.b16 %v633
    %v2369 = vunpack.c.l.b16 %v634
    %v2370 = vunpack.c.l.b16 %v635
    %v2371 = vunpack.c.l.b16 %v636
    %v2372 = vunpack.c.l.b16 %v637
    %v2373 = vunpack.c.l.b16 %v638
    %v2374 = vunpack.c.l.b16 %v639
    %v2375 = vunpack.c.l.b16 %v640
    %v2376 = vunpack.c.l.b16 %v641
    %v2377 = vunpack.c.l.b16 %v642
    %v2378 = vunpack.c.l.b16 %v643
    %v2379 = vunpack.c.l.b16 %v644
    %v2380 = vunpack.c.l.b16 %v645
    %v2381 = vunpack.c.l.b16 %v646
    %v2382 = vunpack.c.l.b16 %v647
    %v2383 = vunpack.c.l.b16 %v648
    %v2384 = vunpack.c.l.b16 %v649
    %v2385 = vunpack.c.l.b16 %v650
    %v2386 = vunpack.c.l.b16 %v651
    %v2387 = vunpack.c.l.b16 %v652
    %v2388 = vunpack.c.l.b16 %v653
    %v2389 = vunpack.c.l.b16 %v654
    %v2390 = vunpack.c.l.b16 %v655
    %v2391 = vunpack.c.l.b16 %v656
    %v2392 = vunpack.c.l.b16 %v657
    %v2393 = vunpack.c.l.b16 %v658
    %v2394 = vpack.c.b16 %v2011, %v2010
    %v2395 = vpack.c.b16 %v2013, %v2012
    %v2396 = vpack.c.b16 %v2015, %v2014
    %v2397 = vpack.c.b16 %v2017, %v2016
    %v2398 = vpack.c.b16 %v2019, %v2018
    %v2399 = vpack.c.b16 %v2021, %v2020
    %v2400 = vpack.c.b16 %v2023, %v2022
    %v2401 = vpack.c.b16 %v2025, %v2024
    %v2402 = vpack.c.b16 %v2027, %v2026
    %v2403 = vpack.c.b16 %v2029, %v2028
    %v2404 = vpack.c.b16 %v2031, %v2030
    %v2405 = vpack.c.b16 %v2033, %v2032
    %v2406 = vpack.c.b16 %v2035, %v2034
    %v2407 = vpack.c.b16 %v2037, %v2036
    %v2408 = vpack.c.b16 %v2039, %v2038
    %v2409 = vpack.c.b16 %v2041, %v2040
    %v2410 = vpack.c.b16 %v2043, %v2042
    %v2411 = vpack.c.b16 %v2045, %v2044
    %v2412 = vpack.c.b16 %v2047, %v2046
    %v2413 = vpack.c.b16 %v2049, %v2048
    %v2414 = vpack.c.b16 %v2051, %v2050
    %v2415 = vpack.c.b16 %v2053, %v2052
    %v2416 = vpack.c.b16 %v2055, %v2054
    %v2417 = vpack.c.b16 %v2057, %v2056
    %v2418 = vpack.c.b16 %v2059, %v2058
    %v2419 = vpack.c.b16 %v2061, %v2060
    %v2420 = vpack.c.b16 %v2063, %v2062
    %v2421 = vpack.c.b16 %v2065, %v2064
    %v2422 = vpack.c.b16 %v2067, %v2066
    %v2423 = vpack.c.b16 %v2069, %v2068
    %v2424 = vpack.c.b16 %v2071, %v2070
    %v2425 = vpack.c.b16 %v2073, %v2072
    %v2426 = vpack.c.b16 %v2075, %v2074
    %v2427 = vpack.c.b16 %v2077, %v2076
    %v2428 = vpack.c.b16 %v2079, %v2078
    %v2429 = vpack.c.b16 %v2081, %v2080
    %v2430 = vpack.c.b16 %v2083, %v2082
    %v2431 = vpack.c.b16 %v2085, %v2084
    %v2432 = vpack.c.b16 %v2087, %v2086
    %v2433 = vpack.c.b16 %v2089, %v2088
    %v2434 = vpack.c.b16 %v2091, %v2090
    %v2435 = vpack.c.b16 %v2093, %v2092
    %v2436 = vpack.c.b16 %v2095, %v2094
    %v2437 = vpack.c.b16 %v2097, %v2096
    %v2438 = vpack.c.b16 %v2099, %v2098
    %v2439 = vpack.c.b16 %v2101, %v2100
    %v2440 = vpack.c.b16 %v2103, %v2102
    %v2441 = vpack.c.b16 %v2105, %v2104
    %v2442 = vpack.c.b16 %v2107, %v2106
    %v2443 = vpack.c.b16 %v2109, %v2108
    %v2444 = vpack.c.b16 %v2111, %v2110
    %v2445 = vpack.c.b16 %v2113, %v2112
    %v2446 = vpack.c.b16 %v2115, %v2114
    %v2447 = vpack.c.b16 %v2117, %v2116
    %v2448 = vpack.c.b16 %v2119, %v2118
    %v2449 = vpack.c.b16 %v2121, %v2120
    %v2450 = vpack.c.b16 %v2123, %v2122
    %v2451 = vpack.c.b16 %v2125, %v2124
    %v2452 = vpack.c.b16 %v2127, %v2126
    %v2453 = vpack.c.b16 %v2129, %v2128
    %v2454 = vpack.c.b16 %v2131, %v2130
    %v2455 = vpack.c.b16 %v2133, %v2132
    %v2456 = vpack.c.b16 %v2135, %v2134
    %v2457 = vpack.c.b16 %v2137, %v2136
    %v2458 = vpack.c.b16 %v2139, %v2138
    %v2459 = vpack.c.b16 %v2141, %v2140
    %v2460 = vpack.c.b16 %v2143, %v2142
    %v2461 = vpack.c.b16 %v2145, %v2144
    %v2462 = vpack.c.b16 %v2147, %v2146
    %v2463 = vpack.c.b16 %v2149, %v2148
    %v2464 = vpack.c.b16 %v2151, %v2150
    %v2465 = vpack.c.b16 %v2153, %v2152
    %v2466 = vpack.c.b16 %v2155, %v2154
    %v2467 = vpack.c.b16 %v2157, %v2156
    %v2468 = vpack.c.b16 %v2159, %v2158
    %v2469 = vpack.c.b16 %v2161, %v2160
    %v2470 = vpack.c.b16 %v2163, %v2162
    %v2471 = vpack.c.b16 %v2165, %v2164
    %v2472 = vpack.c.b16 %v2167, %v2166
    %v2473 = vpack.c.b16 %v2169, %v2168
    %v2474 = vpack.c.b16 %v2171, %v2170
    %v2475 = vpack.c.b16 %v2173, %v2172
    %v2476 = vpack.c.b16 %v2175, %v2174
    %v2477 = vpack.c.b16 %v2177, %v2176
    %v2478 = vpack.c.b16 %v2179, %v2178
    %v2479 = vpack.c.b16 %v2181, %v2180
    %v2480 = vpack.c.b16 %v2183, %v2182
    %v2481 = vpack.c.b16 %v2185, %v2184
    %v2482 = vpack.c.b16 %v2187, %v2186
    %v2483 = vpack.c.b16 %v2189, %v2188
    %v2484 = vpack.c.b16 %v2191, %v2190
    %v2485 = vpack.c.b16 %v2193, %v2192
    %v2486 = vpack.c.b16 %v2195, %v2194
    %v2487 = vpack.c.b16 %v2197, %v2196
    %v2488 = vpack.c.b16 %v2199, %v2198
    %v2489 = vpack.c.b16 %v2201, %v2200
    %v2490 = vpack.c.b16 %v2203, %v2202
    %v2491 = vpack.c.b16 %v2205, %v2204
    %v2492 = vpack.c.b16 %v2207, %v2206
    %v2493 = vpack.c.b16 %v2209, %v2208
    %v2494 = vpack.c.b16 %v2211, %v2210
    %v2495 = vpack.c.b16 %v2213, %v2212
    %v2496 = vpack.c.b16 %v2215, %v2214
    %v2497 = vpack.c.b16 %v2217, %v2216
    %v2498 = vpack.c.b16 %v2219, %v2218
    %v2499 = vpack.c.b16 %v2221, %v2220
    %v2500 = vpack.c.b16 %v2223, %v2222
    %v2501 = vpack.c.b16 %v2225, %v2224
    %v2502 = vpack.c.b16 %v2227, %v2226
    %v2503 = vpack.c.b16 %v2229, %v2228
    %v2504 = vpack.c.b16 %v2231, %v2230
    %v2505 = vpack.c.b16 %v2233, %v2232
    %v2506 = vpack.c.b16 %v2235, %v2234
    %v2507 = vpack.c.b16 %v2237, %v2236
    %v2508 = vpack.c.b16 %v2239, %v2238
    %v2509 = vpack.c.b16 %v2241, %v2240
    %v2510 = vpack.c.b16 %v2243, %v2242
    %v2511 = vpack.c.b16 %v2245, %v2244
    %v2512 = vpack.c.b16 %v2247, %v2246
    %v2513 = vpack.c.b16 %v2249, %v2248
    %v2514 = vpack.c.b16 %v2251, %v2250
    %v2515 = vpack.c.b16 %v2253, %v2252
    %v2516 = vpack.c.b16 %v2255, %v2254
    %v2517 = vpack.c.b16 %v2257, %v2256
    %v2518 = vpack.c.b16 %v2259, %v2258
    %v2519 = vpack.c.b16 %v2261, %v2260
    %v2520 = vpack.c.b16 %v2263, %v2262
    %v2521 = vpack.c.b16 %v2265, %v2264
    %v2522 = vpack.c.b16 %v2267, %v2266
    %v2523 = vpack.c.b16 %v2269, %v2268
    %v2524 = vpack.c.b16 %v2271, %v2270
    %v2525 = vpack.c.b16 %v2273, %v2272
    %v2526 = vpack.c.b16 %v2275, %v2274
    %v2527 = vpack.c.b16 %v2277, %v2276
    %v2528 = vpack.c.b16 %v2279, %v2278
    %v2529 = vpack.c.b16 %v2281, %v2280
    %v2530 = vpack.c.b16 %v2283, %v2282
    %v2531 = vpack.c.b16 %v2285, %v2284
    %v2532 = vpack.c.b16 %v2287, %v2286
    %v2533 = vpack.c.b16 %v2289, %v2288
    %v2534 = vpack.c.b16 %v2291, %v2290
    %v2535 = vpack.c.b16 %v2293, %v2292
    %v2536 = vpack.c.b16 %v2295, %v2294
    %v2537 = vpack.c.b16 %v2297, %v2296
    %v2538 = vpack.c.b16 %v2299, %v2298
    %v2539 = vpack.c.b16 %v2301, %v2300
    %v2540 = vpack.c.b16 %v2303, %v2302
    %v2541 = vpack.c.b16 %v2305, %v2304
    %v2542 = vpack.c.b16 %v2307, %v2306
    %v2543 = vpack.c.b16 %v2309, %v2308
    %v2544 = vpack.c.b16 %v2311, %v2310
    %v2545 = vpack.c.b16 %v2313, %v2312
    %v2546 = vpack.c.b16 %v2315, %v2314
    %v2547 = vpack.c.b16 %v2317, %v2316
    %v2548 = vpack.c.b16 %v2319, %v2318
    %v2549 = vpack.c.b16 %v2321, %v2320
    %v2550 = vpack.c.b16 %v2323, %v2322
    %v2551 = vpack.c.b16 %v2325, %v2324
    %v2552 = vpack.c.b16 %v2327, %v2326
    %v2553 = vpack.c.b16 %v2329, %v2328
    %v2554 = vpack.c.b16 %v2331, %v2330
    %v2555 = vpack.c.b16 %v2333, %v2332
    %v2556 = vpack.c.b16 %v2335, %v2334
    %v2557 = vpack.c.b16 %v2337, %v2336
    %v2558 = vpack.c.b16 %v2339, %v2338
    %v2559 = vpack.c.b16 %v2341, %v2340
    %v2560 = vpack.c.b16 %v2343, %v2342
    %v2561 = vpack.c.b16 %v2345, %v2344
    %v2562 = vpack.c.b16 %v2347, %v2346
    %v2563 = vpack.c.b16 %v2349, %v2348
    %v2564 = vpack.c.b16 %v2351, %v2350
    %v2565 = vpack.c.b16 %v2353, %v2352
    %v2566 = vpack.c.b16 %v2355, %v2354
    %v2567 = vpack.c.b16 %v2357, %v2356
    %v2568 = vpack.c.b16 %v2359, %v2358
    %v2569 = vpack.c.b16 %v2361, %v2360
    %v2570 = vpack.c.b16 %v2363, %v2362
    %v2571 = vpack.c.b16 %v2365, %v2364
    %v2572 = vpack.c.b16 %v2367, %v2366
    %v2573 = vpack.c.b16 %v2369, %v2368
    %v2574 = vpack.c.b16 %v2371, %v2370
    %v2575 = vpack.c.b16 %v2373, %v2372
    %v2576 = vpack.c.b16 %v2375, %v2374
    %v2577 = vpack.c.b16 %v2377, %v2376
    %v2578 = vpack.c.b16 %v2379, %v2378
    %v2579 = vpack.c.b16 %v2381, %v2380
    %v2580 = vpack.c.b16 %v2383, %v2382
    %v2581 = vpack.c.b16 %v2385, %v2384
    %v2582 = vpack.c.b16 %v2387, %v2386
    %v2583 = vpack.c.b16 %v2389, %v2388
    %v2584 = vpack.c.b16 %v2391, %v2390
    %v2585 = vpack.c.b16 %v2393, %v2392
    %2778 = vmatprep.subr.bf16.mxu0 0
    %2779 = vmatpush1.bf16.msra.mxu0 %v2394
    %2780 = vmatprep.subr.bf16.mxu0 0
    %2781 = vmatpush1.bf16.msra.mxu0 %v2395
    %2782 = vmatprep.subr.bf16.mxu0 0
    %2783 = vmatpush1.bf16.msra.mxu0 %v2396
    %2784 = vmatprep.subr.bf16.mxu0 0
    %2785 = vmatpush1.bf16.msra.mxu0 %v2397
    %2786 = vmatprep.subr.bf16.mxu0 0
    %2787 = vmatpush1.bf16.msra.mxu0 %v2398
    %2788 = vmatprep.subr.bf16.mxu0 0
    %2789 = vmatpush1.bf16.msra.mxu0 %v2399
    %2790 = vmatprep.subr.bf16.mxu0 0
    %2791 = vmatpush1.bf16.msra.mxu0 %v2400
    %2792 = vmatprep.subr.bf16.mxu0 0
    %2793 = vmatpush1.bf16.msra.mxu0 %v2401
    %2794 = vmatprep.subr.bf16.mxu0 0
    %2795 = vmatpush1.bf16.msra.mxu0 %v2402
    %2796 = vmatprep.subr.bf16.mxu0 0
    %2797 = vmatpush1.bf16.msra.mxu0 %v2403
    %2798 = vmatprep.subr.bf16.mxu0 0
    %2799 = vmatpush1.bf16.msra.mxu0 %v2404
    %2800 = vmatprep.subr.bf16.mxu0 0
    %2801 = vmatpush1.bf16.msra.mxu0 %v2405
    %2802 = vmatprep.subr.bf16.mxu0 0
    %2803 = vmatpush1.bf16.msra.mxu0 %v2406
    %2804 = vmatprep.subr.bf16.mxu0 0
    %2805 = vmatpush1.bf16.msra.mxu0 %v2407
    %2806 = vmatprep.subr.bf16.mxu0 0
    %2807 = vmatpush1.bf16.msra.mxu0 %v2408
    %2808 = vmatprep.subr.bf16.mxu0 0
    %2809 = vmatpush1.bf16.msra.mxu0 %v2409
    %2810 = vmatprep.mubr.bf16.mxu0 %v1243
    %2811 = vmatmul.mubr.bf16.gmra.mrb[0].mxu0 %v1242
    %v2812 = vpop.f32.mrb[0].mxu0
    %v2813 = vadd.f32 %v664, %v2812
    %v2814 = vpop.f32.mrb[0].mxu0
    %v2815 = vpop.f32.mrb[0].mxu0
    %v2816 = vadd.f32 %v664, %v2815
    %v2817 = vpop.f32.mrb[0].mxu0
    %2818 = vmatprep.mubr.bf16.mxu0 %v1267
    %2819 = vmatmul.mubr.bf16.gmra.mrb[0].mxu0 %v1266
    %v2820 = vpop.f32.mrb[0].mxu0
    %v2821 = vadd.f32 %v664, %v2820
    %v2822 = vpop.f32.mrb[0].mxu0
    %v2823 = vpop.f32.mrb[0].mxu0
    %v2824 = vadd.f32 %v664, %v2823
    %v2825 = vpop.f32.mrb[0].mxu0
    %2826 = vmatprep.mubr.bf16.mxu0 %v1291
    %2827 = vmatmul.mubr.bf16.gmra.mrb[0].mxu0 %v1290
    %v2828 = vpop.f32.mrb[0].mxu0
    %v2829 = vadd.f32 %v664, %v2828
    %v2830 = vpop.f32.mrb[0].mxu0
    %v2831 = vpop.f32.mrb[0].mxu0
    %v2832 = vadd.f32 %v664, %v2831
    %v2833 = vpop.f32.mrb[0].mxu0
    %2834 = vmatprep.mubr.bf16.mxu0 %v1315
    %2835 = vmatmul.mubr.bf16.gmra.mrb[0].mxu0 %v1314
    %v2836 = vpop.f32.mrb[0].mxu0
    %v2837 = vadd.f32 %v664, %v2836
    %v2838 = vpop.f32.mrb[0].mxu0
    %v2839 = vpop.f32.mrb[0].mxu0
    %v2840 = vadd.f32 %v664, %v2839
    %v2841 = vpop.f32.mrb[0].mxu0
    %2842 = vmatprep.mubr.bf16.mxu0 %v1339
    %2843 = vmatmul.mubr.bf16.gmra.mrb[0].mxu0 %v1338
    %v2844 = vpop.f32.mrb[0].mxu0
    %v2845 = vadd.f32 %v664, %v2844
    %v2846 = vpop.f32.mrb[0].mxu0
    %v2847 = vpop.f32.mrb[0].mxu0
    %v2848 = vadd.f32 %v664, %v2847
    %v2849 = vpop.f32.mrb[0].mxu0
    %2850 = vmatprep.mubr.bf16.mxu0 %v1363
    %2851 = vmatmul.mubr.bf16.gmra.mrb[0].mxu0 %v1362
    %v2852 = vpop.f32.mrb[0].mxu0
    %v2853 = vadd.f32 %v664, %v2852
    %v2854 = vpop.f32.mrb[0].mxu0
    %v2855 = vpop.f32.mrb[0].mxu0
    %v2856 = vadd.f32 %v664, %v2855
    %v2857 = vpop.f32.mrb[0].mxu0
    %2858 = vmatprep.mubr.bf16.mxu0 %v1387
    %2859 = vmatmul.mubr.bf16.gmra.mrb[0].mxu0 %v1386
    %v2860 = vpop.f32.mrb[0].mxu0
    %v2861 = vadd.f32 %v664, %v2860
    %v2862 = vpop.f32.mrb[0].mxu0
    %v2863 = vpop.f32.mrb[0].mxu0
    %v2864 = vadd.f32 %v664, %v2863
    %v2865 = vpop.f32.mrb[0].mxu0
    %2866 = vmatprep.mubr.bf16.mxu0 %v1411
    %2867 = vmatmul.mubr.bf16.gmra.mrb[0].mxu0 %v1410
    %v2868 = vpop.f32.mrb[0].mxu0
    %v2869 = vadd.f32 %v664, %v2868
    %v2870 = vpop.f32.mrb[0].mxu0
    %v2871 = vpop.f32.mrb[0].mxu0
    %v2872 = vadd.f32 %v664, %v2871
    %v2873 = vpop.f32.mrb[0].mxu0
    %2874 = vdwg.mxu0
    %2875 = vmatprep.subr.bf16.mxu0 0
    %2876 = vmatpush1.bf16.msra.mxu0 %v2410
    %2877 = vmatprep.subr.bf16.mxu0 0
    %2878 = vmatpush1.bf16.msra.mxu0 %v2411
    %2879 = vmatprep.subr.bf16.mxu0 0
    %2880 = vmatpush1.bf16.msra.mxu0 %v2412
    %2881 = vmatprep.subr.bf16.mxu0 0
    %2882 = vmatpush1.bf16.msra.mxu0 %v2413
    %2883 = vmatprep.subr.bf16.mxu0 0
    %2884 = vmatpush1.bf16.msra.mxu0 %v2414
    %2885 = vmatprep.subr.bf16.mxu0 0
    %2886 = vmatpush1.bf16.msra.mxu0 %v2415
    %2887 = vmatprep.subr.bf16.mxu0 0
    %2888 = vmatpush1.bf16.msra.mxu0 %v2416
    %2889 = vmatprep.subr.bf16.mxu0 0
    %2890 = vmatpush1.bf16.msra.mxu0 %v2417
    %2891 = vmatprep.subr.bf16.mxu0 0
    %2892 = vmatpush1.bf16.msra.mxu0 %v2418
    %2893 = vmatprep.subr.bf16.mxu0 0
    %2894 = vmatpush1.bf16.msra.mxu0 %v2419
    %2895 = vmatprep.subr.bf16.mxu0 0
    %2896 = vmatpush1.bf16.msra.mxu0 %v2420
    %2897 = vmatprep.subr.bf16.mxu0 0
    %2898 = vmatpush1.bf16.msra.mxu0 %v2421
    %2899 = vmatprep.subr.bf16.mxu0 0
    %2900 = vmatpush1.bf16.msra.mxu0 %v2422
    %2901 = vmatprep.subr.bf16.mxu0 0
    %2902 = vmatpush1.bf16.msra.mxu0 %v2423
    %2903 = vmatprep.subr.bf16.mxu0 0
    %2904 = vmatpush1.bf16.msra.mxu0 %v2424
    %2905 = vmatprep.subr.bf16.mxu0 0
    %2906 = vmatpush1.bf16.msra.mxu0 %v2425
    %2907 = vmatprep.mubr.bf16.mxu0 %v1245
    %2908 = vmatmul.mubr.bf16.gmra.mrb[0].mxu0 %v1244
    %v2909 = vpop.f32.mrb[0].mxu0
    %v2910 = vadd.f32 %v2813, %v2909
    %v2911 = vpop.f32.mrb[0].mxu0
    %v2912 = vpop.f32.mrb[0].mxu0
    %v2913 = vadd.f32 %v2816, %v2912
    %v2914 = vpop.f32.mrb[0].mxu0
    %2915 = vmatprep.mubr.bf16.mxu0 %v1269
    %2916 = vmatmul.mubr.bf16.gmra.mrb[0].mxu0 %v1268
    %v2917 = vpop.f32.mrb[0].mxu0
    %v2918 = vadd.f32 %v2821, %v2917
    %v2919 = vpop.f32.mrb[0].mxu0
    %v2920 = vpop.f32.mrb[0].mxu0
    %v2921 = vadd.f32 %v2824, %v2920
    %v2922 = vpop.f32.mrb[0].mxu0
    %2923 = vmatprep.mubr.bf16.mxu0 %v1293
    %2924 = vmatmul.mubr.bf16.gmra.mrb[0].mxu0 %v1292
    %v2925 = vpop.f32.mrb[0].mxu0
    %v2926 = vadd.f32 %v2829, %v2925
    %v2927 = vpop.f32.mrb[0].mxu0
    %v2928 = vpop.f32.mrb[0].mxu0
    %v2929 = vadd.f32 %v2832, %v2928
    %v2930 = vpop.f32.mrb[0].mxu0
    %2931 = vmatprep.mubr.bf16.mxu0 %v1317
    %2932 = vmatmul.mubr.bf16.gmra.mrb[0].mxu0 %v1316
    %v2933 = vpop.f32.mrb[0].mxu0
    %v2934 = vadd.f32 %v2837, %v2933
    %v2935 = vpop.f32.mrb[0].mxu0
    %v2936 = vpop.f32.mrb[0].mxu0
    %v2937 = vadd.f32 %v2840, %v2936
    %v2938 = vpop.f32.mrb[0].mxu0
    %2939 = vmatprep.mubr.bf16.mxu0 %v1341
    %2940 = vmatmul.mubr.bf16.gmra.mrb[0].mxu0 %v1340
    %v2941 = vpop.f32.mrb[0].mxu0
    %v2942 = vadd.f32 %v2845, %v2941
    %v2943 = vpop.f32.mrb[0].mxu0
    %v2944 = vpop.f32.mrb[0].mxu0
    %v2945 = vadd.f32 %v2848, %v2944
    %v2946 = vpop.f32.mrb[0].mxu0
    %2947 = vmatprep.mubr.bf16.mxu0 %v1365
    %2948 = vmatmul.mubr.bf16.gmra.mrb[0].mxu0 %v1364
    %v2949 = vpop.f32.mrb[0].mxu0
    %v2950 = vadd.f32 %v2853, %v2949
    %v2951 = vpop.f32.mrb[0].mxu0
    %v2952 = vpop.f32.mrb[0].mxu0
    %v2953 = vadd.f32 %v2856, %v2952
    %v2954 = vpop.f32.mrb[0].mxu0
    %2955 = vmatprep.mubr.bf16.mxu0 %v1389
    %2956 = vmatmul.mubr.bf16.gmra.mrb[0].mxu0 %v1388
    %v2957 = vpop.f32.mrb[0].mxu0
    %v2958 = vadd.f32 %v2861, %v2957
    %v2959 = vpop.f32.mrb[0].mxu0
    %v2960 = vpop.f32.mrb[0].mxu0
    %v2961 = vadd.f32 %v2864, %v2960
    %v2962 = vpop.f32.mrb[0].mxu0
    %2963 = vmatprep.mubr.bf16.mxu0 %v1413
    %2964 = vmatmul.mubr.bf16.gmra.mrb[0].mxu0 %v1412
    %v2965 = vpop.f32.mrb[0].mxu0
    %v2966 = vadd.f32 %v2869, %v2965
    %v2967 = vpop.f32.mrb[0].mxu0
    %v2968 = vpop.f32.mrb[0].mxu0
    %v2969 = vadd.f32 %v2872, %v2968
    %v2970 = vpop.f32.mrb[0].mxu0
    %2971 = vdwg.mxu0
    %2972 = vmatprep.subr.bf16.mxu0 0
    %2973 = vmatpush1.bf16.msra.mxu0 %v2426
    %2974 = vmatprep.subr.bf16.mxu0 0
    %2975 = vmatpush1.bf16.msra.mxu0 %v2427
    %2976 = vmatprep.subr.bf16.mxu0 0
    %2977 = vmatpush1.bf16.msra.mxu0 %v2428
    %2978 = vmatprep.subr.bf16.mxu0 0
    %2979 = vmatpush1.bf16.msra.mxu0 %v2429
    %2980 = vmatprep.subr.bf16.mxu0 0
    %2981 = vmatpush1.bf16.msra.mxu0 %v2430
    %2982 = vmatprep.subr.bf16.mxu0 0
    %2983 = vmatpush1.bf16.msra.mxu0 %v2431
    %2984 = vmatprep.subr.bf16.mxu0 0
    %2985 = vmatpush1.bf16.msra.mxu0 %v2432
    %2986 = vmatprep.subr.bf16.mxu0 0
    %2987 = vmatpush1.bf16.msra.mxu0 %v2433
    %2988 = vmatprep.subr.bf16.mxu0 0
    %2989 = vmatpush1.bf16.msra.mxu0 %v2434
    %2990 = vmatprep.subr.bf16.mxu0 0
    %2991 = vmatpush1.bf16.msra.mxu0 %v2435
    %2992 = vmatprep.subr.bf16.mxu0 0
    %2993 = vmatpush1.bf16.msra.mxu0 %v2436
    %2994 = vmatprep.subr.bf16.mxu0 0
    %2995 = vmatpush1.bf16.msra.mxu0 %v2437
    %2996 = vmatprep.subr.bf16.mxu0 0
    %2997 = vmatpush1.bf16.msra.mxu0 %v2438
    %2998 = vmatprep.subr.bf16.mxu0 0
    %2999 = vmatpush1.bf16.msra.mxu0 %v2439
    %3000 = vmatprep.subr.bf16.mxu0 0
    %3001 = vmatpush1.bf16.msra.mxu0 %v2440
    %3002 = vmatprep.subr.bf16.mxu0 0
    %3003 = vmatpush1.bf16.msra.mxu0 %v2441
    %3004 = vmatprep.mubr.bf16.mxu0 %v1247
    %3005 = vmatmul.mubr.bf16.gmra.mrb[0].mxu0 %v1246
    %v3006 = vpop.f32.mrb[0].mxu0
    %v3007 = vadd.f32 %v2910, %v3006
    %v3008 = vpop.f32.mrb[0].mxu0
    %v3009 = vpop.f32.mrb[0].mxu0
    %v3010 = vadd.f32 %v2913, %v3009
    %v3011 = vpop.f32.mrb[0].mxu0
    %3012 = vmatprep.mubr.bf16.mxu0 %v1271
    %3013 = vmatmul.mubr.bf16.gmra.mrb[0].mxu0 %v1270
    %v3014 = vpop.f32.mrb[0].mxu0
    %v3015 = vadd.f32 %v2918, %v3014
    %v3016 = vpop.f32.mrb[0].mxu0
    %v3017 = vpop.f32.mrb[0].mxu0
    %v3018 = vadd.f32 %v2921, %v3017
    %v3019 = vpop.f32.mrb[0].mxu0
    %3020 = vmatprep.mubr.bf16.mxu0 %v1295
    %3021 = vmatmul.mubr.bf16.gmra.mrb[0].mxu0 %v1294
    %v3022 = vpop.f32.mrb[0].mxu0
    %v3023 = vadd.f32 %v2926, %v3022
    %v3024 = vpop.f32.mrb[0].mxu0
    %v3025 = vpop.f32.mrb[0].mxu0
    %v3026 = vadd.f32 %v2929, %v3025
    %v3027 = vpop.f32.mrb[0].mxu0
    %3028 = vmatprep.mubr.bf16.mxu0 %v1319
    %3029 = vmatmul.mubr.bf16.gmra.mrb[0].mxu0 %v1318
    %v3030 = vpop.f32.mrb[0].mxu0
    %v3031 = vadd.f32 %v2934, %v3030
    %v3032 = vpop.f32.mrb[0].mxu0
    %v3033 = vpop.f32.mrb[0].mxu0
    %v3034 = vadd.f32 %v2937, %v3033
    %v3035 = vpop.f32.mrb[0].mxu0
    %3036 = vmatprep.mubr.bf16.mxu0 %v1343
    %3037 = vmatmul.mubr.bf16.gmra.mrb[0].mxu0 %v1342
    %v3038 = vpop.f32.mrb[0].mxu0
    %v3039 = vadd.f32 %v2942, %v3038
    %v3040 = vpop.f32.mrb[0].mxu0
    %v3041 = vpop.f32.mrb[0].mxu0
    %v3042 = vadd.f32 %v2945, %v3041
    %v3043 = vpop.f32.mrb[0].mxu0
    %3044 = vmatprep.mubr.bf16.mxu0 %v1367
    %3045 = vmatmul.mubr.bf16.gmra.mrb[0].mxu0 %v1366
    %v3046 = vpop.f32.mrb[0].mxu0
    %v3047 = vadd.f32 %v2950, %v3046
    %v3048 = vpop.f32.mrb[0].mxu0
    %v3049 = vpop.f32.mrb[0].mxu0
    %v3050 = vadd.f32 %v2953, %v3049
    %v3051 = vpop.f32.mrb[0].mxu0
    %3052 = vmatprep.mubr.bf16.mxu0 %v1391
    %3053 = vmatmul.mubr.bf16.gmra.mrb[0].mxu0 %v1390
    %v3054 = vpop.f32.mrb[0].mxu0
    %v3055 = vadd.f32 %v2958, %v3054
    %v3056 = vpop.f32.mrb[0].mxu0
    %v3057 = vpop.f32.mrb[0].mxu0
    %v3058 = vadd.f32 %v2961, %v3057
    %v3059 = vpop.f32.mrb[0].mxu0
    %3060 = vmatprep.mubr.bf16.mxu0 %v1415
    %3061 = vmatmul.mubr.bf16.gmra.mrb[0].mxu0 %v1414
    %v3062 = vpop.f32.mrb[0].mxu0
    %v3063 = vadd.f32 %v2966, %v3062
    %v3064 = vpop.f32.mrb[0].mxu0
    %v3065 = vpop.f32.mrb[0].mxu0
    %v3066 = vadd.f32 %v2969, %v3065
    %v3067 = vpop.f32.mrb[0].mxu0
    %3068 = vdwg.mxu0
    %3069 = vmatprep.subr.bf16.mxu0 0
    %3070 = vmatpush1.bf16.msra.mxu0 %v2442
    %3071 = vmatprep.subr.bf16.mxu0 0
    %3072 = vmatpush1.bf16.msra.mxu0 %v2443
    %3073 = vmatprep.subr.bf16.mxu0 0
    %3074 = vmatpush1.bf16.msra.mxu0 %v2444
    %3075 = vmatprep.subr.bf16.mxu0 0
    %3076 = vmatpush1.bf16.msra.mxu0 %v2445
    %3077 = vmatprep.subr.bf16.mxu0 0
    %3078 = vmatpush1.bf16.msra.mxu0 %v2446
    %3079 = vmatprep.subr.bf16.mxu0 0
    %3080 = vmatpush1.bf16.msra.mxu0 %v2447
    %3081 = vmatprep.subr.bf16.mxu0 0
    %3082 = vmatpush1.bf16.msra.mxu0 %v2448
    %3083 = vmatprep.subr.bf16.mxu0 0
    %3084 = vmatpush1.bf16.msra.mxu0 %v2449
    %3085 = vmatprep.subr.bf16.mxu0 0
    %3086 = vmatpush1.bf16.msra.mxu0 %v2450
    %3087 = vmatprep.subr.bf16.mxu0 0
    %3088 = vmatpush1.bf16.msra.mxu0 %v2451
    %3089 = vmatprep.subr.bf16.mxu0 0
    %3090 = vmatpush1.bf16.msra.mxu0 %v2452
    %3091 = vmatprep.subr.bf16.mxu0 0
    %3092 = vmatpush1.bf16.msra.mxu0 %v2453
    %3093 = vmatprep.subr.bf16.mxu0 0
    %3094 = vmatpush1.bf16.msra.mxu0 %v2454
    %3095 = vmatprep.subr.bf16.mxu0 0
    %3096 = vmatpush1.bf16.msra.mxu0 %v2455
    %3097 = vmatprep.subr.bf16.mxu0 0
    %3098 = vmatpush1.bf16.msra.mxu0 %v2456
    %3099 = vmatprep.subr.bf16.mxu0 0
    %3100 = vmatpush1.bf16.msra.mxu0 %v2457
    %3101 = vmatprep.mubr.bf16.mxu0 %v1249
    %3102 = vmatmul.mubr.bf16.gmra.mrb[0].mxu0 %v1248
    %v3103 = vpop.f32.mrb[0].mxu0
    %v3104 = vadd.f32 %v3007, %v3103
    %v3105 = vpop.f32.mrb[0].mxu0
    %v3106 = vpop.f32.mrb[0].mxu0
    %v3107 = vadd.f32 %v3010, %v3106
    %v3108 = vpop.f32.mrb[0].mxu0
    %3109 = vmatprep.mubr.bf16.mxu0 %v1273
    %3110 = vmatmul.mubr.bf16.gmra.mrb[0].mxu0 %v1272
    %v3111 = vpop.f32.mrb[0].mxu0
    %v3112 = vadd.f32 %v3015, %v3111
    %v3113 = vpop.f32.mrb[0].mxu0
    %v3114 = vpop.f32.mrb[0].mxu0
    %v3115 = vadd.f32 %v3018, %v3114
    %v3116 = vpop.f32.mrb[0].mxu0
    %3117 = vmatprep.mubr.bf16.mxu0 %v1297
    %3118 = vmatmul.mubr.bf16.gmra.mrb[0].mxu0 %v1296
    %v3119 = vpop.f32.mrb[0].mxu0
    %v3120 = vadd.f32 %v3023, %v3119
    %v3121 = vpop.f32.mrb[0].mxu0
    %v3122 = vpop.f32.mrb[0].mxu0
    %v3123 = vadd.f32 %v3026, %v3122
    %v3124 = vpop.f32.mrb[0].mxu0
    %3125 = vmatprep.mubr.bf16.mxu0 %v1321
    %3126 = vmatmul.mubr.bf16.gmra.mrb[0].mxu0 %v1320
    %v3127 = vpop.f32.mrb[0].mxu0
    %v3128 = vadd.f32 %v3031, %v3127
    %v3129 = vpop.f32.mrb[0].mxu0
    %v3130 = vpop.f32.mrb[0].mxu0
    %v3131 = vadd.f32 %v3034, %v3130
    %v3132 = vpop.f32.mrb[0].mxu0
    %3133 = vmatprep.mubr.bf16.mxu0 %v1345
    %3134 = vmatmul.mubr.bf16.gmra.mrb[0].mxu0 %v1344
    %v3135 = vpop.f32.mrb[0].mxu0
    %v3136 = vadd.f32 %v3039, %v3135
    %v3137 = vpop.f32.mrb[0].mxu0
    %v3138 = vpop.f32.mrb[0].mxu0
    %v3139 = vadd.f32 %v3042, %v3138
    %v3140 = vpop.f32.mrb[0].mxu0
    %3141 = vmatprep.mubr.bf16.mxu0 %v1369
    %3142 = vmatmul.mubr.bf16.gmra.mrb[0].mxu0 %v1368
    %v3143 = vpop.f32.mrb[0].mxu0
    %v3144 = vadd.f32 %v3047, %v3143
    %v3145 = vpop.f32.mrb[0].mxu0
    %v3146 = vpop.f32.mrb[0].mxu0
    %v3147 = vadd.f32 %v3050, %v3146
    %v3148 = vpop.f32.mrb[0].mxu0
    %3149 = vmatprep.mubr.bf16.mxu0 %v1393
    %3150 = vmatmul.mubr.bf16.gmra.mrb[0].mxu0 %v1392
    %v3151 = vpop.f32.mrb[0].mxu0
    %v3152 = vadd.f32 %v3055, %v3151
    %v3153 = vpop.f32.mrb[0].mxu0
    %v3154 = vpop.f32.mrb[0].mxu0
    %v3155 = vadd.f32 %v3058, %v3154
    %v3156 = vpop.f32.mrb[0].mxu0
    %3157 = vmatprep.mubr.bf16.mxu0 %v1417
    %3158 = vmatmul.mubr.bf16.gmra.mrb[0].mxu0 %v1416
    %v3159 = vpop.f32.mrb[0].mxu0
    %v3160 = vadd.f32 %v3063, %v3159
    %v3161 = vpop.f32.mrb[0].mxu0
    %v3162 = vpop.f32.mrb[0].mxu0
    %v3163 = vadd.f32 %v3066, %v3162
    %v3164 = vpop.f32.mrb[0].mxu0
    %3165 = vdwg.mxu0
    %3166 = vmatprep.subr.bf16.mxu0 0
    %3167 = vmatpush1.bf16.msra.mxu0 %v2458
    %3168 = vmatprep.subr.bf16.mxu0 0
    %3169 = vmatpush1.bf16.msra.mxu0 %v2459
    %3170 = vmatprep.subr.bf16.mxu0 0
    %3171 = vmatpush1.bf16.msra.mxu0 %v2460
    %3172 = vmatprep.subr.bf16.mxu0 0
    %3173 = vmatpush1.bf16.msra.mxu0 %v2461
    %3174 = vmatprep.subr.bf16.mxu0 0
    %3175 = vmatpush1.bf16.msra.mxu0 %v2462
    %3176 = vmatprep.subr.bf16.mxu0 0
    %3177 = vmatpush1.bf16.msra.mxu0 %v2463
    %3178 = vmatprep.subr.bf16.mxu0 0
    %3179 = vmatpush1.bf16.msra.mxu0 %v2464
    %3180 = vmatprep.subr.bf16.mxu0 0
    %3181 = vmatpush1.bf16.msra.mxu0 %v2465
    %3182 = vmatprep.subr.bf16.mxu0 0
    %3183 = vmatpush1.bf16.msra.mxu0 %v2466
    %3184 = vmatprep.subr.bf16.mxu0 0
    %3185 = vmatpush1.bf16.msra.mxu0 %v2467
    %3186 = vmatprep.subr.bf16.mxu0 0
    %3187 = vmatpush1.bf16.msra.mxu0 %v2468
    %3188 = vmatprep.subr.bf16.mxu0 0
    %3189 = vmatpush1.bf16.msra.mxu0 %v2469
    %3190 = vmatprep.subr.bf16.mxu0 0
    %3191 = vmatpush1.bf16.msra.mxu0 %v2470
    %3192 = vmatprep.subr.bf16.mxu0 0
    %3193 = vmatpush1.bf16.msra.mxu0 %v2471
    %3194 = vmatprep.subr.bf16.mxu0 0
    %3195 = vmatpush1.bf16.msra.mxu0 %v2472
    %3196 = vmatprep.subr.bf16.mxu0 0
    %3197 = vmatpush1.bf16.msra.mxu0 %v2473
    %3198 = vmatprep.mubr.bf16.mxu0 %v1251
    %3199 = vmatmul.mubr.bf16.gmra.mrb[0].mxu0 %v1250
    %v3200 = vpop.f32.mrb[0].mxu0
    %v3201 = vadd.f32 %v3104, %v3200
    %v3202 = vpop.f32.mrb[0].mxu0
    %v3203 = vpop.f32.mrb[0].mxu0
    %v3204 = vadd.f32 %v3107, %v3203
    %v3205 = vpop.f32.mrb[0].mxu0
    %3206 = vmatprep.mubr.bf16.mxu0 %v1275
    %3207 = vmatmul.mubr.bf16.gmra.mrb[0].mxu0 %v1274
    %v3208 = vpop.f32.mrb[0].mxu0
    %v3209 = vadd.f32 %v3112, %v3208
    %v3210 = vpop.f32.mrb[0].mxu0
    %v3211 = vpop.f32.mrb[0].mxu0
    %v3212 = vadd.f32 %v3115, %v3211
    %v3213 = vpop.f32.mrb[0].mxu0
    %3214 = vmatprep.mubr.bf16.mxu0 %v1299
    %3215 = vmatmul.mubr.bf16.gmra.mrb[0].mxu0 %v1298
    %v3216 = vpop.f32.mrb[0].mxu0
    %v3217 = vadd.f32 %v3120, %v3216
    %v3218 = vpop.f32.mrb[0].mxu0
    %v3219 = vpop.f32.mrb[0].mxu0
    %v3220 = vadd.f32 %v3123, %v3219
    %v3221 = vpop.f32.mrb[0].mxu0
    %3222 = vmatprep.mubr.bf16.mxu0 %v1323
    %3223 = vmatmul.mubr.bf16.gmra.mrb[0].mxu0 %v1322
    %v3224 = vpop.f32.mrb[0].mxu0
    %v3225 = vadd.f32 %v3128, %v3224
    %v3226 = vpop.f32.mrb[0].mxu0
    %v3227 = vpop.f32.mrb[0].mxu0
    %v3228 = vadd.f32 %v3131, %v3227
    %v3229 = vpop.f32.mrb[0].mxu0
    %3230 = vmatprep.mubr.bf16.mxu0 %v1347
    %3231 = vmatmul.mubr.bf16.gmra.mrb[0].mxu0 %v1346
    %v3232 = vpop.f32.mrb[0].mxu0
    %v3233 = vadd.f32 %v3136, %v3232
    %v3234 = vpop.f32.mrb[0].mxu0
    %v3235 = vpop.f32.mrb[0].mxu0
    %v3236 = vadd.f32 %v3139, %v3235
    %v3237 = vpop.f32.mrb[0].mxu0
    %3238 = vmatprep.mubr.bf16.mxu0 %v1371
    %3239 = vmatmul.mubr.bf16.gmra.mrb[0].mxu0 %v1370
    %v3240 = vpop.f32.mrb[0].mxu0
    %v3241 = vadd.f32 %v3144, %v3240
    %v3242 = vpop.f32.mrb[0].mxu0
    %v3243 = vpop.f32.mrb[0].mxu0
    %v3244 = vadd.f32 %v3147, %v3243
    %v3245 = vpop.f32.mrb[0].mxu0
    %3246 = vmatprep.mubr.bf16.mxu0 %v1395
    %3247 = vmatmul.mubr.bf16.gmra.mrb[0].mxu0 %v1394
    %v3248 = vpop.f32.mrb[0].mxu0
    %v3249 = vadd.f32 %v3152, %v3248
    %v3250 = vpop.f32.mrb[0].mxu0
    %v3251 = vpop.f32.mrb[0].mxu0
    %v3252 = vadd.f32 %v3155, %v3251
    %v3253 = vpop.f32.mrb[0].mxu0
    %3254 = vmatprep.mubr.bf16.mxu0 %v1419
    %3255 = vmatmul.mubr.bf16.gmra.mrb[0].mxu0 %v1418
    %v3256 = vpop.f32.mrb[0].mxu0
    %v3257 = vadd.f32 %v3160, %v3256
    %v3258 = vpop.f32.mrb[0].mxu0
    %v3259 = vpop.f32.mrb[0].mxu0
    %v3260 = vadd.f32 %v3163, %v3259
    %v3261 = vpop.f32.mrb[0].mxu0
    %3262 = vdwg.mxu0
    %3263 = vmatprep.subr.bf16.mxu0 0
    %3264 = vmatpush1.bf16.msra.mxu0 %v2474
    %3265 = vmatprep.subr.bf16.mxu0 0
    %3266 = vmatpush1.bf16.msra.mxu0 %v2475
    %3267 = vmatprep.subr.bf16.mxu0 0
    %3268 = vmatpush1.bf16.msra.mxu0 %v2476
    %3269 = vmatprep.subr.bf16.mxu0 0
    %3270 = vmatpush1.bf16.msra.mxu0 %v2477
    %3271 = vmatprep.subr.bf16.mxu0 0
    %3272 = vmatpush1.bf16.msra.mxu0 %v2478
    %3273 = vmatprep.subr.bf16.mxu0 0
    %3274 = vmatpush1.bf16.msra.mxu0 %v2479
    %3275 = vmatprep.subr.bf16.mxu0 0
    %3276 = vmatpush1.bf16.msra.mxu0 %v2480
    %3277 = vmatprep.subr.bf16.mxu0 0
    %3278 = vmatpush1.bf16.msra.mxu0 %v2481
    %3279 = vmatprep.subr.bf16.mxu0 0
    %3280 = vmatpush1.bf16.msra.mxu0 %v2482
    %3281 = vmatprep.subr.bf16.mxu0 0
    %3282 = vmatpush1.bf16.msra.mxu0 %v2483
    %3283 = vmatprep.subr.bf16.mxu0 0
    %3284 = vmatpush1.bf16.msra.mxu0 %v2484
    %3285 = vmatprep.subr.bf16.mxu0 0
    %3286 = vmatpush1.bf16.msra.mxu0 %v2485
    %3287 = vmatprep.subr.bf16.mxu0 0
    %3288 = vmatpush1.bf16.msra.mxu0 %v2486
    %3289 = vmatprep.subr.bf16.mxu0 0
    %3290 = vmatpush1.bf16.msra.mxu0 %v2487
    %3291 = vmatprep.subr.bf16.mxu0 0
    %3292 = vmatpush1.bf16.msra.mxu0 %v2488
    %3293 = vmatprep.subr.bf16.mxu0 0
    %3294 = vmatpush1.bf16.msra.mxu0 %v2489
    %3295 = vmatprep.mubr.bf16.mxu0 %v1253
    %3296 = vmatmul.mubr.bf16.gmra.mrb[0].mxu0 %v1252
    %v3297 = vpop.f32.mrb[0].mxu0
    %v3298 = vadd.f32 %v3201, %v3297
    %v3299 = vpop.f32.mrb[0].mxu0
    %v3300 = vpop.f32.mrb[0].mxu0
    %v3301 = vadd.f32 %v3204, %v3300
    %v3302 = vpop.f32.mrb[0].mxu0
    %3303 = vmatprep.mubr.bf16.mxu0 %v1277
    %3304 = vmatmul.mubr.bf16.gmra.mrb[0].mxu0 %v1276
    %v3305 = vpop.f32.mrb[0].mxu0
    %v3306 = vadd.f32 %v3209, %v3305
    %v3307 = vpop.f32.mrb[0].mxu0
    %v3308 = vpop.f32.mrb[0].mxu0
    %v3309 = vadd.f32 %v3212, %v3308
    %v3310 = vpop.f32.mrb[0].mxu0
    %3311 = vmatprep.mubr.bf16.mxu0 %v1301
    %3312 = vmatmul.mubr.bf16.gmra.mrb[0].mxu0 %v1300
    %v3313 = vpop.f32.mrb[0].mxu0
    %v3314 = vadd.f32 %v3217, %v3313
    %v3315 = vpop.f32.mrb[0].mxu0
    %v3316 = vpop.f32.mrb[0].mxu0
    %v3317 = vadd.f32 %v3220, %v3316
    %v3318 = vpop.f32.mrb[0].mxu0
    %3319 = vmatprep.mubr.bf16.mxu0 %v1325
    %3320 = vmatmul.mubr.bf16.gmra.mrb[0].mxu0 %v1324
    %v3321 = vpop.f32.mrb[0].mxu0
    %v3322 = vadd.f32 %v3225, %v3321
    %v3323 = vpop.f32.mrb[0].mxu0
    %v3324 = vpop.f32.mrb[0].mxu0
    %v3325 = vadd.f32 %v3228, %v3324
    %v3326 = vpop.f32.mrb[0].mxu0
    %3327 = vmatprep.mubr.bf16.mxu0 %v1349
    %3328 = vmatmul.mubr.bf16.gmra.mrb[0].mxu0 %v1348
    %v3329 = vpop.f32.mrb[0].mxu0
    %v3330 = vadd.f32 %v3233, %v3329
    %v3331 = vpop.f32.mrb[0].mxu0
    %v3332 = vpop.f32.mrb[0].mxu0
    %v3333 = vadd.f32 %v3236, %v3332
    %v3334 = vpop.f32.mrb[0].mxu0
    %3335 = vmatprep.mubr.bf16.mxu0 %v1373
    %3336 = vmatmul.mubr.bf16.gmra.mrb[0].mxu0 %v1372
    %v3337 = vpop.f32.mrb[0].mxu0
    %v3338 = vadd.f32 %v3241, %v3337
    %v3339 = vpop.f32.mrb[0].mxu0
    %v3340 = vpop.f32.mrb[0].mxu0
    %v3341 = vadd.f32 %v3244, %v3340
    %v3342 = vpop.f32.mrb[0].mxu0
    %3343 = vmatprep.mubr.bf16.mxu0 %v1397
    %3344 = vmatmul.mubr.bf16.gmra.mrb[0].mxu0 %v1396
    %v3345 = vpop.f32.mrb[0].mxu0
    %v3346 = vadd.f32 %v3249, %v3345
    %v3347 = vpop.f32.mrb[0].mxu0
    %v3348 = vpop.f32.mrb[0].mxu0
    %v3349 = vadd.f32 %v3252, %v3348
    %v3350 = vpop.f32.mrb[0].mxu0
    %3351 = vmatprep.mubr.bf16.mxu0 %v1421
    %3352 = vmatmul.mubr.bf16.gmra.mrb[0].mxu0 %v1420
    %v3353 = vpop.f32.mrb[0].mxu0
    %v3354 = vadd.f32 %v3257, %v3353
    %v3355 = vpop.f32.mrb[0].mxu0
    %v3356 = vpop.f32.mrb[0].mxu0
    %v3357 = vadd.f32 %v3260, %v3356
    %v3358 = vpop.f32.mrb[0].mxu0
    %3359 = vdwg.mxu0
    %3360 = vmatprep.subr.bf16.mxu0 0
    %3361 = vmatpush1.bf16.msra.mxu0 %v2490
    %3362 = vmatprep.subr.bf16.mxu0 0
    %3363 = vmatpush1.bf16.msra.mxu0 %v2491
    %3364 = vmatprep.subr.bf16.mxu0 0
    %3365 = vmatpush1.bf16.msra.mxu0 %v2492
    %3366 = vmatprep.subr.bf16.mxu0 0
    %3367 = vmatpush1.bf16.msra.mxu0 %v2493
    %3368 = vmatprep.subr.bf16.mxu0 0
    %3369 = vmatpush1.bf16.msra.mxu0 %v2494
    %3370 = vmatprep.subr.bf16.mxu0 0
    %3371 = vmatpush1.bf16.msra.mxu0 %v2495
    %3372 = vmatprep.subr.bf16.mxu0 0
    %3373 = vmatpush1.bf16.msra.mxu0 %v2496
    %3374 = vmatprep.subr.bf16.mxu0 0
    %3375 = vmatpush1.bf16.msra.mxu0 %v2497
    %3376 = vmatprep.subr.bf16.mxu0 0
    %3377 = vmatpush1.bf16.msra.mxu0 %v2498
    %3378 = vmatprep.subr.bf16.mxu0 0
    %3379 = vmatpush1.bf16.msra.mxu0 %v2499
    %3380 = vmatprep.subr.bf16.mxu0 0
    %3381 = vmatpush1.bf16.msra.mxu0 %v2500
    %3382 = vmatprep.subr.bf16.mxu0 0
    %3383 = vmatpush1.bf16.msra.mxu0 %v2501
    %3384 = vmatprep.subr.bf16.mxu0 0
    %3385 = vmatpush1.bf16.msra.mxu0 %v2502
    %3386 = vmatprep.subr.bf16.mxu0 0
    %3387 = vmatpush1.bf16.msra.mxu0 %v2503
    %3388 = vmatprep.subr.bf16.mxu0 0
    %3389 = vmatpush1.bf16.msra.mxu0 %v2504
    %3390 = vmatprep.subr.bf16.mxu0 0
    %3391 = vmatpush1.bf16.msra.mxu0 %v2505
    %3392 = vmatprep.mubr.bf16.mxu0 %v1255
    %3393 = vmatmul.mubr.bf16.gmra.mrb[0].mxu0 %v1254
    %v3394 = vpop.f32.mrb[0].mxu0
    %v3395 = vadd.f32 %v3298, %v3394
    %v3396 = vpop.f32.mrb[0].mxu0
    %v3397 = vpop.f32.mrb[0].mxu0
    %v3398 = vadd.f32 %v3301, %v3397
    %v3399 = vpop.f32.mrb[0].mxu0
    %3400 = vmatprep.mubr.bf16.mxu0 %v1279
    %3401 = vmatmul.mubr.bf16.gmra.mrb[0].mxu0 %v1278
    %v3402 = vpop.f32.mrb[0].mxu0
    %v3403 = vadd.f32 %v3306, %v3402
    %v3404 = vpop.f32.mrb[0].mxu0
    %v3405 = vpop.f32.mrb[0].mxu0
    %v3406 = vadd.f32 %v3309, %v3405
    %v3407 = vpop.f32.mrb[0].mxu0
    %3408 = vmatprep.mubr.bf16.mxu0 %v1303
    %3409 = vmatmul.mubr.bf16.gmra.mrb[0].mxu0 %v1302
    %v3410 = vpop.f32.mrb[0].mxu0
    %v3411 = vadd.f32 %v3314, %v3410
    %v3412 = vpop.f32.mrb[0].mxu0
    %v3413 = vpop.f32.mrb[0].mxu0
    %v3414 = vadd.f32 %v3317, %v3413
    %v3415 = vpop.f32.mrb[0].mxu0
    %3416 = vmatprep.mubr.bf16.mxu0 %v1327
    %3417 = vmatmul.mubr.bf16.gmra.mrb[0].mxu0 %v1326
    %v3418 = vpop.f32.mrb[0].mxu0
    %v3419 = vadd.f32 %v3322, %v3418
    %v3420 = vpop.f32.mrb[0].mxu0
    %v3421 = vpop.f32.mrb[0].mxu0
    %v3422 = vadd.f32 %v3325, %v3421
    %v3423 = vpop.f32.mrb[0].mxu0
    %3424 = vmatprep.mubr.bf16.mxu0 %v1351
    %3425 = vmatmul.mubr.bf16.gmra.mrb[0].mxu0 %v1350
    %v3426 = vpop.f32.mrb[0].mxu0
    %v3427 = vadd.f32 %v3330, %v3426
    %v3428 = vpop.f32.mrb[0].mxu0
    %v3429 = vpop.f32.mrb[0].mxu0
    %v3430 = vadd.f32 %v3333, %v3429
    %v3431 = vpop.f32.mrb[0].mxu0
    %3432 = vmatprep.mubr.bf16.mxu0 %v1375
    %3433 = vmatmul.mubr.bf16.gmra.mrb[0].mxu0 %v1374
    %v3434 = vpop.f32.mrb[0].mxu0
    %v3435 = vadd.f32 %v3338, %v3434
    %v3436 = vpop.f32.mrb[0].mxu0
    %v3437 = vpop.f32.mrb[0].mxu0
    %v3438 = vadd.f32 %v3341, %v3437
    %v3439 = vpop.f32.mrb[0].mxu0
    %3440 = vmatprep.mubr.bf16.mxu0 %v1399
    %3441 = vmatmul.mubr.bf16.gmra.mrb[0].mxu0 %v1398
    %v3442 = vpop.f32.mrb[0].mxu0
    %v3443 = vadd.f32 %v3346, %v3442
    %v3444 = vpop.f32.mrb[0].mxu0
    %v3445 = vpop.f32.mrb[0].mxu0
    %v3446 = vadd.f32 %v3349, %v3445
    %v3447 = vpop.f32.mrb[0].mxu0
    %3448 = vmatprep.mubr.bf16.mxu0 %v1423
    %3449 = vmatmul.mubr.bf16.gmra.mrb[0].mxu0 %v1422
    %v3450 = vpop.f32.mrb[0].mxu0
    %v3451 = vadd.f32 %v3354, %v3450
    %v3452 = vpop.f32.mrb[0].mxu0
    %v3453 = vpop.f32.mrb[0].mxu0
    %v3454 = vadd.f32 %v3357, %v3453
    %v3455 = vpop.f32.mrb[0].mxu0
    %3456 = vdwg.mxu0
    %3457 = vmatprep.subr.bf16.mxu0 0
    %3458 = vmatpush1.bf16.msra.mxu0 %v2506
    %3459 = vmatprep.subr.bf16.mxu0 0
    %3460 = vmatpush1.bf16.msra.mxu0 %v2507
    %3461 = vmatprep.subr.bf16.mxu0 0
    %3462 = vmatpush1.bf16.msra.mxu0 %v2508
    %3463 = vmatprep.subr.bf16.mxu0 0
    %3464 = vmatpush1.bf16.msra.mxu0 %v2509
    %3465 = vmatprep.subr.bf16.mxu0 0
    %3466 = vmatpush1.bf16.msra.mxu0 %v2510
    %3467 = vmatprep.subr.bf16.mxu0 0
    %3468 = vmatpush1.bf16.msra.mxu0 %v2511
    %3469 = vmatprep.subr.bf16.mxu0 0
    %3470 = vmatpush1.bf16.msra.mxu0 %v2512
    %3471 = vmatprep.subr.bf16.mxu0 0
    %3472 = vmatpush1.bf16.msra.mxu0 %v2513
    %3473 = vmatprep.subr.bf16.mxu0 0
    %3474 = vmatpush1.bf16.msra.mxu0 %v2514
    %3475 = vmatprep.subr.bf16.mxu0 0
    %3476 = vmatpush1.bf16.msra.mxu0 %v2515
    %3477 = vmatprep.subr.bf16.mxu0 0
    %3478 = vmatpush1.bf16.msra.mxu0 %v2516
    %3479 = vmatprep.subr.bf16.mxu0 0
    %3480 = vmatpush1.bf16.msra.mxu0 %v2517
    %3481 = vmatprep.subr.bf16.mxu0 0
    %3482 = vmatpush1.bf16.msra.mxu0 %v2518
    %3483 = vmatprep.subr.bf16.mxu0 0
    %3484 = vmatpush1.bf16.msra.mxu0 %v2519
    %3485 = vmatprep.subr.bf16.mxu0 0
    %3486 = vmatpush1.bf16.msra.mxu0 %v2520
    %3487 = vmatprep.subr.bf16.mxu0 0
    %3488 = vmatpush1.bf16.msra.mxu0 %v2521
    %3489 = vmatprep.mubr.bf16.mxu0 %v1257
    %3490 = vmatmul.mubr.bf16.gmra.mrb[0].mxu0 %v1256
    %v3491 = vpop.f32.mrb[0].mxu0
    %v3492 = vadd.f32 %v3395, %v3491
    %v3493 = vpop.f32.mrb[0].mxu0
    %v3494 = vpop.f32.mrb[0].mxu0
    %v3495 = vadd.f32 %v3398, %v3494
    %v3496 = vpop.f32.mrb[0].mxu0
    %3497 = vmatprep.mubr.bf16.mxu0 %v1281
    %3498 = vmatmul.mubr.bf16.gmra.mrb[0].mxu0 %v1280
    %v3499 = vpop.f32.mrb[0].mxu0
    %v3500 = vadd.f32 %v3403, %v3499
    %v3501 = vpop.f32.mrb[0].mxu0
    %v3502 = vpop.f32.mrb[0].mxu0
    %v3503 = vadd.f32 %v3406, %v3502
    %v3504 = vpop.f32.mrb[0].mxu0
    %3505 = vmatprep.mubr.bf16.mxu0 %v1305
    %3506 = vmatmul.mubr.bf16.gmra.mrb[0].mxu0 %v1304
    %v3507 = vpop.f32.mrb[0].mxu0
    %v3508 = vadd.f32 %v3411, %v3507
    %v3509 = vpop.f32.mrb[0].mxu0
    %v3510 = vpop.f32.mrb[0].mxu0
    %v3511 = vadd.f32 %v3414, %v3510
    %v3512 = vpop.f32.mrb[0].mxu0
    %3513 = vmatprep.mubr.bf16.mxu0 %v1329
    %3514 = vmatmul.mubr.bf16.gmra.mrb[0].mxu0 %v1328
    %v3515 = vpop.f32.mrb[0].mxu0
    %v3516 = vadd.f32 %v3419, %v3515
    %v3517 = vpop.f32.mrb[0].mxu0
    %v3518 = vpop.f32.mrb[0].mxu0
    %v3519 = vadd.f32 %v3422, %v3518
    %v3520 = vpop.f32.mrb[0].mxu0
    %3521 = vmatprep.mubr.bf16.mxu0 %v1353
    %3522 = vmatmul.mubr.bf16.gmra.mrb[0].mxu0 %v1352
    %v3523 = vpop.f32.mrb[0].mxu0
    %v3524 = vadd.f32 %v3427, %v3523
    %v3525 = vpop.f32.mrb[0].mxu0
    %v3526 = vpop.f32.mrb[0].mxu0
    %v3527 = vadd.f32 %v3430, %v3526
    %v3528 = vpop.f32.mrb[0].mxu0
    %3529 = vmatprep.mubr.bf16.mxu0 %v1377
    %3530 = vmatmul.mubr.bf16.gmra.mrb[0].mxu0 %v1376
    %v3531 = vpop.f32.mrb[0].mxu0
    %v3532 = vadd.f32 %v3435, %v3531
    %v3533 = vpop.f32.mrb[0].mxu0
    %v3534 = vpop.f32.mrb[0].mxu0
    %v3535 = vadd.f32 %v3438, %v3534
    %v3536 = vpop.f32.mrb[0].mxu0
    %3537 = vmatprep.mubr.bf16.mxu0 %v1401
    %3538 = vmatmul.mubr.bf16.gmra.mrb[0].mxu0 %v1400
    %v3539 = vpop.f32.mrb[0].mxu0
    %v3540 = vadd.f32 %v3443, %v3539
    %v3541 = vpop.f32.mrb[0].mxu0
    %v3542 = vpop.f32.mrb[0].mxu0
    %v3543 = vadd.f32 %v3446, %v3542
    %v3544 = vpop.f32.mrb[0].mxu0
    %3545 = vmatprep.mubr.bf16.mxu0 %v1425
    %3546 = vmatmul.mubr.bf16.gmra.mrb[0].mxu0 %v1424
    %v3547 = vpop.f32.mrb[0].mxu0
    %v3548 = vadd.f32 %v3451, %v3547
    %v3549 = vpop.f32.mrb[0].mxu0
    %v3550 = vpop.f32.mrb[0].mxu0
    %v3551 = vadd.f32 %v3454, %v3550
    %v3552 = vpop.f32.mrb[0].mxu0
    %3553 = vdwg.mxu0
    %3554 = vmatprep.subr.bf16.mxu0 0
    %3555 = vmatpush1.bf16.msra.mxu0 %v2522
    %3556 = vmatprep.subr.bf16.mxu0 0
    %3557 = vmatpush1.bf16.msra.mxu0 %v2523
    %3558 = vmatprep.subr.bf16.mxu0 0
    %3559 = vmatpush1.bf16.msra.mxu0 %v2524
    %3560 = vmatprep.subr.bf16.mxu0 0
    %3561 = vmatpush1.bf16.msra.mxu0 %v2525
    %3562 = vmatprep.subr.bf16.mxu0 0
    %3563 = vmatpush1.bf16.msra.mxu0 %v2526
    %3564 = vmatprep.subr.bf16.mxu0 0
    %3565 = vmatpush1.bf16.msra.mxu0 %v2527
    %3566 = vmatprep.subr.bf16.mxu0 0
    %3567 = vmatpush1.bf16.msra.mxu0 %v2528
    %3568 = vmatprep.subr.bf16.mxu0 0
    %3569 = vmatpush1.bf16.msra.mxu0 %v2529
    %3570 = vmatprep.subr.bf16.mxu0 0
    %3571 = vmatpush1.bf16.msra.mxu0 %v2530
    %3572 = vmatprep.subr.bf16.mxu0 0
    %3573 = vmatpush1.bf16.msra.mxu0 %v2531
    %3574 = vmatprep.subr.bf16.mxu0 0
    %3575 = vmatpush1.bf16.msra.mxu0 %v2532
    %3576 = vmatprep.subr.bf16.mxu0 0
    %3577 = vmatpush1.bf16.msra.mxu0 %v2533
    %3578 = vmatprep.subr.bf16.mxu0 0
    %3579 = vmatpush1.bf16.msra.mxu0 %v2534
    %3580 = vmatprep.subr.bf16.mxu0 0
    %3581 = vmatpush1.bf16.msra.mxu0 %v2535
    %3582 = vmatprep.subr.bf16.mxu0 0
    %3583 = vmatpush1.bf16.msra.mxu0 %v2536
    %3584 = vmatprep.subr.bf16.mxu0 0
    %3585 = vmatpush1.bf16.msra.mxu0 %v2537
    %3586 = vmatprep.mubr.bf16.mxu0 %v1259
    %3587 = vmatmul.mubr.bf16.gmra.mrb[0].mxu0 %v1258
    %v3588 = vpop.f32.mrb[0].mxu0
    %v3589 = vadd.f32 %v3492, %v3588
    %v3590 = vpop.f32.mrb[0].mxu0
    %v3591 = vpop.f32.mrb[0].mxu0
    %v3592 = vadd.f32 %v3495, %v3591
    %v3593 = vpop.f32.mrb[0].mxu0
    %3594 = vmatprep.mubr.bf16.mxu0 %v1283
    %3595 = vmatmul.mubr.bf16.gmra.mrb[0].mxu0 %v1282
    %v3596 = vpop.f32.mrb[0].mxu0
    %v3597 = vadd.f32 %v3500, %v3596
    %v3598 = vpop.f32.mrb[0].mxu0
    %v3599 = vpop.f32.mrb[0].mxu0
    %v3600 = vadd.f32 %v3503, %v3599
    %v3601 = vpop.f32.mrb[0].mxu0
    %3602 = vmatprep.mubr.bf16.mxu0 %v1307
    %3603 = vmatmul.mubr.bf16.gmra.mrb[0].mxu0 %v1306
    %v3604 = vpop.f32.mrb[0].mxu0
    %v3605 = vadd.f32 %v3508, %v3604
    %v3606 = vpop.f32.mrb[0].mxu0
    %v3607 = vpop.f32.mrb[0].mxu0
    %v3608 = vadd.f32 %v3511, %v3607
    %v3609 = vpop.f32.mrb[0].mxu0
    %3610 = vmatprep.mubr.bf16.mxu0 %v1331
    %3611 = vmatmul.mubr.bf16.gmra.mrb[0].mxu0 %v1330
    %v3612 = vpop.f32.mrb[0].mxu0
    %v3613 = vadd.f32 %v3516, %v3612
    %v3614 = vpop.f32.mrb[0].mxu0
    %v3615 = vpop.f32.mrb[0].mxu0
    %v3616 = vadd.f32 %v3519, %v3615
    %v3617 = vpop.f32.mrb[0].mxu0
    %3618 = vmatprep.mubr.bf16.mxu0 %v1355
    %3619 = vmatmul.mubr.bf16.gmra.mrb[0].mxu0 %v1354
    %v3620 = vpop.f32.mrb[0].mxu0
    %v3621 = vadd.f32 %v3524, %v3620
    %v3622 = vpop.f32.mrb[0].mxu0
    %v3623 = vpop.f32.mrb[0].mxu0
    %v3624 = vadd.f32 %v3527, %v3623
    %v3625 = vpop.f32.mrb[0].mxu0
    %3626 = vmatprep.mubr.bf16.mxu0 %v1379
    %3627 = vmatmul.mubr.bf16.gmra.mrb[0].mxu0 %v1378
    %v3628 = vpop.f32.mrb[0].mxu0
    %v3629 = vadd.f32 %v3532, %v3628
    %v3630 = vpop.f32.mrb[0].mxu0
    %v3631 = vpop.f32.mrb[0].mxu0
    %v3632 = vadd.f32 %v3535, %v3631
    %v3633 = vpop.f32.mrb[0].mxu0
    %3634 = vmatprep.mubr.bf16.mxu0 %v1403
    %3635 = vmatmul.mubr.bf16.gmra.mrb[0].mxu0 %v1402
    %v3636 = vpop.f32.mrb[0].mxu0
    %v3637 = vadd.f32 %v3540, %v3636
    %v3638 = vpop.f32.mrb[0].mxu0
    %v3639 = vpop.f32.mrb[0].mxu0
    %v3640 = vadd.f32 %v3543, %v3639
    %v3641 = vpop.f32.mrb[0].mxu0
    %3642 = vmatprep.mubr.bf16.mxu0 %v1427
    %3643 = vmatmul.mubr.bf16.gmra.mrb[0].mxu0 %v1426
    %v3644 = vpop.f32.mrb[0].mxu0
    %v3645 = vadd.f32 %v3548, %v3644
    %v3646 = vpop.f32.mrb[0].mxu0
    %v3647 = vpop.f32.mrb[0].mxu0
    %v3648 = vadd.f32 %v3551, %v3647
    %v3649 = vpop.f32.mrb[0].mxu0
    %3650 = vdwg.mxu0
    %3651 = vmatprep.subr.bf16.mxu0 0
    %3652 = vmatpush1.bf16.msra.mxu0 %v2538
    %3653 = vmatprep.subr.bf16.mxu0 0
    %3654 = vmatpush1.bf16.msra.mxu0 %v2539
    %3655 = vmatprep.subr.bf16.mxu0 0
    %3656 = vmatpush1.bf16.msra.mxu0 %v2540
    %3657 = vmatprep.subr.bf16.mxu0 0
    %3658 = vmatpush1.bf16.msra.mxu0 %v2541
    %3659 = vmatprep.subr.bf16.mxu0 0
    %3660 = vmatpush1.bf16.msra.mxu0 %v2542
    %3661 = vmatprep.subr.bf16.mxu0 0
    %3662 = vmatpush1.bf16.msra.mxu0 %v2543
    %3663 = vmatprep.subr.bf16.mxu0 0
    %3664 = vmatpush1.bf16.msra.mxu0 %v2544
    %3665 = vmatprep.subr.bf16.mxu0 0
    %3666 = vmatpush1.bf16.msra.mxu0 %v2545
    %3667 = vmatprep.subr.bf16.mxu0 0
    %3668 = vmatpush1.bf16.msra.mxu0 %v2546
    %3669 = vmatprep.subr.bf16.mxu0 0
    %3670 = vmatpush1.bf16.msra.mxu0 %v2547
    %3671 = vmatprep.subr.bf16.mxu0 0
    %3672 = vmatpush1.bf16.msra.mxu0 %v2548
    %3673 = vmatprep.subr.bf16.mxu0 0
    %3674 = vmatpush1.bf16.msra.mxu0 %v2549
    %3675 = vmatprep.subr.bf16.mxu0 0
    %3676 = vmatpush1.bf16.msra.mxu0 %v2550
    %3677 = vmatprep.subr.bf16.mxu0 0
    %3678 = vmatpush1.bf16.msra.mxu0 %v2551
    %3679 = vmatprep.subr.bf16.mxu0 0
    %3680 = vmatpush1.bf16.msra.mxu0 %v2552
    %3681 = vmatprep.subr.bf16.mxu0 0
    %3682 = vmatpush1.bf16.msra.mxu0 %v2553
    %3683 = vmatprep.mubr.bf16.mxu0 %v1261
    %3684 = vmatmul.mubr.bf16.gmra.mrb[0].mxu0 %v1260
    %v3685 = vpop.f32.mrb[0].mxu0
    %v3686 = vadd.f32 %v3589, %v3685
    %v3687 = vpop.f32.mrb[0].mxu0
    %v3688 = vpop.f32.mrb[0].mxu0
    %v3689 = vadd.f32 %v3592, %v3688
    %v3690 = vpop.f32.mrb[0].mxu0
    %3691 = vmatprep.mubr.bf16.mxu0 %v1285
    %3692 = vmatmul.mubr.bf16.gmra.mrb[0].mxu0 %v1284
    %v3693 = vpop.f32.mrb[0].mxu0
    %v3694 = vadd.f32 %v3597, %v3693
    %v3695 = vpop.f32.mrb[0].mxu0
    %v3696 = vpop.f32.mrb[0].mxu0
    %v3697 = vadd.f32 %v3600, %v3696
    %v3698 = vpop.f32.mrb[0].mxu0
    %3699 = vmatprep.mubr.bf16.mxu0 %v1309
    %3700 = vmatmul.mubr.bf16.gmra.mrb[0].mxu0 %v1308
    %v3701 = vpop.f32.mrb[0].mxu0
    %v3702 = vadd.f32 %v3605, %v3701
    %v3703 = vpop.f32.mrb[0].mxu0
    %v3704 = vpop.f32.mrb[0].mxu0
    %v3705 = vadd.f32 %v3608, %v3704
    %v3706 = vpop.f32.mrb[0].mxu0
    %3707 = vmatprep.mubr.bf16.mxu0 %v1333
    %3708 = vmatmul.mubr.bf16.gmra.mrb[0].mxu0 %v1332
    %v3709 = vpop.f32.mrb[0].mxu0
    %v3710 = vadd.f32 %v3613, %v3709
    %v3711 = vpop.f32.mrb[0].mxu0
    %v3712 = vpop.f32.mrb[0].mxu0
    %v3713 = vadd.f32 %v3616, %v3712
    %v3714 = vpop.f32.mrb[0].mxu0
    %3715 = vmatprep.mubr.bf16.mxu0 %v1357
    %3716 = vmatmul.mubr.bf16.gmra.mrb[0].mxu0 %v1356
    %v3717 = vpop.f32.mrb[0].mxu0
    %v3718 = vadd.f32 %v3621, %v3717
    %v3719 = vpop.f32.mrb[0].mxu0
    %v3720 = vpop.f32.mrb[0].mxu0
    %v3721 = vadd.f32 %v3624, %v3720
    %v3722 = vpop.f32.mrb[0].mxu0
    %3723 = vmatprep.mubr.bf16.mxu0 %v1381
    %3724 = vmatmul.mubr.bf16.gmra.mrb[0].mxu0 %v1380
    %v3725 = vpop.f32.mrb[0].mxu0
    %v3726 = vadd.f32 %v3629, %v3725
    %v3727 = vpop.f32.mrb[0].mxu0
    %v3728 = vpop.f32.mrb[0].mxu0
    %v3729 = vadd.f32 %v3632, %v3728
    %v3730 = vpop.f32.mrb[0].mxu0
    %3731 = vmatprep.mubr.bf16.mxu0 %v1405
    %3732 = vmatmul.mubr.bf16.gmra.mrb[0].mxu0 %v1404
    %v3733 = vpop.f32.mrb[0].mxu0
    %v3734 = vadd.f32 %v3637, %v3733
    %v3735 = vpop.f32.mrb[0].mxu0
    %v3736 = vpop.f32.mrb[0].mxu0
    %v3737 = vadd.f32 %v3640, %v3736
    %v3738 = vpop.f32.mrb[0].mxu0
    %3739 = vmatprep.mubr.bf16.mxu0 %v1429
    %3740 = vmatmul.mubr.bf16.gmra.mrb[0].mxu0 %v1428
    %v3741 = vpop.f32.mrb[0].mxu0
    %v3742 = vadd.f32 %v3645, %v3741
    %v3743 = vpop.f32.mrb[0].mxu0
    %v3744 = vpop.f32.mrb[0].mxu0
    %v3745 = vadd.f32 %v3648, %v3744
    %v3746 = vpop.f32.mrb[0].mxu0
    %3747 = vdwg.mxu0
    %3748 = vmatprep.subr.bf16.mxu0 0
    %3749 = vmatpush1.bf16.msra.mxu0 %v2554
    %3750 = vmatprep.subr.bf16.mxu0 0
    %3751 = vmatpush1.bf16.msra.mxu0 %v2555
    %3752 = vmatprep.subr.bf16.mxu0 0
    %3753 = vmatpush1.bf16.msra.mxu0 %v2556
    %3754 = vmatprep.subr.bf16.mxu0 0
    %3755 = vmatpush1.bf16.msra.mxu0 %v2557
    %3756 = vmatprep.subr.bf16.mxu0 0
    %3757 = vmatpush1.bf16.msra.mxu0 %v2558
    %3758 = vmatprep.subr.bf16.mxu0 0
    %3759 = vmatpush1.bf16.msra.mxu0 %v2559
    %3760 = vmatprep.subr.bf16.mxu0 0
    %3761 = vmatpush1.bf16.msra.mxu0 %v2560
    %3762 = vmatprep.subr.bf16.mxu0 0
    %3763 = vmatpush1.bf16.msra.mxu0 %v2561
    %3764 = vmatprep.subr.bf16.mxu0 0
    %3765 = vmatpush1.bf16.msra.mxu0 %v2562
    %3766 = vmatprep.subr.bf16.mxu0 0
    %3767 = vmatpush1.bf16.msra.mxu0 %v2563
    %3768 = vmatprep.subr.bf16.mxu0 0
    %3769 = vmatpush1.bf16.msra.mxu0 %v2564
    %3770 = vmatprep.subr.bf16.mxu0 0
    %3771 = vmatpush1.bf16.msra.mxu0 %v2565
    %3772 = vmatprep.subr.bf16.mxu0 0
    %3773 = vmatpush1.bf16.msra.mxu0 %v2566
    %3774 = vmatprep.subr.bf16.mxu0 0
    %3775 = vmatpush1.bf16.msra.mxu0 %v2567
    %3776 = vmatprep.subr.bf16.mxu0 0
    %3777 = vmatpush1.bf16.msra.mxu0 %v2568
    %3778 = vmatprep.subr.bf16.mxu0 0
    %3779 = vmatpush1.bf16.msra.mxu0 %v2569
    %3780 = vmatprep.mubr.bf16.mxu0 %v1263
    %3781 = vmatmul.mubr.bf16.gmra.mrb[0].mxu0 %v1262
    %v3782 = vpop.f32.mrb[0].mxu0
    %v3783 = vadd.f32 %v3686, %v3782
    %v3784 = vpop.f32.mrb[0].mxu0
    %v3785 = vpop.f32.mrb[0].mxu0
    %v3786 = vadd.f32 %v3689, %v3785
    %v3787 = vpop.f32.mrb[0].mxu0
    %3788 = vmatprep.mubr.bf16.mxu0 %v1287
    %3789 = vmatmul.mubr.bf16.gmra.mrb[0].mxu0 %v1286
    %v3790 = vpop.f32.mrb[0].mxu0
    %v3791 = vadd.f32 %v3694, %v3790
    %v3792 = vpop.f32.mrb[0].mxu0
    %v3793 = vpop.f32.mrb[0].mxu0
    %v3794 = vadd.f32 %v3697, %v3793
    %v3795 = vpop.f32.mrb[0].mxu0
    %3796 = vmatprep.mubr.bf16.mxu0 %v1311
    %3797 = vmatmul.mubr.bf16.gmra.mrb[0].mxu0 %v1310
    %v3798 = vpop.f32.mrb[0].mxu0
    %v3799 = vadd.f32 %v3702, %v3798
    %v3800 = vpop.f32.mrb[0].mxu0
    %v3801 = vpop.f32.mrb[0].mxu0
    %v3802 = vadd.f32 %v3705, %v3801
    %v3803 = vpop.f32.mrb[0].mxu0
    %3804 = vmatprep.mubr.bf16.mxu0 %v1335
    %3805 = vmatmul.mubr.bf16.gmra.mrb[0].mxu0 %v1334
    %v3806 = vpop.f32.mrb[0].mxu0
    %v3807 = vadd.f32 %v3710, %v3806
    %v3808 = vpop.f32.mrb[0].mxu0
    %v3809 = vpop.f32.mrb[0].mxu0
    %v3810 = vadd.f32 %v3713, %v3809
    %v3811 = vpop.f32.mrb[0].mxu0
    %3812 = vmatprep.mubr.bf16.mxu0 %v1359
    %3813 = vmatmul.mubr.bf16.gmra.mrb[0].mxu0 %v1358
    %v3814 = vpop.f32.mrb[0].mxu0
    %v3815 = vadd.f32 %v3718, %v3814
    %v3816 = vpop.f32.mrb[0].mxu0
    %v3817 = vpop.f32.mrb[0].mxu0
    %v3818 = vadd.f32 %v3721, %v3817
    %v3819 = vpop.f32.mrb[0].mxu0
    %3820 = vmatprep.mubr.bf16.mxu0 %v1383
    %3821 = vmatmul.mubr.bf16.gmra.mrb[0].mxu0 %v1382
    %v3822 = vpop.f32.mrb[0].mxu0
    %v3823 = vadd.f32 %v3726, %v3822
    %v3824 = vpop.f32.mrb[0].mxu0
    %v3825 = vpop.f32.mrb[0].mxu0
    %v3826 = vadd.f32 %v3729, %v3825
    %v3827 = vpop.f32.mrb[0].mxu0
    %3828 = vmatprep.mubr.bf16.mxu0 %v1407
    %3829 = vmatmul.mubr.bf16.gmra.mrb[0].mxu0 %v1406
    %v3830 = vpop.f32.mrb[0].mxu0
    %v3831 = vadd.f32 %v3734, %v3830
    %v3832 = vpop.f32.mrb[0].mxu0
    %v3833 = vpop.f32.mrb[0].mxu0
    %v3834 = vadd.f32 %v3737, %v3833
    %v3835 = vpop.f32.mrb[0].mxu0
    %3836 = vmatprep.mubr.bf16.mxu0 %v1431
    %3837 = vmatmul.mubr.bf16.gmra.mrb[0].mxu0 %v1430
    %v3838 = vpop.f32.mrb[0].mxu0
    %v3839 = vadd.f32 %v3742, %v3838
    %v3840 = vpop.f32.mrb[0].mxu0
    %v3841 = vpop.f32.mrb[0].mxu0
    %v3842 = vadd.f32 %v3745, %v3841
    %v3843 = vpop.f32.mrb[0].mxu0
    %3844 = vdwg.mxu0
    %3845 = vmatprep.subr.bf16.mxu0 0
    %3846 = vmatpush1.bf16.msra.mxu0 %v2570
    %3847 = vmatprep.subr.bf16.mxu0 0
    %3848 = vmatpush1.bf16.msra.mxu0 %v2571
    %3849 = vmatprep.subr.bf16.mxu0 0
    %3850 = vmatpush1.bf16.msra.mxu0 %v2572
    %3851 = vmatprep.subr.bf16.mxu0 0
    %3852 = vmatpush1.bf16.msra.mxu0 %v2573
    %3853 = vmatprep.subr.bf16.mxu0 0
    %3854 = vmatpush1.bf16.msra.mxu0 %v2574
    %3855 = vmatprep.subr.bf16.mxu0 0
    %3856 = vmatpush1.bf16.msra.mxu0 %v2575
    %3857 = vmatprep.subr.bf16.mxu0 0
    %3858 = vmatpush1.bf16.msra.mxu0 %v2576
    %3859 = vmatprep.subr.bf16.mxu0 0
    %3860 = vmatpush1.bf16.msra.mxu0 %v2577
    %3861 = vmatprep.subr.bf16.mxu0 0
    %3862 = vmatpush1.bf16.msra.mxu0 %v2578
    %3863 = vmatprep.subr.bf16.mxu0 0
    %3864 = vmatpush1.bf16.msra.mxu0 %v2579
    %3865 = vmatprep.subr.bf16.mxu0 0
    %3866 = vmatpush1.bf16.msra.mxu0 %v2580
    %3867 = vmatprep.subr.bf16.mxu0 0
    %3868 = vmatpush1.bf16.msra.mxu0 %v2581
    %3869 = vmatprep.subr.bf16.mxu0 0
    %3870 = vmatpush1.bf16.msra.mxu0 %v2582
    %3871 = vmatprep.subr.bf16.mxu0 0
    %3872 = vmatpush1.bf16.msra.mxu0 %v2583
    %3873 = vmatprep.subr.bf16.mxu0 0
    %3874 = vmatpush1.bf16.msra.mxu0 %v2584
    %3875 = vmatprep.subr.bf16.mxu0 0
    %3876 = vmatpush1.bf16.msra.mxu0 %v2585
    %3877 = vmatprep.mubr.bf16.mxu0 %v1265
    %3878 = vmatmul.mubr.bf16.gmra.mrb[0].mxu0 %v1264
    %v3879 = vpop.f32.mrb[0].mxu0
    %v3880 = vadd.f32 %v3783, %v3879
    %v3881 = vpop.f32.mrb[0].mxu0
    %v3882 = vpop.f32.mrb[0].mxu0
    %v3883 = vadd.f32 %v3786, %v3882
    %v3884 = vpop.f32.mrb[0].mxu0
    %3885 = vmatprep.mubr.bf16.mxu0 %v1289
    %3886 = vmatmul.mubr.bf16.gmra.mrb[0].mxu0 %v1288
    %v3887 = vpop.f32.mrb[0].mxu0
    %v3888 = vadd.f32 %v3791, %v3887
    %v3889 = vpop.f32.mrb[0].mxu0
    %v3890 = vpop.f32.mrb[0].mxu0
    %v3891 = vadd.f32 %v3794, %v3890
    %v3892 = vpop.f32.mrb[0].mxu0
    %3893 = vmatprep.mubr.bf16.mxu0 %v1313
    %3894 = vmatmul.mubr.bf16.gmra.mrb[0].mxu0 %v1312
    %v3895 = vpop.f32.mrb[0].mxu0
    %v3896 = vadd.f32 %v3799, %v3895
    %v3897 = vpop.f32.mrb[0].mxu0
    %v3898 = vpop.f32.mrb[0].mxu0
    %v3899 = vadd.f32 %v3802, %v3898
    %v3900 = vpop.f32.mrb[0].mxu0
    %3901 = vmatprep.mubr.bf16.mxu0 %v1337
    %3902 = vmatmul.mubr.bf16.gmra.mrb[0].mxu0 %v1336
    %v3903 = vpop.f32.mrb[0].mxu0
    %v3904 = vadd.f32 %v3807, %v3903
    %v3905 = vpop.f32.mrb[0].mxu0
    %v3906 = vpop.f32.mrb[0].mxu0
    %v3907 = vadd.f32 %v3810, %v3906
    %v3908 = vpop.f32.mrb[0].mxu0
    %3909 = vmatprep.mubr.bf16.mxu0 %v1361
    %3910 = vmatmul.mubr.bf16.gmra.mrb[0].mxu0 %v1360
    %v3911 = vpop.f32.mrb[0].mxu0
    %v3912 = vadd.f32 %v3815, %v3911
    %v3913 = vpop.f32.mrb[0].mxu0
    %v3914 = vpop.f32.mrb[0].mxu0
    %v3915 = vadd.f32 %v3818, %v3914
    %v3916 = vpop.f32.mrb[0].mxu0
    %3917 = vmatprep.mubr.bf16.mxu0 %v1385
    %3918 = vmatmul.mubr.bf16.gmra.mrb[0].mxu0 %v1384
    %v3919 = vpop.f32.mrb[0].mxu0
    %v3920 = vadd.f32 %v3823, %v3919
    %v3921 = vpop.f32.mrb[0].mxu0
    %v3922 = vpop.f32.mrb[0].mxu0
    %v3923 = vadd.f32 %v3826, %v3922
    %v3924 = vpop.f32.mrb[0].mxu0
    %3925 = vmatprep.mubr.bf16.mxu0 %v1409
    %3926 = vmatmul.mubr.bf16.gmra.mrb[0].mxu0 %v1408
    %v3927 = vpop.f32.mrb[0].mxu0
    %v3928 = vadd.f32 %v3831, %v3927
    %v3929 = vpop.f32.mrb[0].mxu0
    %v3930 = vpop.f32.mrb[0].mxu0
    %v3931 = vadd.f32 %v3834, %v3930
    %v3932 = vpop.f32.mrb[0].mxu0
    %3933 = vmatprep.mubr.bf16.mxu0 %v1433
    %3934 = vmatmul.mubr.bf16.gmra.mrb[0].mxu0 %v1432
    %v3935 = vpop.f32.mrb[0].mxu0
    %v3936 = vadd.f32 %v3839, %v3935
    %v3937 = vpop.f32.mrb[0].mxu0
    %v3938 = vpop.f32.mrb[0].mxu0
    %v3939 = vadd.f32 %v3842, %v3938
    %v3940 = vpop.f32.mrb[0].mxu0
    %3941 = vdwg.mxu0
    %v3942 = vmax.f32 %v3880, 0.0
    %v3943 = vmax.f32 %v3883, 0.0
    %v3944 = vmax.f32 %v3888, 0.0
    %v3945 = vmax.f32 %v3891, 0.0
    %v3946 = vmax.f32 %v3896, 0.0
    %v3947 = vmax.f32 %v3899, 0.0
    %v3948 = vmax.f32 %v3904, 0.0
    %v3949 = vmax.f32 %v3907, 0.0
    %v3950 = vmax.f32 %v3912, 0.0
    %v3951 = vmax.f32 %v3915, 0.0
    %v3952 = vmax.f32 %v3920, 0.0
    %v3953 = vmax.f32 %v3923, 0.0
    %v3954 = vmax.f32 %v3928, 0.0
    %v3955 = vmax.f32 %v3931, 0.0
    %v3956 = vmax.f32 %v3936, 0.0
    %v3957 = vmax.f32 %v3939, 0.0
    %v3958 = vpack.c.bf16 %v3943, %v3942
    %v3959 = vpack.c.bf16 %v3945, %v3944
    %v3960 = vpack.c.bf16 %v3947, %v3946
    %v3961 = vpack.c.bf16 %v3949, %v3948
    %v3962 = vpack.c.bf16 %v3951, %v3950
    %v3963 = vpack.c.bf16 %v3953, %v3952
    %v3964 = vpack.c.bf16 %v3955, %v3954
    %v3965 = vpack.c.bf16 %v3957, %v3956
    %v3966 = vld [vmem:[#allocation7] sm:$0xf]
    %v3967 = vld [vmem:[#allocation7 + $0x4] sm:$0xf]
    %v3968 = vld [vmem:[#allocation7 + $0x8] sm:$0xf]
    %v3969 = vld [vmem:[#allocation7 + $0xc] sm:$0xf]
    %v3970 = vld [vmem:[#allocation7 + $0x10] sm:$0xf]
    %v3971 = vld [vmem:[#allocation7 + $0x14] sm:$0xf]
    %v3972 = vld [vmem:[#allocation7 + $0x18] sm:$0xf]
    %v3973 = vld [vmem:[#allocation7 + $0x1c] sm:$0xf]
    %v3974 = vld [vmem:[#allocation7 + $0x20] sm:$0xf]
    %v3975 = vld [vmem:[#allocation7 + $0x24] sm:$0xf]
    %v3976 = vld [vmem:[#allocation7 + $0x28] sm:$0xf]
    %v3977 = vld [vmem:[#allocation7 + $0x2c] sm:$0xf]
    %v3978 = vld [vmem:[#allocation7 + $0x30] sm:$0xf]
    %v3979 = vld [vmem:[#allocation7 + $0x34] sm:$0xf]
    %v3980 = vld [vmem:[#allocation7 + $0x38] sm:$0xf]
    %v3981 = vld [vmem:[#allocation7 + $0x3c] sm:$0xf]
    %v3982 = vld [vmem:[%s4] sm:$0x1]
    %v3984 = vlaneseq
    %v3985 = vshrl.u32 %v3984, 7
    %v3986 = vsub.s32 0, %v3985
    %v3987 = vrot.slane %v3982, %v3986
    %v4005 = vunpack.c.l.b16 %v3966
    %v4006 = vunpack.c.l.b16 %v3967
    %v4007 = vunpack.c.l.b16 %v3968
    %v4008 = vunpack.c.l.b16 %v3969
    %v4009 = vunpack.c.l.b16 %v3970
    %v4010 = vunpack.c.l.b16 %v3971
    %v4011 = vunpack.c.l.b16 %v3972
    %v4012 = vunpack.c.l.b16 %v3973
    %v4013 = vunpack.c.l.b16 %v3974
    %v4014 = vunpack.c.l.b16 %v3975
    %v4015 = vunpack.c.l.b16 %v3976
    %v4016 = vunpack.c.l.b16 %v3977
    %v4017 = vunpack.c.l.b16 %v3978
    %v4018 = vunpack.c.l.b16 %v3979
    %v4019 = vunpack.c.l.b16 %v3980
    %v4020 = vunpack.c.l.b16 %v3981
    %v4021 = vpack.c.b16 %v4006, %v4005
    %v4022 = vpack.c.b16 %v4008, %v4007
    %v4023 = vpack.c.b16 %v4010, %v4009
    %v4024 = vpack.c.b16 %v4012, %v4011
    %v4025 = vpack.c.b16 %v4014, %v4013
    %v4026 = vpack.c.b16 %v4016, %v4015
    %v4027 = vpack.c.b16 %v4018, %v4017
    %v4028 = vpack.c.b16 %v4020, %v4019
    %4037 = vmatprep.subr.bf16.mxu0 0
    %4038 = vmatpush1.bf16.msra.mxu0 %v4021
    %4039 = vmatprep.subr.bf16.mxu0 0
    %4040 = vmatpush1.bf16.msra.mxu0 %v4022
    %4041 = vmatprep.subr.bf16.mxu0 0
    %4042 = vmatpush1.bf16.msra.mxu0 %v4023
    %4043 = vmatprep.subr.bf16.mxu0 0
    %4044 = vmatpush1.bf16.msra.mxu0 %v4024
    %4045 = vmatprep.subr.bf16.mxu0 0
    %4046 = vmatpush1.bf16.msra.mxu0 %v4025
    %4047 = vmatprep.subr.bf16.mxu0 0
    %4048 = vmatpush1.bf16.msra.mxu0 %v4026
    %4049 = vmatprep.subr.bf16.mxu0 0
    %4050 = vmatpush1.bf16.msra.mxu0 %v4027
    %4051 = vmatprep.subr.bf16.mxu0 0
    %4052 = vmatpush1.bf16.msra.mxu0 %v4028
    %4053 = vmatprep.subr.bf16.mxu0 0
    %4054 = vmatpush1.bf16.msra.mxu0 0
    %4055 = vmatprep.subr.bf16.mxu0 0
    %4056 = vmatpush1.bf16.msra.mxu0 0
    %4057 = vmatprep.subr.bf16.mxu0 0
    %4058 = vmatpush1.bf16.msra.mxu0 0
    %4059 = vmatprep.subr.bf16.mxu0 0
    %4060 = vmatpush1.bf16.msra.mxu0 0
    %4061 = vmatprep.subr.bf16.mxu0 0
    %4062 = vmatpush1.bf16.msra.mxu0 0
    %4063 = vmatprep.subr.bf16.mxu0 0
    %4064 = vmatpush1.bf16.msra.mxu0 0
    %4065 = vmatprep.subr.bf16.mxu0 0
    %4066 = vmatpush1.bf16.msra.mxu0 0
    %4067 = vmatprep.subr.bf16.mxu0 0
    %4068 = vmatpush1.bf16.msra.mxu0 0
    %4069 = vmatprep.mubr.bf16.mxu0 0
    %4070 = vmatmul.mubr.bf16.gmra.mrb[0].mxu0 %v3958
    %v4071 = vpop.f32.mrb[0].mxu0
    %v4072 = vadd.f32 %v3987, %v4071
    %v4073 = vpop.f32.mrb[0].mxu0
    %v4074 = vpop.f32.mrb[0].mxu0
    %v4075 = vadd.f32 %v3987, %v4074
    %v4076 = vpop.f32.mrb[0].mxu0
    %4077 = vmatprep.mubr.bf16.mxu0 0
    %4078 = vmatmul.mubr.bf16.gmra.mrb[0].mxu0 %v3959
    %v4079 = vpop.f32.mrb[0].mxu0
    %v4080 = vadd.f32 %v3987, %v4079
    %v4081 = vpop.f32.mrb[0].mxu0
    %v4082 = vpop.f32.mrb[0].mxu0
    %v4083 = vadd.f32 %v3987, %v4082
    %v4084 = vpop.f32.mrb[0].mxu0
    %4085 = vmatprep.mubr.bf16.mxu0 0
    %4086 = vmatmul.mubr.bf16.gmra.mrb[0].mxu0 %v3960
    %v4087 = vpop.f32.mrb[0].mxu0
    %v4088 = vadd.f32 %v3987, %v4087
    %v4089 = vpop.f32.mrb[0].mxu0
    %v4090 = vpop.f32.mrb[0].mxu0
    %v4091 = vadd.f32 %v3987, %v4090
    %v4092 = vpop.f32.mrb[0].mxu0
    %4093 = vmatprep.mubr.bf16.mxu0 0
    %4094 = vmatmul.mubr.bf16.gmra.mrb[0].mxu0 %v3961
    %v4095 = vpop.f32.mrb[0].mxu0
    %v4096 = vadd.f32 %v3987, %v4095
    %v4097 = vpop.f32.mrb[0].mxu0
    %v4098 = vpop.f32.mrb[0].mxu0
    %v4099 = vadd.f32 %v3987, %v4098
    %v4100 = vpop.f32.mrb[0].mxu0
    %4101 = vmatprep.mubr.bf16.mxu0 0
    %4102 = vmatmul.mubr.bf16.gmra.mrb[0].mxu0 %v3962
    %v4103 = vpop.f32.mrb[0].mxu0
    %v4104 = vadd.f32 %v3987, %v4103
    %v4105 = vpop.f32.mrb[0].mxu0
    %v4106 = vpop.f32.mrb[0].mxu0
    %v4107 = vadd.f32 %v3987, %v4106
    %v4108 = vpop.f32.mrb[0].mxu0
    %4109 = vmatprep.mubr.bf16.mxu0 0
    %4110 = vmatmul.mubr.bf16.gmra.mrb[0].mxu0 %v3963
    %v4111 = vpop.f32.mrb[0].mxu0
    %v4112 = vadd.f32 %v3987, %v4111
    %v4113 = vpop.f32.mrb[0].mxu0
    %v4114 = vpop.f32.mrb[0].mxu0
    %v4115 = vadd.f32 %v3987, %v4114
    %v4116 = vpop.f32.mrb[0].mxu0
    %4117 = vmatprep.mubr.bf16.mxu0 0
    %4118 = vmatmul.mubr.bf16.gmra.mrb[0].mxu0 %v3964
    %v4119 = vpop.f32.mrb[0].mxu0
    %v4120 = vadd.f32 %v3987, %v4119
    %v4121 = vpop.f32.mrb[0].mxu0
    %v4122 = vpop.f32.mrb[0].mxu0
    %v4123 = vadd.f32 %v3987, %v4122
    %v4124 = vpop.f32.mrb[0].mxu0
    %4125 = vmatprep.mubr.bf16.mxu0 0
    %4126 = vmatmul.mubr.bf16.gmra.mrb[0].mxu0 %v3965
    %v4127 = vpop.f32.mrb[0].mxu0
    %v4128 = vadd.f32 %v3987, %v4127
    %v4129 = vpop.f32.mrb[0].mxu0
    %v4130 = vpop.f32.mrb[0].mxu0
    %v4131 = vadd.f32 %v3987, %v4130
    %v4132 = vpop.f32.mrb[0].mxu0
    %4133 = vdwg.mxu0
    %v4134 = vmax.f32 %v4072, 0.0
    %v4135 = vmax.f32 %v4075, 0.0
    %v4136 = vmax.f32 %v4080, 0.0
    %v4137 = vmax.f32 %v4083, 0.0
    %v4138 = vmax.f32 %v4088, 0.0
    %v4139 = vmax.f32 %v4091, 0.0
    %v4140 = vmax.f32 %v4096, 0.0
    %v4141 = vmax.f32 %v4099, 0.0
    %v4142 = vmax.f32 %v4104, 0.0
    %v4143 = vmax.f32 %v4107, 0.0
    %v4144 = vmax.f32 %v4112, 0.0
    %v4145 = vmax.f32 %v4115, 0.0
    %v4146 = vmax.f32 %v4120, 0.0
    %v4147 = vmax.f32 %v4123, 0.0
    %v4148 = vmax.f32 %v4128, 0.0
    %v4149 = vmax.f32 %v4131, 0.0
    %v4150 = vpack.c.bf16 %v4135, %v4134
    %v4151 = vpack.c.bf16 %v4137, %v4136
    %v4152 = vpack.c.bf16 %v4139, %v4138
    %v4153 = vpack.c.bf16 %v4141, %v4140
    %v4154 = vpack.c.bf16 %v4143, %v4142
    %v4155 = vpack.c.bf16 %v4145, %v4144
    %v4156 = vpack.c.bf16 %v4147, %v4146
    %v4157 = vpack.c.bf16 %v4149, %v4148
    %v4158 = vld [vmem:[#allocation8] sm:$0xf]
    %v4159 = vld [vmem:[#allocation8 + $0x4] sm:$0xf]
    %v4160 = vld [vmem:[#allocation8 + $0x8] sm:$0xf]
    %v4161 = vld [vmem:[#allocation8 + $0xc] sm:$0xf]
    %v4162 = vld [vmem:[#allocation8 + $0x10] sm:$0xf]
    %v4163 = vld [vmem:[#allocation8 + $0x14] sm:$0xf]
    %v4164 = vld [vmem:[#allocation8 + $0x18] sm:$0xf]
    %v4165 = vld [vmem:[#allocation8 + $0x1c] sm:$0xf]
    %v4166 = vld [vmem:[#allocation8 + $0x20] sm:$0xf]
    %v4167 = vld [vmem:[#allocation8 + $0x24] sm:$0xf]
    %v4168 = vld [vmem:[#allocation8 + $0x28] sm:$0xf]
    %v4169 = vld [vmem:[#allocation8 + $0x2c] sm:$0xf]
    %v4170 = vld [vmem:[#allocation8 + $0x30] sm:$0xf]
    %v4171 = vld [vmem:[#allocation8 + $0x34] sm:$0xf]
    %v4172 = vld [vmem:[#allocation8 + $0x38] sm:$0xf]
    %v4173 = vld [vmem:[#allocation8 + $0x3c] sm:$0xf]
    %v4174 = vld [vmem:[%s6] sm:$0x1]
    %v4176 = vlaneseq
    %v4177 = vshrl.u32 %v4176, 7
    %v4178 = vsub.s32 0, %v4177
    %v4179 = vrot.slane %v4174, %v4178
    %v4197 = vunpack.c.l.b16 %v4158
    %v4198 = vunpack.c.l.b16 %v4159
    %v4199 = vunpack.c.l.b16 %v4160
    %v4200 = vunpack.c.l.b16 %v4161
    %v4201 = vunpack.c.l.b16 %v4162
    %v4202 = vunpack.c.l.b16 %v4163
    %v4203 = vunpack.c.l.b16 %v4164
    %v4204 = vunpack.c.l.b16 %v4165
    %v4205 = vunpack.c.l.b16 %v4166
    %v4206 = vunpack.c.l.b16 %v4167
    %v4207 = vunpack.c.l.b16 %v4168
    %v4208 = vunpack.c.l.b16 %v4169
    %v4209 = vunpack.c.l.b16 %v4170
    %v4210 = vunpack.c.l.b16 %v4171
    %v4211 = vunpack.c.l.b16 %v4172
    %v4212 = vunpack.c.l.b16 %v4173
    %v4213 = vpack.c.b16 %v4198, %v4197
    %v4214 = vpack.c.b16 %v4200, %v4199
    %v4215 = vpack.c.b16 %v4202, %v4201
    %v4216 = vpack.c.b16 %v4204, %v4203
    %v4217 = vpack.c.b16 %v4206, %v4205
    %v4218 = vpack.c.b16 %v4208, %v4207
    %v4219 = vpack.c.b16 %v4210, %v4209
    %v4220 = vpack.c.b16 %v4212, %v4211
    %4229 = vmatprep.subr.bf16.mxu0 0
    %4230 = vmatpush1.bf16.msra.mxu0 %v4213
    %4231 = vmatprep.subr.bf16.mxu0 0
    %4232 = vmatpush1.bf16.msra.mxu0 %v4214
    %4233 = vmatprep.subr.bf16.mxu0 0
    %4234 = vmatpush1.bf16.msra.mxu0 %v4215
    %4235 = vmatprep.subr.bf16.mxu0 0
    %4236 = vmatpush1.bf16.msra.mxu0 %v4216
    %4237 = vmatprep.subr.bf16.mxu0 0
    %4238 = vmatpush1.bf16.msra.mxu0 %v4217
    %4239 = vmatprep.subr.bf16.mxu0 0
    %4240 = vmatpush1.bf16.msra.mxu0 %v4218
    %4241 = vmatprep.subr.bf16.mxu0 0
    %4242 = vmatpush1.bf16.msra.mxu0 %v4219
    %4243 = vmatprep.subr.bf16.mxu0 0
    %4244 = vmatpush1.bf16.msra.mxu0 %v4220
    %4245 = vmatprep.subr.bf16.mxu0 0
    %4246 = vmatpush1.bf16.msra.mxu0 0
    %4247 = vmatprep.subr.bf16.mxu0 0
    %4248 = vmatpush1.bf16.msra.mxu0 0
    %4249 = vmatprep.subr.bf16.mxu0 0
    %4250 = vmatpush1.bf16.msra.mxu0 0
    %4251 = vmatprep.subr.bf16.mxu0 0
    %4252 = vmatpush1.bf16.msra.mxu0 0
    %4253 = vmatprep.subr.bf16.mxu0 0
    %4254 = vmatpush1.bf16.msra.mxu0 0
    %4255 = vmatprep.subr.bf16.mxu0 0
    %4256 = vmatpush1.bf16.msra.mxu0 0
    %4257 = vmatprep.subr.bf16.mxu0 0
    %4258 = vmatpush1.bf16.msra.mxu0 0
    %4259 = vmatprep.subr.bf16.mxu0 0
    %4260 = vmatpush1.bf16.msra.mxu0 0
    %4261 = vmatprep.mubr.bf16.mxu0 0
    %4262 = vmatmul.mubr.bf16.gmra.mrb[0].mxu0 %v4150
    %v4263 = vpop.f32.mrb[0].mxu0
    %v4264 = vadd.f32 %v4179, %v4263
    %v4265 = vpop.f32.mrb[0].mxu0
    %v4266 = vpop.f32.mrb[0].mxu0
    %v4267 = vadd.f32 %v4179, %v4266
    %v4268 = vpop.f32.mrb[0].mxu0
    %4269 = vmatprep.mubr.bf16.mxu0 0
    %4270 = vmatmul.mubr.bf16.gmra.mrb[0].mxu0 %v4151
    %v4271 = vpop.f32.mrb[0].mxu0
    %v4272 = vadd.f32 %v4179, %v4271
    %v4273 = vpop.f32.mrb[0].mxu0
    %v4274 = vpop.f32.mrb[0].mxu0
    %v4275 = vadd.f32 %v4179, %v4274
    %v4276 = vpop.f32.mrb[0].mxu0
    %4277 = vmatprep.mubr.bf16.mxu0 0
    %4278 = vmatmul.mubr.bf16.gmra.mrb[0].mxu0 %v4152
    %v4279 = vpop.f32.mrb[0].mxu0
    %v4280 = vadd.f32 %v4179, %v4279
    %v4281 = vpop.f32.mrb[0].mxu0
    %v4282 = vpop.f32.mrb[0].mxu0
    %v4283 = vadd.f32 %v4179, %v4282
    %v4284 = vpop.f32.mrb[0].mxu0
    %4285 = vmatprep.mubr.bf16.mxu0 0
    %4286 = vmatmul.mubr.bf16.gmra.mrb[0].mxu0 %v4153
    %v4287 = vpop.f32.mrb[0].mxu0
    %v4288 = vadd.f32 %v4179, %v4287
    %v4289 = vpop.f32.mrb[0].mxu0
    %v4290 = vpop.f32.mrb[0].mxu0
    %v4291 = vadd.f32 %v4179, %v4290
    %v4292 = vpop.f32.mrb[0].mxu0
    %4293 = vmatprep.mubr.bf16.mxu0 0
    %4294 = vmatmul.mubr.bf16.gmra.mrb[0].mxu0 %v4154
    %v4295 = vpop.f32.mrb[0].mxu0
    %v4296 = vadd.f32 %v4179, %v4295
    %v4297 = vpop.f32.mrb[0].mxu0
    %v4298 = vpop.f32.mrb[0].mxu0
    %v4299 = vadd.f32 %v4179, %v4298
    %v4300 = vpop.f32.mrb[0].mxu0
    %4301 = vmatprep.mubr.bf16.mxu0 0
    %4302 = vmatmul.mubr.bf16.gmra.mrb[0].mxu0 %v4155
    %v4303 = vpop.f32.mrb[0].mxu0
    %v4304 = vadd.f32 %v4179, %v4303
    %v4305 = vpop.f32.mrb[0].mxu0
    %v4306 = vpop.f32.mrb[0].mxu0
    %v4307 = vadd.f32 %v4179, %v4306
    %v4308 = vpop.f32.mrb[0].mxu0
    %4309 = vmatprep.mubr.bf16.mxu0 0
    %4310 = vmatmul.mubr.bf16.gmra.mrb[0].mxu0 %v4156
    %v4311 = vpop.f32.mrb[0].mxu0
    %v4312 = vadd.f32 %v4179, %v4311
    %v4313 = vpop.f32.mrb[0].mxu0
    %v4314 = vpop.f32.mrb[0].mxu0
    %v4315 = vadd.f32 %v4179, %v4314
    %v4316 = vpop.f32.mrb[0].mxu0
    %4317 = vmatprep.mubr.bf16.mxu0 0
    %4318 = vmatmul.mubr.bf16.gmra.mrb[0].mxu0 %v4157
    %v4319 = vpop.f32.mrb[0].mxu0
    %v4320 = vadd.f32 %v4179, %v4319
    %v4321 = vpop.f32.mrb[0].mxu0
    %v4322 = vpop.f32.mrb[0].mxu0
    %v4323 = vadd.f32 %v4179, %v4322
    %v4324 = vpop.f32.mrb[0].mxu0
    %4325 = vdwg.mxu0
    %4326 = vst [vmem:[#allocation10] sm:$0xff] %v4264
    %4327 = vst [vmem:[#allocation10 + $0x8] sm:$0xff] %v4267
    %4328 = vst [vmem:[#allocation10 + $0x10] sm:$0xff] %v4272
    %4329 = vst [vmem:[#allocation10 + $0x18] sm:$0xff] %v4275
    %4330 = vst [vmem:[#allocation10 + $0x20] sm:$0xff] %v4280
    %4331 = vst [vmem:[#allocation10 + $0x28] sm:$0xff] %v4283
    %4332 = vst [vmem:[#allocation10 + $0x30] sm:$0xff] %v4288
    %4333 = vst [vmem:[#allocation10 + $0x38] sm:$0xff] %v4291
    %4334 = vst [vmem:[#allocation10 + $0x40] sm:$0xff] %v4296
    %4335 = vst [vmem:[#allocation10 + $0x48] sm:$0xff] %v4299
    %4336 = vst [vmem:[#allocation10 + $0x50] sm:$0xff] %v4304
    %4337 = vst [vmem:[#allocation10 + $0x58] sm:$0xff] %v4307
    %4338 = vst [vmem:[#allocation10 + $0x60] sm:$0xff] %v4312
    %4339 = vst [vmem:[#allocation10 + $0x68] sm:$0xff] %v4315
    %4340 = vst [vmem:[#allocation10 + $0x70] sm:$0xff] %v4320
    %4341 = vst [vmem:[#allocation10 + $0x78] sm:$0xff] %v4323
    // Predicated region
    $region46: #{tpu_custom_call.1} parent=1 // pred_check
      _
    $region47: #{tpu_custom_call.1} parent=1 // pred_check_branch
      %4343 = sbr.rel (0) target = $region49
    $region48: #{tpu_custom_call.1} parent=1 // pred_region
      %s4345 = ssub.s32 2048, 2048
      %4346 = vsyncadd [#allocation4], %s4345
      %s4347 = sshll.u32 [#allocation10], 4
      %s4348 = int_to_ptr.vmem [resolvable:$true] %s4347
      %4353 = dma.vmem_to_hbm [thread:$0]  %s4348, 2048, %s7, [#allocation4], 128, 128, 8
    $region49: #{tpu_custom_call.1} parent=1 // pred_fallthru
      _
    // Predicated region
    $region50: #{tpu_custom_call.1} parent=1 // pred_check
      _
    $region51: #{tpu_custom_call.1} parent=1 // pred_check_branch
      %4355 = sbr.rel (0) target = $region53
    $region52: #{tpu_custom_call.1} parent=1 // pred_region
      %4356 = dma.done [#allocation4], 2048
    $region53: #{tpu_custom_call.1} parent=1 // pred_fallthru
      _
    %4357 = vsyncpa [#allocation3], 1
    %4358 = vsyncpa [#allocation6], 1
    %4359 = vsyncpa [#allocation9], 1
    %4360 = vsyncpa [#allocation4], 1

</llo_original>
